<compile_context>
chip_gen: v7x
topology: tpu7x:2x2x1
jax: 0.10.0
libtpu: 0.0.40
codegen_flags: <defaults>
</compile_context>

<pallas_src>
import functools

import jax
import jax.numpy as jnp
from jax.experimental import pallas as pl
from jax.experimental.pallas import tpu as pltpu


# ----------------------------- model config -----------------------------

VOCAB = 128
MAX_POS = 16
TYPE_VOCAB = 2
HIDDEN = 32          # config.bert_size
NUM_HEADS = 4
HEAD_DIM = HIDDEN // NUM_HEADS
INTERMEDIATE = 64
NUM_LAYERS = 2
CLASS_NUM = 3        # config.class_num
SEQ = 8
BATCH = 2

LN_EPS = 1e-12


# ----------------------------- fused Pallas kernel -----------------------------

def _layernorm(x, g, b):
    # two independent reductions (sum, sum of squares) -> the cross-lane reduces
    # are not serially dependent. var = E[x^2] - E[x]^2 (fine at f32 for LN data).
    inv_n = 1.0 / x.shape[-1]
    s1 = jnp.sum(x, axis=-1, keepdims=True)
    s2 = jnp.sum(x * x, axis=-1, keepdims=True)
    mu = s1 * inv_n
    var = s2 * inv_n - mu * mu
    return (x - mu) * jax.lax.rsqrt(var + LN_EPS) * g + b


def _gelu(x):
    # tanh-approximation GELU
    # TODO(synk): HuggingFace BERT default is exact erf-GELU; tanh approx drifts slightly.
    return 0.5 * x * (1.0 + jnp.tanh(0.7978845608028654 * (x + 0.044715 * x * x * x)))


def _bert_kernel(emb_ref, bias_ref, w_ref, vec_ref, head_ref, o_ref,
                 *, B, S, H, nH, Dh, I, C, num_layers):
    """Whole-model fused kernel.

    emb_ref  : [B*S, H]          embedding sums (pre-LN)
    bias_ref : [B*nH, 1, S]      additive key-mask bias, g = h*B + b
    w_ref    : [L, 64, 224]      per-layer matrices:
                                   cols   0: 96 rows 0:32  Wqkv (head-interleaved, q pre-scaled)
                                   cols  96:128 rows 0:32  Wo
                                   cols 128:192 rows 0:32  Wi
                                   cols 192:224 rows 0:64  Wo2
    vec_ref  : [L, 8, 96]        per-layer vectors (bqkv, bo, ln1_g/b, bi, bo2, ln2_g/b)
    head_ref : [36, 64]          pool_W | cls_W | pool_b | cls_b | emb_ln_g | emb_ln_b
    o_ref    : [B, C]
    """
    bias = bias_ref[...]                                              # [B*nH, 1, S]

    emb_g = head_ref[H + 2:H + 3, 0:H]
    emb_b = head_ref[H + 3:H + 4, 0:H]
    x = _layernorm(emb_ref[...], emb_g, emb_b)                        # [B*S, H]

    for l in range(num_layers):                                       # unrolled (static)
        wqkv = w_ref[l, 0:H, 0:3 * H]
        wo = w_ref[l, 0:H, 3 * H:4 * H]
        wi = w_ref[l, 0:H, 4 * H:4 * H + I]
        wo2 = w_ref[l, 0:I, 4 * H + I:4 * H + I + H]
        bqkv = vec_ref[l, 0:1, 0:3 * H]
        bo = vec_ref[l, 1:2, 0:H]
        ln1g = vec_ref[l, 2:3, 0:H]
        ln1b = vec_ref[l, 3:4, 0:H]
        bi = vec_ref[l, 4:5, 0:I]
        bo2 = vec_ref[l, 5:6, 0:H]
        ln2g = vec_ref[l, 6:7, 0:H]
        ln2b = vec_ref[l, 7:8, 0:H]

        # one fused QKV projection; columns are head-interleaved (q|k|v per head)
        # and the 1/sqrt(Dh) scale is already folded into the q columns/bias.
        qkv = jnp.dot(x, wqkv, preferred_element_type=jnp.float32) + bqkv    # [B*S, 3H]

        # single relayout to a head-batched shape: g = h*B + b
        qkv_heads = jnp.concatenate(
            [qkv[:, h * 3 * Dh:(h + 1) * 3 * Dh].reshape(B, S, 3 * Dh)
             for h in range(nH)], axis=0)                                    # [B*nH, S, 3Dh]
        q = qkv_heads[:, :, 0:Dh]
        k = qkv_heads[:, :, Dh:2 * Dh]
        v = qkv_heads[:, :, 2 * Dh:3 * Dh]

        # one batched scores matmul + ONE softmax chain for all heads
        scores = jnp.einsum("gqd,gkd->gqk", q, k,
                            preferred_element_type=jnp.float32) + bias       # [B*nH,S,S]
        m = jnp.max(scores, axis=-1, keepdims=True)
        p = jnp.exp(scores - m)
        denom = jnp.sum(p, axis=-1, keepdims=True)
        p = p * pl.reciprocal(denom, approx=True)          # EUP; frees the VALU slot
        ctx = jnp.einsum("gqk,gkd->gqd", p, v,
                         preferred_element_type=jnp.float32)                 # [B*nH,S,Dh]

        # reassemble head contexts into one lane-dense [B*S, H] and do ONE
        # output-projection matmul (K=H) instead of nH K=Dh dots + adds.
        ctx_cat = jnp.concatenate(
            [ctx[h * B:(h + 1) * B].reshape(B * S, Dh) for h in range(nH)],
            axis=-1)                                                         # [B*S, H]
        attn = jnp.dot(ctx_cat, wo, preferred_element_type=jnp.float32) + bo

        x = _layernorm(attn + x, ln1g, ln1b)
        ffn = _gelu(jnp.dot(x, wi, preferred_element_type=jnp.float32) + bi)
        ffn = jnp.dot(ffn, wo2, preferred_element_type=jnp.float32) + bo2
        x = _layernorm(ffn + x, ln2g, ln2b)

    # pooler + classifier on the B [CLS] rows only; dropout is identity at inference.
    cls_rows = jnp.concatenate([x[b * S:b * S + 1, :] for b in range(B)], axis=0)  # [B,H]
    pool_w = head_ref[0:H, 0:H]
    cls_w = head_ref[0:H, H:H + C]
    pool_b = head_ref[H:H + 1, 0:H]
    cls_b = head_ref[H + 1:H + 2, 0:C]
    pooled = jnp.tanh(jnp.dot(cls_rows, pool_w,
                              preferred_element_type=jnp.float32) + pool_b)
    logits = jnp.dot(pooled, cls_w, preferred_element_type=jnp.float32) + cls_b    # [B,C]
    o_ref[...] = logits.astype(o_ref.dtype)                                        # one store


# ----------------------------- model definition -----------------------------

def init_params(key):
    std = 0.02
    ks = iter(jax.random.split(key, 8 + NUM_LAYERS * 16))

    def nrm(shape):
        return (std * jax.random.normal(next(ks), shape)).astype(jnp.float32)

    params = {
        "word_emb": nrm((VOCAB, HIDDEN)),
        "pos_emb": nrm((MAX_POS, HIDDEN)),
        "type_emb": nrm((TYPE_VOCAB, HIDDEN)),
        "emb_ln_g": jnp.ones((HIDDEN,), jnp.float32),
        "emb_ln_b": jnp.zeros((HIDDEN,), jnp.float32),
        "layers": [],
        "pool_W": nrm((HIDDEN, HIDDEN)),
        "pool_b": jnp.zeros((HIDDEN,), jnp.float32),
        "cls_W": nrm((HIDDEN, CLASS_NUM)),
        "cls_b": jnp.zeros((CLASS_NUM,), jnp.float32),
    }
    for _ in range(NUM_LAYERS):
        params["layers"].append({
            "Wq": nrm((HIDDEN, HIDDEN)), "bq": jnp.zeros((HIDDEN,), jnp.float32),
            "Wk": nrm((HIDDEN, HIDDEN)), "bk": jnp.zeros((HIDDEN,), jnp.float32),
            "Wv": nrm((HIDDEN, HIDDEN)), "bv": jnp.zeros((HIDDEN,), jnp.float32),
            "Wo": nrm((HIDDEN, HIDDEN)), "bo": jnp.zeros((HIDDEN,), jnp.float32),
            "ln1_g": jnp.ones((HIDDEN,), jnp.float32),
            "ln1_b": jnp.zeros((HIDDEN,), jnp.float32),
            "Wi": nrm((HIDDEN, INTERMEDIATE)), "bi": jnp.zeros((INTERMEDIATE,), jnp.float32),
            "Wo2": nrm((INTERMEDIATE, HIDDEN)), "bo2": jnp.zeros((HIDDEN,), jnp.float32),
            "ln2_g": jnp.ones((HIDDEN,), jnp.float32),
            "ln2_b": jnp.zeros((HIDDEN,), jnp.float32),
        })
    return params


def pack_params(params):
    """ONE-TIME weight packing (hoisted out of the per-forward path).

    Produces the 3 weight slabs consumed by the kernel. Also folds the
    1/sqrt(head_dim) attention scale into Wq/bq and interleaves the fused QKV
    projection per head (q|k|v contiguous per head).
    """
    H, I, C, Dh, nH = HIDDEN, INTERMEDIATE, CLASS_NUM, HEAD_DIM, NUM_HEADS
    L = len(params["layers"])
    scale = 1.0 / (Dh ** 0.5)

    w_slab = jnp.zeros((L, max(H, I), 4 * H + I + H), jnp.float32)   # [L, 64, 224]
    vec_slab = jnp.zeros((L, 8, 3 * H), jnp.float32)                 # [L, 8, 96]

    for l, layer in enumerate(params["layers"]):
        wq = layer["Wq"] * scale
        bq = layer["bq"] * scale
        wcols, bcols = [], []
        for h in range(nH):
            sl = slice(h * Dh, (h + 1) * Dh)
            wcols += [wq[:, sl], layer["Wk"][:, sl], layer["Wv"][:, sl]]
            bcols += [bq[sl], layer["bk"][sl], layer["bv"][sl]]
        wqkv = jnp.concatenate(wcols, axis=1)                        # [H, 3H] head-interleaved
        bqkv = jnp.concatenate(bcols, axis=0)                        # [3H]

        w_slab = w_slab.at[l, :H, 0:3 * H].set(wqkv)
        w_slab = w_slab.at[l, :H, 3 * H:4 * H].set(layer["Wo"])
        w_slab = w_slab.at[l, :H, 4 * H:4 * H + I].set(layer["Wi"])
        w_slab = w_slab.at[l, :I, 4 * H + I:4 * H + I + H].set(layer["Wo2"])

        vec_slab = vec_slab.at[l, 0, 0:3 * H].set(bqkv)
        vec_slab = vec_slab.at[l, 1, 0:H].set(layer["bo"])
        vec_slab = vec_slab.at[l, 2, 0:H].set(layer["ln1_g"])
        vec_slab = vec_slab.at[l, 3, 0:H].set(layer["ln1_b"])
        vec_slab = vec_slab.at[l, 4, 0:I].set(layer["bi"])
        vec_slab = vec_slab.at[l, 5, 0:H].set(layer["bo2"])
        vec_slab = vec_slab.at[l, 6, 0:H].set(layer["ln2_g"])
        vec_slab = vec_slab.at[l, 7, 0:H].set(layer["ln2_b"])

    head_slab = jnp.zeros((H + 4, 64), jnp.float32)                  # [36, 64]
    head_slab = head_slab.at[:H, :H].set(params["pool_W"])
    head_slab = head_slab.at[:H, H:H + C].set(params["cls_W"])
    head_slab = head_slab.at[H, :H].set(params["pool_b"])
    head_slab = head_slab.at[H + 1, :C].set(params["cls_b"])
    head_slab = head_slab.at[H + 2, :H].set(params["emb_ln_g"])
    head_slab = head_slab.at[H + 3, :H].set(params["emb_ln_b"])

    return {
        "word_emb": params["word_emb"],
        "pos_emb": params["pos_emb"],
        "type_emb": params["type_emb"],
        "w_slab": w_slab,
        "vec_slab": vec_slab,
        "head_slab": head_slab,
    }


def my_bert_forward(packed, p_h_tensor):
    """p_h_tensor: int32 [4, B, S] stacked (input_id, segment, bpe, add_bpe)."""
    input_id = p_h_tensor[0]
    segment = p_h_tensor[1]
    _bpe = p_h_tensor[2]          # unused in the reference forward
    _add_bpe = p_h_tensor[3]      # unused in the reference forward

    B, S = input_id.shape
    H = HIDDEN

    # attention mask: 1 where input_id > 0 (same semantics as the python loop);
    # additive bias is tiled to the head-batched layout used in-kernel (g = h*B + b).
    attn_mask = (input_id > 0).astype(jnp.float32)                    # [B, S]
    mask_bias = ((1.0 - attn_mask) * (-1e9)).reshape(B, 1, S)
    mask_bias = jnp.tile(mask_bias, (NUM_HEADS, 1, 1))                # [B*nH, 1, S]

    # embedding gathers stay in plain JAX glue
    # TODO(synk): real RoBERTa offsets positions by padding_idx+1; irrelevant for synthetic weights.
    emb = (jnp.take(packed["word_emb"], input_id, axis=0)
           + packed["pos_emb"][None, :S, :]
           + jnp.take(packed["type_emb"], segment, axis=0))           # [B, S, H]
    emb = emb.reshape(B * S, H).astype(jnp.float32)

    kernel = functools.partial(
        _bert_kernel, B=B, S=S, H=H, nH=NUM_HEADS, Dh=HEAD_DIM,
        I=INTERMEDIATE, C=CLASS_NUM, num_layers=NUM_LAYERS)

    vmem_spec = pl.BlockSpec(memory_space=pltpu.MemorySpace.VMEM)
    # no grid: single fused invocation; 5 kernel inputs total (<150 KB) fit any
    # generation's VMEM.  (If B/S/HIDDEN ever grow, add a batch grid axis with
    # dimension_semantics=("parallel",) and switch weights to layer-streamed DMA.)
    return pl.pallas_call(
        kernel,
        out_shape=jax.ShapeDtypeStruct((B, CLASS_NUM), jnp.float32),
        in_specs=[vmem_spec] * 5,
        out_specs=vmem_spec,
    )(emb, mask_bias, packed["w_slab"], packed["vec_slab"], packed["head_slab"])


# ----------------------------- driver -----------------------------

if __name__ == "__main__":
    key = jax.random.PRNGKey(0)
    k_ids, k_seg = jax.random.split(key)

    input_id = jax.random.randint(k_ids, (BATCH, SEQ), 1, VOCAB, dtype=jnp.int32)
    # introduce some padding (zeros) so the attention mask actually masks
    input_id = input_id.at[1, SEQ - 2:].set(0)
    segment = jax.random.randint(k_seg, (BATCH, SEQ), 0, TYPE_VOCAB, dtype=jnp.int32)
    bpe = jnp.zeros((BATCH, SEQ), jnp.int32)
    add_bpe = jnp.zeros((BATCH, SEQ), jnp.int32)
    p_h_tensor = jnp.stack([input_id, segment, bpe, add_bpe], axis=0)   # [4, B, S]

    params = init_params(jax.random.PRNGKey(42))
    packed = pack_params(params)          # one-time packing, outside the forward path
    packed = jax.tree_util.tree_map(jax.device_put, packed)

    logits = jax.jit(my_bert_forward)(packed, p_h_tensor)
    jax.block_until_ready(logits)
    assert logits.shape == (BATCH, CLASS_NUM)
    assert bool(jnp.all(jnp.isfinite(logits)))
    print("KERNEL_OK")
</pallas_src>

<mosaic_0001>
module attributes {stable_mosaic.version = 11 : i64} {
  func.func @_bert_kernel(%arg0: memref<16x32xf32, #tpu.memory_space<vmem>>, %arg1: memref<8x1x8xf32, #tpu.memory_space<vmem>>, %arg2: memref<2x64x224xf32, #tpu.memory_space<vmem>>, %arg3: memref<2x8x96xf32, #tpu.memory_space<vmem>>, %arg4: memref<36x64xf32, #tpu.memory_space<vmem>>, %arg5: memref<2x3xf32, #tpu.memory_space<vmem>>) attributes {dimension_semantics = [], scalar_prefetch = 0 : i64, scratch_operands = 0 : i64, tpu.core_type = #tpu.core_type<tc>} {
    %c0 = arith.constant 0 : index
    %c0_0 = arith.constant 0 : index
    %c0_1 = arith.constant 0 : index
    %0 = vector.load %arg1[%c0, %c0_0, %c0_1] : memref<8x1x8xf32, #tpu.memory_space<vmem>>, vector<8x1x8xf32>
    %c34 = arith.constant 34 : index
    %c0_2 = arith.constant 0 : index
    %1 = vector.load %arg4[%c34, %c0_2] : memref<36x64xf32, #tpu.memory_space<vmem>>, vector<1x32xf32>
    %c35 = arith.constant 35 : index
    %c0_3 = arith.constant 0 : index
    %2 = vector.load %arg4[%c35, %c0_3] : memref<36x64xf32, #tpu.memory_space<vmem>>, vector<1x32xf32>
    %c0_4 = arith.constant 0 : index
    %c0_5 = arith.constant 0 : index
    %3 = vector.load %arg0[%c0_4, %c0_5] : memref<16x32xf32, #tpu.memory_space<vmem>>, vector<16x32xf32>
    %cst = arith.constant dense<0.000000e+00> : vector<16xf32>
    %4 = vector.multi_reduction <add>, %3, %cst [1] : vector<16x32xf32> to vector<16xf32>
    %5 = vector.shape_cast %4 : vector<16xf32> to vector<16x1xf32>
    %6 = arith.mulf %3, %3 : vector<16x32xf32>
    %cst_6 = arith.constant dense<0.000000e+00> : vector<16xf32>
    %7 = vector.multi_reduction <add>, %6, %cst_6 [1] : vector<16x32xf32> to vector<16xf32>
    %8 = vector.shape_cast %7 : vector<16xf32> to vector<16x1xf32>
    %cst_7 = arith.constant 3.125000e-02 : f32
    %9 = vector.broadcast %cst_7 : f32 to vector<16x1xf32>
    %10 = arith.mulf %5, %9 : vector<16x1xf32>
    %cst_8 = arith.constant 3.125000e-02 : f32
    %11 = vector.broadcast %cst_8 : f32 to vector<16x1xf32>
    %12 = arith.mulf %8, %11 : vector<16x1xf32>
    %13 = arith.mulf %10, %10 : vector<16x1xf32>
    %14 = arith.subf %12, %13 : vector<16x1xf32>
    %15 = vector.broadcast %10 : vector<16x1xf32> to vector<16x32xf32>
    %16 = arith.subf %3, %15 : vector<16x32xf32>
    %cst_9 = arith.constant 9.99999996E-13 : f32
    %17 = vector.broadcast %cst_9 : f32 to vector<16x1xf32>
    %18 = arith.addf %14, %17 : vector<16x1xf32>
    %19 = math.rsqrt %18 : vector<16x1xf32>
    %20 = vector.broadcast %19 : vector<16x1xf32> to vector<16x32xf32>
    %21 = arith.mulf %16, %20 : vector<16x32xf32>
    %22 = vector.broadcast %1 : vector<1x32xf32> to vector<16x32xf32>
    %23 = arith.mulf %21, %22 : vector<16x32xf32>
    %24 = vector.broadcast %2 : vector<1x32xf32> to vector<16x32xf32>
    %25 = arith.addf %23, %24 : vector<16x32xf32>
    %c0_10 = arith.constant 0 : index
    %c0_11 = arith.constant 0 : index
    %c0_12 = arith.constant 0 : index
    %26 = vector.load %arg2[%c0_10, %c0_11, %c0_12] : memref<2x64x224xf32, #tpu.memory_space<vmem>>, vector<1x32x96xf32>
    %27 = vector.shape_cast %26 : vector<1x32x96xf32> to vector<32x96xf32>
    %c0_13 = arith.constant 0 : index
    %c0_14 = arith.constant 0 : index
    %c96 = arith.constant 96 : index
    %28 = vector.load %arg2[%c0_13, %c0_14, %c96] : memref<2x64x224xf32, #tpu.memory_space<vmem>>, vector<1x32x32xf32>
    %29 = vector.shape_cast %28 : vector<1x32x32xf32> to vector<32x32xf32>
    %c0_15 = arith.constant 0 : index
    %c0_16 = arith.constant 0 : index
    %c128 = arith.constant 128 : index
    %30 = vector.load %arg2[%c0_15, %c0_16, %c128] : memref<2x64x224xf32, #tpu.memory_space<vmem>>, vector<1x32x64xf32>
    %31 = vector.shape_cast %30 : vector<1x32x64xf32> to vector<32x64xf32>
    %c0_17 = arith.constant 0 : index
    %c0_18 = arith.constant 0 : index
    %c192 = arith.constant 192 : index
    %32 = vector.load %arg2[%c0_17, %c0_18, %c192] : memref<2x64x224xf32, #tpu.memory_space<vmem>>, vector<1x64x32xf32>
    %33 = vector.shape_cast %32 : vector<1x64x32xf32> to vector<64x32xf32>
    %c0_19 = arith.constant 0 : index
    %c0_20 = arith.constant 0 : index
    %c0_21 = arith.constant 0 : index
    %34 = vector.load %arg3[%c0_19, %c0_20, %c0_21] : memref<2x8x96xf32, #tpu.memory_space<vmem>>, vector<1x1x96xf32>
    %35 = vector.shape_cast %34 : vector<1x1x96xf32> to vector<1x96xf32>
    %c0_22 = arith.constant 0 : index
    %c1 = arith.constant 1 : index
    %c0_23 = arith.constant 0 : index
    %36 = vector.load %arg3[%c0_22, %c1, %c0_23] : memref<2x8x96xf32, #tpu.memory_space<vmem>>, vector<1x1x32xf32>
    %37 = vector.shape_cast %36 : vector<1x1x32xf32> to vector<1x32xf32>
    %c0_24 = arith.constant 0 : index
    %c2 = arith.constant 2 : index
    %c0_25 = arith.constant 0 : index
    %38 = vector.load %arg3[%c0_24, %c2, %c0_25] : memref<2x8x96xf32, #tpu.memory_space<vmem>>, vector<1x1x32xf32>
    %39 = vector.shape_cast %38 : vector<1x1x32xf32> to vector<1x32xf32>
    %c0_26 = arith.constant 0 : index
    %c3 = arith.constant 3 : index
    %c0_27 = arith.constant 0 : index
    %40 = vector.load %arg3[%c0_26, %c3, %c0_27] : memref<2x8x96xf32, #tpu.memory_space<vmem>>, vector<1x1x32xf32>
    %41 = vector.shape_cast %40 : vector<1x1x32xf32> to vector<1x32xf32>
    %c0_28 = arith.constant 0 : index
    %c4 = arith.constant 4 : index
    %c0_29 = arith.constant 0 : index
    %42 = vector.load %arg3[%c0_28, %c4, %c0_29] : memref<2x8x96xf32, #tpu.memory_space<vmem>>, vector<1x1x64xf32>
    %43 = vector.shape_cast %42 : vector<1x1x64xf32> to vector<1x64xf32>
    %c0_30 = arith.constant 0 : index
    %c5 = arith.constant 5 : index
    %c0_31 = arith.constant 0 : index
    %44 = vector.load %arg3[%c0_30, %c5, %c0_31] : memref<2x8x96xf32, #tpu.memory_space<vmem>>, vector<1x1x32xf32>
    %45 = vector.shape_cast %44 : vector<1x1x32xf32> to vector<1x32xf32>
    %c0_32 = arith.constant 0 : index
    %c6 = arith.constant 6 : index
    %c0_33 = arith.constant 0 : index
    %46 = vector.load %arg3[%c0_32, %c6, %c0_33] : memref<2x8x96xf32, #tpu.memory_space<vmem>>, vector<1x1x32xf32>
    %47 = vector.shape_cast %46 : vector<1x1x32xf32> to vector<1x32xf32>
    %c0_34 = arith.constant 0 : index
    %c7 = arith.constant 7 : index
    %c0_35 = arith.constant 0 : index
    %48 = vector.load %arg3[%c0_34, %c7, %c0_35] : memref<2x8x96xf32, #tpu.memory_space<vmem>>, vector<1x1x32xf32>
    %49 = vector.shape_cast %48 : vector<1x1x32xf32> to vector<1x32xf32>
    %cst_36 = arith.constant dense<0.000000e+00> : vector<16x96xf32>
    %50 = tpu.matmul %25, %27, %cst_36 {dimension_numbers = #tpu.dot_dimension_numbers<[1], [0], [0], [1], [0, 0, 1, 1], [], []>} : vector<16x32xf32>, vector<32x96xf32>, vector<16x96xf32> -> vector<16x96xf32>
    %51 = vector.broadcast %35 : vector<1x96xf32> to vector<16x96xf32>
    %52 = arith.addf %50, %51 : vector<16x96xf32>
    %53 = vector.extract_strided_slice %52 {offsets = [0, 0], sizes = [16, 24], strides = [1, 1]} : vector<16x96xf32> to vector<16x24xf32>
    %54 = vector.shape_cast %53 : vector<16x24xf32> to vector<2x8x24xf32>
    %55 = vector.extract_strided_slice %52 {offsets = [0, 24], sizes = [16, 24], strides = [1, 1]} : vector<16x96xf32> to vector<16x24xf32>
    %56 = vector.shape_cast %55 : vector<16x24xf32> to vector<2x8x24xf32>
    %57 = vector.extract_strided_slice %52 {offsets = [0, 48], sizes = [16, 24], strides = [1, 1]} : vector<16x96xf32> to vector<16x24xf32>
    %58 = vector.shape_cast %57 : vector<16x24xf32> to vector<2x8x24xf32>
    %59 = vector.extract_strided_slice %52 {offsets = [0, 72], sizes = [16, 24], strides = [1, 1]} : vector<16x96xf32> to vector<16x24xf32>
    %60 = vector.shape_cast %59 : vector<16x24xf32> to vector<2x8x24xf32>
    %61 = tpu.concatenate %54, %56, %58, %60 in 0 : vector<2x8x24xf32>, vector<2x8x24xf32>, vector<2x8x24xf32>, vector<2x8x24xf32> -> vector<8x8x24xf32>
    %62 = vector.extract_strided_slice %61 {offsets = [0, 0, 0], sizes = [8, 8, 8], strides = [1, 1, 1]} : vector<8x8x24xf32> to vector<8x8x8xf32>
    %63 = vector.extract_strided_slice %61 {offsets = [0, 0, 8], sizes = [8, 8, 8], strides = [1, 1, 1]} : vector<8x8x24xf32> to vector<8x8x8xf32>
    %64 = vector.extract_strided_slice %61 {offsets = [0, 0, 16], sizes = [8, 8, 8], strides = [1, 1, 1]} : vector<8x8x24xf32> to vector<8x8x8xf32>
    "tpu.trace_start"() <{level = 10 : i32, message = "gqd,gkd->gqk"}> : () -> ()
    %cst_37 = arith.constant dense<0.000000e+00> : vector<8x8x8xf32>
    %65 = tpu.matmul %62, %63, %cst_37 {dimension_numbers = #tpu.dot_dimension_numbers<[2], [2], [1], [1], [0, 0, 0, 1, 1, 1], [0], [0]>} : vector<8x8x8xf32>, vector<8x8x8xf32>, vector<8x8x8xf32> -> vector<8x8x8xf32>
    "tpu.trace_stop"() : () -> ()
    %66 = vector.broadcast %0 : vector<8x1x8xf32> to vector<8x8x8xf32>
    %67 = arith.addf %65, %66 : vector<8x8x8xf32>
    %cst_38 = arith.constant dense<0xFF800000> : vector<8x8xf32>
    %68 = vector.multi_reduction <maximumf>, %67, %cst_38 [2] : vector<8x8x8xf32> to vector<8x8xf32>
    %69 = vector.shape_cast %68 : vector<8x8xf32> to vector<8x8x1xf32>
    %70 = vector.broadcast %69 : vector<8x8x1xf32> to vector<8x8x8xf32>
    %71 = arith.subf %67, %70 : vector<8x8x8xf32>
    %72 = math.exp %71 : vector<8x8x8xf32>
    %cst_39 = arith.constant dense<0.000000e+00> : vector<8x8xf32>
    %73 = vector.multi_reduction <add>, %72, %cst_39 [2] : vector<8x8x8xf32> to vector<8x8xf32>
    %74 = vector.shape_cast %73 : vector<8x8xf32> to vector<8x8x1xf32>
    %75 = tpu.reciprocal %74 {approx = true} : vector<8x8x1xf32> -> vector<8x8x1xf32>
    %76 = vector.broadcast %75 : vector<8x8x1xf32> to vector<8x8x8xf32>
    %77 = arith.mulf %72, %76 : vector<8x8x8xf32>
    "tpu.trace_start"() <{level = 10 : i32, message = "gqk,gkd->gqd"}> : () -> ()
    %cst_40 = arith.constant dense<0.000000e+00> : vector<8x8x8xf32>
    %78 = tpu.matmul %77, %64, %cst_40 {dimension_numbers = #tpu.dot_dimension_numbers<[2], [1], [1], [2], [0, 0, 0, 1, 1, 2], [0], [0]>} : vector<8x8x8xf32>, vector<8x8x8xf32>, vector<8x8x8xf32> -> vector<8x8x8xf32>
    "tpu.trace_stop"() : () -> ()
    %79 = vector.extract_strided_slice %78 {offsets = [0, 0, 0], sizes = [2, 8, 8], strides = [1, 1, 1]} : vector<8x8x8xf32> to vector<2x8x8xf32>
    %80 = vector.shape_cast %79 : vector<2x8x8xf32> to vector<16x8xf32>
    %81 = vector.extract_strided_slice %78 {offsets = [2, 0, 0], sizes = [2, 8, 8], strides = [1, 1, 1]} : vector<8x8x8xf32> to vector<2x8x8xf32>
    %82 = vector.shape_cast %81 : vector<2x8x8xf32> to vector<16x8xf32>
    %83 = vector.extract_strided_slice %78 {offsets = [4, 0, 0], sizes = [2, 8, 8], strides = [1, 1, 1]} : vector<8x8x8xf32> to vector<2x8x8xf32>
    %84 = vector.shape_cast %83 : vector<2x8x8xf32> to vector<16x8xf32>
    %85 = vector.extract_strided_slice %78 {offsets = [6, 0, 0], sizes = [2, 8, 8], strides = [1, 1, 1]} : vector<8x8x8xf32> to vector<2x8x8xf32>
    %86 = vector.shape_cast %85 : vector<2x8x8xf32> to vector<16x8xf32>
    %87 = tpu.concatenate %80, %82, %84, %86 in 1 : vector<16x8xf32>, vector<16x8xf32>, vector<16x8xf32>, vector<16x8xf32> -> vector<16x32xf32>
    %cst_41 = arith.constant dense<0.000000e+00> : vector<16x32xf32>
    %88 = tpu.matmul %87, %29, %cst_41 {dimension_numbers = #tpu.dot_dimension_numbers<[1], [0], [0], [1], [0, 0, 1, 1], [], []>} : vector<16x32xf32>, vector<32x32xf32>, vector<16x32xf32> -> vector<16x32xf32>
    %89 = vector.broadcast %37 : vector<1x32xf32> to vector<16x32xf32>
    %90 = arith.addf %88, %89 : vector<16x32xf32>
    %91 = arith.addf %90, %25 : vector<16x32xf32>
    %cst_42 = arith.constant dense<0.000000e+00> : vector<16xf32>
    %92 = vector.multi_reduction <add>, %91, %cst_42 [1] : vector<16x32xf32> to vector<16xf32>
    %93 = vector.shape_cast %92 : vector<16xf32> to vector<16x1xf32>
    %94 = arith.mulf %91, %91 : vector<16x32xf32>
    %cst_43 = arith.constant dense<0.000000e+00> : vector<16xf32>
    %95 = vector.multi_reduction <add>, %94, %cst_43 [1] : vector<16x32xf32> to vector<16xf32>
    %96 = vector.shape_cast %95 : vector<16xf32> to vector<16x1xf32>
    %cst_44 = arith.constant 3.125000e-02 : f32
    %97 = vector.broadcast %cst_44 : f32 to vector<16x1xf32>
    %98 = arith.mulf %93, %97 : vector<16x1xf32>
    %cst_45 = arith.constant 3.125000e-02 : f32
    %99 = vector.broadcast %cst_45 : f32 to vector<16x1xf32>
    %100 = arith.mulf %96, %99 : vector<16x1xf32>
    %101 = arith.mulf %98, %98 : vector<16x1xf32>
    %102 = arith.subf %100, %101 : vector<16x1xf32>
    %103 = vector.broadcast %98 : vector<16x1xf32> to vector<16x32xf32>
    %104 = arith.subf %91, %103 : vector<16x32xf32>
    %cst_46 = arith.constant 9.99999996E-13 : f32
    %105 = vector.broadcast %cst_46 : f32 to vector<16x1xf32>
    %106 = arith.addf %102, %105 : vector<16x1xf32>
    %107 = math.rsqrt %106 : vector<16x1xf32>
    %108 = vector.broadcast %107 : vector<16x1xf32> to vector<16x32xf32>
    %109 = arith.mulf %104, %108 : vector<16x32xf32>
    %110 = vector.broadcast %39 : vector<1x32xf32> to vector<16x32xf32>
    %111 = arith.mulf %109, %110 : vector<16x32xf32>
    %112 = vector.broadcast %41 : vector<1x32xf32> to vector<16x32xf32>
    %113 = arith.addf %111, %112 : vector<16x32xf32>
    %cst_47 = arith.constant dense<0.000000e+00> : vector<16x64xf32>
    %114 = tpu.matmul %113, %31, %cst_47 {dimension_numbers = #tpu.dot_dimension_numbers<[1], [0], [0], [1], [0, 0, 1, 1], [], []>} : vector<16x32xf32>, vector<32x64xf32>, vector<16x64xf32> -> vector<16x64xf32>
    %115 = vector.broadcast %43 : vector<1x64xf32> to vector<16x64xf32>
    %116 = arith.addf %114, %115 : vector<16x64xf32>
    %cst_48 = arith.constant 5.000000e-01 : f32
    %117 = vector.broadcast %cst_48 : f32 to vector<16x64xf32>
    %118 = arith.mulf %117, %116 : vector<16x64xf32>
    %cst_49 = arith.constant 4.471500e-02 : f32
    %119 = vector.broadcast %cst_49 : f32 to vector<16x64xf32>
    %120 = arith.mulf %119, %116 : vector<16x64xf32>
    %121 = arith.mulf %120, %116 : vector<16x64xf32>
    %122 = arith.mulf %121, %116 : vector<16x64xf32>
    %123 = arith.addf %116, %122 : vector<16x64xf32>
    %cst_50 = arith.constant 0.797884583 : f32
    %124 = vector.broadcast %cst_50 : f32 to vector<16x64xf32>
    %125 = arith.mulf %124, %123 : vector<16x64xf32>
    %126 = math.tanh %125 : vector<16x64xf32>
    %cst_51 = arith.constant 1.000000e+00 : f32
    %127 = vector.broadcast %cst_51 : f32 to vector<16x64xf32>
    %128 = arith.addf %127, %126 : vector<16x64xf32>
    %129 = arith.mulf %118, %128 : vector<16x64xf32>
    %cst_52 = arith.constant dense<0.000000e+00> : vector<16x32xf32>
    %130 = tpu.matmul %129, %33, %cst_52 {dimension_numbers = #tpu.dot_dimension_numbers<[1], [0], [0], [1], [0, 0, 1, 1], [], []>} : vector<16x64xf32>, vector<64x32xf32>, vector<16x32xf32> -> vector<16x32xf32>
    %131 = vector.broadcast %45 : vector<1x32xf32> to vector<16x32xf32>
    %132 = arith.addf %130, %131 : vector<16x32xf32>
    %133 = arith.addf %132, %113 : vector<16x32xf32>
    %cst_53 = arith.constant dense<0.000000e+00> : vector<16xf32>
    %134 = vector.multi_reduction <add>, %133, %cst_53 [1] : vector<16x32xf32> to vector<16xf32>
    %135 = vector.shape_cast %134 : vector<16xf32> to vector<16x1xf32>
    %136 = arith.mulf %133, %133 : vector<16x32xf32>
    %cst_54 = arith.constant dense<0.000000e+00> : vector<16xf32>
    %137 = vector.multi_reduction <add>, %136, %cst_54 [1] : vector<16x32xf32> to vector<16xf32>
    %138 = vector.shape_cast %137 : vector<16xf32> to vector<16x1xf32>
    %cst_55 = arith.constant 3.125000e-02 : f32
    %139 = vector.broadcast %cst_55 : f32 to vector<16x1xf32>
    %140 = arith.mulf %135, %139 : vector<16x1xf32>
    %cst_56 = arith.constant 3.125000e-02 : f32
    %141 = vector.broadcast %cst_56 : f32 to vector<16x1xf32>
    %142 = arith.mulf %138, %141 : vector<16x1xf32>
    %143 = arith.mulf %140, %140 : vector<16x1xf32>
    %144 = arith.subf %142, %143 : vector<16x1xf32>
    %145 = vector.broadcast %140 : vector<16x1xf32> to vector<16x32xf32>
    %146 = arith.subf %133, %145 : vector<16x32xf32>
    %cst_57 = arith.constant 9.99999996E-13 : f32
    %147 = vector.broadcast %cst_57 : f32 to vector<16x1xf32>
    %148 = arith.addf %144, %147 : vector<16x1xf32>
    %149 = math.rsqrt %148 : vector<16x1xf32>
    %150 = vector.broadcast %149 : vector<16x1xf32> to vector<16x32xf32>
    %151 = arith.mulf %146, %150 : vector<16x32xf32>
    %152 = vector.broadcast %47 : vector<1x32xf32> to vector<16x32xf32>
    %153 = arith.mulf %151, %152 : vector<16x32xf32>
    %154 = vector.broadcast %49 : vector<1x32xf32> to vector<16x32xf32>
    %155 = arith.addf %153, %154 : vector<16x32xf32>
    %c1_58 = arith.constant 1 : index
    %c0_59 = arith.constant 0 : index
    %c0_60 = arith.constant 0 : index
    %156 = vector.load %arg2[%c1_58, %c0_59, %c0_60] : memref<2x64x224xf32, #tpu.memory_space<vmem>>, vector<1x32x96xf32>
    %157 = vector.shape_cast %156 : vector<1x32x96xf32> to vector<32x96xf32>
    %c1_61 = arith.constant 1 : index
    %c0_62 = arith.constant 0 : index
    %c96_63 = arith.constant 96 : index
    %158 = vector.load %arg2[%c1_61, %c0_62, %c96_63] : memref<2x64x224xf32, #tpu.memory_space<vmem>>, vector<1x32x32xf32>
    %159 = vector.shape_cast %158 : vector<1x32x32xf32> to vector<32x32xf32>
    %c1_64 = arith.constant 1 : index
    %c0_65 = arith.constant 0 : index
    %c128_66 = arith.constant 128 : index
    %160 = vector.load %arg2[%c1_64, %c0_65, %c128_66] : memref<2x64x224xf32, #tpu.memory_space<vmem>>, vector<1x32x64xf32>
    %161 = vector.shape_cast %160 : vector<1x32x64xf32> to vector<32x64xf32>
    %c1_67 = arith.constant 1 : index
    %c0_68 = arith.constant 0 : index
    %c192_69 = arith.constant 192 : index
    %162 = vector.load %arg2[%c1_67, %c0_68, %c192_69] : memref<2x64x224xf32, #tpu.memory_space<vmem>>, vector<1x64x32xf32>
    %163 = vector.shape_cast %162 : vector<1x64x32xf32> to vector<64x32xf32>
    %c1_70 = arith.constant 1 : index
    %c0_71 = arith.constant 0 : index
    %c0_72 = arith.constant 0 : index
    %164 = vector.load %arg3[%c1_70, %c0_71, %c0_72] : memref<2x8x96xf32, #tpu.memory_space<vmem>>, vector<1x1x96xf32>
    %165 = vector.shape_cast %164 : vector<1x1x96xf32> to vector<1x96xf32>
    %c1_73 = arith.constant 1 : index
    %c1_74 = arith.constant 1 : index
    %c0_75 = arith.constant 0 : index
    %166 = vector.load %arg3[%c1_73, %c1_74, %c0_75] : memref<2x8x96xf32, #tpu.memory_space<vmem>>, vector<1x1x32xf32>
    %167 = vector.shape_cast %166 : vector<1x1x32xf32> to vector<1x32xf32>
    %c1_76 = arith.constant 1 : index
    %c2_77 = arith.constant 2 : index
    %c0_78 = arith.constant 0 : index
    %168 = vector.load %arg3[%c1_76, %c2_77, %c0_78] : memref<2x8x96xf32, #tpu.memory_space<vmem>>, vector<1x1x32xf32>
    %169 = vector.shape_cast %168 : vector<1x1x32xf32> to vector<1x32xf32>
    %c1_79 = arith.constant 1 : index
    %c3_80 = arith.constant 3 : index
    %c0_81 = arith.constant 0 : index
    %170 = vector.load %arg3[%c1_79, %c3_80, %c0_81] : memref<2x8x96xf32, #tpu.memory_space<vmem>>, vector<1x1x32xf32>
    %171 = vector.shape_cast %170 : vector<1x1x32xf32> to vector<1x32xf32>
    %c1_82 = arith.constant 1 : index
    %c4_83 = arith.constant 4 : index
    %c0_84 = arith.constant 0 : index
    %172 = vector.load %arg3[%c1_82, %c4_83, %c0_84] : memref<2x8x96xf32, #tpu.memory_space<vmem>>, vector<1x1x64xf32>
    %173 = vector.shape_cast %172 : vector<1x1x64xf32> to vector<1x64xf32>
    %c1_85 = arith.constant 1 : index
    %c5_86 = arith.constant 5 : index
    %c0_87 = arith.constant 0 : index
    %174 = vector.load %arg3[%c1_85, %c5_86, %c0_87] : memref<2x8x96xf32, #tpu.memory_space<vmem>>, vector<1x1x32xf32>
    %175 = vector.shape_cast %174 : vector<1x1x32xf32> to vector<1x32xf32>
    %c1_88 = arith.constant 1 : index
    %c6_89 = arith.constant 6 : index
    %c0_90 = arith.constant 0 : index
    %176 = vector.load %arg3[%c1_88, %c6_89, %c0_90] : memref<2x8x96xf32, #tpu.memory_space<vmem>>, vector<1x1x32xf32>
    %177 = vector.shape_cast %176 : vector<1x1x32xf32> to vector<1x32xf32>
    %c1_91 = arith.constant 1 : index
    %c7_92 = arith.constant 7 : index
    %c0_93 = arith.constant 0 : index
    %178 = vector.load %arg3[%c1_91, %c7_92, %c0_93] : memref<2x8x96xf32, #tpu.memory_space<vmem>>, vector<1x1x32xf32>
    %179 = vector.shape_cast %178 : vector<1x1x32xf32> to vector<1x32xf32>
    %cst_94 = arith.constant dense<0.000000e+00> : vector<16x96xf32>
    %180 = tpu.matmul %155, %157, %cst_94 {dimension_numbers = #tpu.dot_dimension_numbers<[1], [0], [0], [1], [0, 0, 1, 1], [], []>} : vector<16x32xf32>, vector<32x96xf32>, vector<16x96xf32> -> vector<16x96xf32>
    %181 = vector.broadcast %165 : vector<1x96xf32> to vector<16x96xf32>
    %182 = arith.addf %180, %181 : vector<16x96xf32>
    %183 = vector.extract_strided_slice %182 {offsets = [0, 0], sizes = [16, 24], strides = [1, 1]} : vector<16x96xf32> to vector<16x24xf32>
    %184 = vector.shape_cast %183 : vector<16x24xf32> to vector<2x8x24xf32>
    %185 = vector.extract_strided_slice %182 {offsets = [0, 24], sizes = [16, 24], strides = [1, 1]} : vector<16x96xf32> to vector<16x24xf32>
    %186 = vector.shape_cast %185 : vector<16x24xf32> to vector<2x8x24xf32>
    %187 = vector.extract_strided_slice %182 {offsets = [0, 48], sizes = [16, 24], strides = [1, 1]} : vector<16x96xf32> to vector<16x24xf32>
    %188 = vector.shape_cast %187 : vector<16x24xf32> to vector<2x8x24xf32>
    %189 = vector.extract_strided_slice %182 {offsets = [0, 72], sizes = [16, 24], strides = [1, 1]} : vector<16x96xf32> to vector<16x24xf32>
    %190 = vector.shape_cast %189 : vector<16x24xf32> to vector<2x8x24xf32>
    %191 = tpu.concatenate %184, %186, %188, %190 in 0 : vector<2x8x24xf32>, vector<2x8x24xf32>, vector<2x8x24xf32>, vector<2x8x24xf32> -> vector<8x8x24xf32>
    %192 = vector.extract_strided_slice %191 {offsets = [0, 0, 0], sizes = [8, 8, 8], strides = [1, 1, 1]} : vector<8x8x24xf32> to vector<8x8x8xf32>
    %193 = vector.extract_strided_slice %191 {offsets = [0, 0, 8], sizes = [8, 8, 8], strides = [1, 1, 1]} : vector<8x8x24xf32> to vector<8x8x8xf32>
    %194 = vector.extract_strided_slice %191 {offsets = [0, 0, 16], sizes = [8, 8, 8], strides = [1, 1, 1]} : vector<8x8x24xf32> to vector<8x8x8xf32>
    "tpu.trace_start"() <{level = 10 : i32, message = "gqd,gkd->gqk"}> : () -> ()
    %cst_95 = arith.constant dense<0.000000e+00> : vector<8x8x8xf32>
    %195 = tpu.matmul %192, %193, %cst_95 {dimension_numbers = #tpu.dot_dimension_numbers<[2], [2], [1], [1], [0, 0, 0, 1, 1, 1], [0], [0]>} : vector<8x8x8xf32>, vector<8x8x8xf32>, vector<8x8x8xf32> -> vector<8x8x8xf32>
    "tpu.trace_stop"() : () -> ()
    %196 = vector.broadcast %0 : vector<8x1x8xf32> to vector<8x8x8xf32>
    %197 = arith.addf %195, %196 : vector<8x8x8xf32>
    %cst_96 = arith.constant dense<0xFF800000> : vector<8x8xf32>
    %198 = vector.multi_reduction <maximumf>, %197, %cst_96 [2] : vector<8x8x8xf32> to vector<8x8xf32>
    %199 = vector.shape_cast %198 : vector<8x8xf32> to vector<8x8x1xf32>
    %200 = vector.broadcast %199 : vector<8x8x1xf32> to vector<8x8x8xf32>
    %201 = arith.subf %197, %200 : vector<8x8x8xf32>
    %202 = math.exp %201 : vector<8x8x8xf32>
    %cst_97 = arith.constant dense<0.000000e+00> : vector<8x8xf32>
    %203 = vector.multi_reduction <add>, %202, %cst_97 [2] : vector<8x8x8xf32> to vector<8x8xf32>
    %204 = vector.shape_cast %203 : vector<8x8xf32> to vector<8x8x1xf32>
    %205 = tpu.reciprocal %204 {approx = true} : vector<8x8x1xf32> -> vector<8x8x1xf32>
    %206 = vector.broadcast %205 : vector<8x8x1xf32> to vector<8x8x8xf32>
    %207 = arith.mulf %202, %206 : vector<8x8x8xf32>
    "tpu.trace_start"() <{level = 10 : i32, message = "gqk,gkd->gqd"}> : () -> ()
    %cst_98 = arith.constant dense<0.000000e+00> : vector<8x8x8xf32>
    %208 = tpu.matmul %207, %194, %cst_98 {dimension_numbers = #tpu.dot_dimension_numbers<[2], [1], [1], [2], [0, 0, 0, 1, 1, 2], [0], [0]>} : vector<8x8x8xf32>, vector<8x8x8xf32>, vector<8x8x8xf32> -> vector<8x8x8xf32>
    "tpu.trace_stop"() : () -> ()
    %209 = vector.extract_strided_slice %208 {offsets = [0, 0, 0], sizes = [2, 8, 8], strides = [1, 1, 1]} : vector<8x8x8xf32> to vector<2x8x8xf32>
    %210 = vector.shape_cast %209 : vector<2x8x8xf32> to vector<16x8xf32>
    %211 = vector.extract_strided_slice %208 {offsets = [2, 0, 0], sizes = [2, 8, 8], strides = [1, 1, 1]} : vector<8x8x8xf32> to vector<2x8x8xf32>
    %212 = vector.shape_cast %211 : vector<2x8x8xf32> to vector<16x8xf32>
    %213 = vector.extract_strided_slice %208 {offsets = [4, 0, 0], sizes = [2, 8, 8], strides = [1, 1, 1]} : vector<8x8x8xf32> to vector<2x8x8xf32>
    %214 = vector.shape_cast %213 : vector<2x8x8xf32> to vector<16x8xf32>
    %215 = vector.extract_strided_slice %208 {offsets = [6, 0, 0], sizes = [2, 8, 8], strides = [1, 1, 1]} : vector<8x8x8xf32> to vector<2x8x8xf32>
    %216 = vector.shape_cast %215 : vector<2x8x8xf32> to vector<16x8xf32>
    %217 = tpu.concatenate %210, %212, %214, %216 in 1 : vector<16x8xf32>, vector<16x8xf32>, vector<16x8xf32>, vector<16x8xf32> -> vector<16x32xf32>
    %cst_99 = arith.constant dense<0.000000e+00> : vector<16x32xf32>
    %218 = tpu.matmul %217, %159, %cst_99 {dimension_numbers = #tpu.dot_dimension_numbers<[1], [0], [0], [1], [0, 0, 1, 1], [], []>} : vector<16x32xf32>, vector<32x32xf32>, vector<16x32xf32> -> vector<16x32xf32>
    %219 = vector.broadcast %167 : vector<1x32xf32> to vector<16x32xf32>
    %220 = arith.addf %218, %219 : vector<16x32xf32>
    %221 = arith.addf %220, %155 : vector<16x32xf32>
    %cst_100 = arith.constant dense<0.000000e+00> : vector<16xf32>
    %222 = vector.multi_reduction <add>, %221, %cst_100 [1] : vector<16x32xf32> to vector<16xf32>
    %223 = vector.shape_cast %222 : vector<16xf32> to vector<16x1xf32>
    %224 = arith.mulf %221, %221 : vector<16x32xf32>
    %cst_101 = arith.constant dense<0.000000e+00> : vector<16xf32>
    %225 = vector.multi_reduction <add>, %224, %cst_101 [1] : vector<16x32xf32> to vector<16xf32>
    %226 = vector.shape_cast %225 : vector<16xf32> to vector<16x1xf32>
    %cst_102 = arith.constant 3.125000e-02 : f32
    %227 = vector.broadcast %cst_102 : f32 to vector<16x1xf32>
    %228 = arith.mulf %223, %227 : vector<16x1xf32>
    %cst_103 = arith.constant 3.125000e-02 : f32
    %229 = vector.broadcast %cst_103 : f32 to vector<16x1xf32>
    %230 = arith.mulf %226, %229 : vector<16x1xf32>
    %231 = arith.mulf %228, %228 : vector<16x1xf32>
    %232 = arith.subf %230, %231 : vector<16x1xf32>
    %233 = vector.broadcast %228 : vector<16x1xf32> to vector<16x32xf32>
    %234 = arith.subf %221, %233 : vector<16x32xf32>
    %cst_104 = arith.constant 9.99999996E-13 : f32
    %235 = vector.broadcast %cst_104 : f32 to vector<16x1xf32>
    %236 = arith.addf %232, %235 : vector<16x1xf32>
    %237 = math.rsqrt %236 : vector<16x1xf32>
    %238 = vector.broadcast %237 : vector<16x1xf32> to vector<16x32xf32>
    %239 = arith.mulf %234, %238 : vector<16x32xf32>
    %240 = vector.broadcast %169 : vector<1x32xf32> to vector<16x32xf32>
    %241 = arith.mulf %239, %240 : vector<16x32xf32>
    %242 = vector.broadcast %171 : vector<1x32xf32> to vector<16x32xf32>
    %243 = arith.addf %241, %242 : vector<16x32xf32>
    %cst_105 = arith.constant dense<0.000000e+00> : vector<16x64xf32>
    %244 = tpu.matmul %243, %161, %cst_105 {dimension_numbers = #tpu.dot_dimension_numbers<[1], [0], [0], [1], [0, 0, 1, 1], [], []>} : vector<16x32xf32>, vector<32x64xf32>, vector<16x64xf32> -> vector<16x64xf32>
    %245 = vector.broadcast %173 : vector<1x64xf32> to vector<16x64xf32>
    %246 = arith.addf %244, %245 : vector<16x64xf32>
    %cst_106 = arith.constant 5.000000e-01 : f32
    %247 = vector.broadcast %cst_106 : f32 to vector<16x64xf32>
    %248 = arith.mulf %247, %246 : vector<16x64xf32>
    %cst_107 = arith.constant 4.471500e-02 : f32
    %249 = vector.broadcast %cst_107 : f32 to vector<16x64xf32>
    %250 = arith.mulf %249, %246 : vector<16x64xf32>
    %251 = arith.mulf %250, %246 : vector<16x64xf32>
    %252 = arith.mulf %251, %246 : vector<16x64xf32>
    %253 = arith.addf %246, %252 : vector<16x64xf32>
    %cst_108 = arith.constant 0.797884583 : f32
    %254 = vector.broadcast %cst_108 : f32 to vector<16x64xf32>
    %255 = arith.mulf %254, %253 : vector<16x64xf32>
    %256 = math.tanh %255 : vector<16x64xf32>
    %cst_109 = arith.constant 1.000000e+00 : f32
    %257 = vector.broadcast %cst_109 : f32 to vector<16x64xf32>
    %258 = arith.addf %257, %256 : vector<16x64xf32>
    %259 = arith.mulf %248, %258 : vector<16x64xf32>
    %cst_110 = arith.constant dense<0.000000e+00> : vector<16x32xf32>
    %260 = tpu.matmul %259, %163, %cst_110 {dimension_numbers = #tpu.dot_dimension_numbers<[1], [0], [0], [1], [0, 0, 1, 1], [], []>} : vector<16x64xf32>, vector<64x32xf32>, vector<16x32xf32> -> vector<16x32xf32>
    %261 = vector.broadcast %175 : vector<1x32xf32> to vector<16x32xf32>
    %262 = arith.addf %260, %261 : vector<16x32xf32>
    %263 = arith.addf %262, %243 : vector<16x32xf32>
    %cst_111 = arith.constant dense<0.000000e+00> : vector<16xf32>
    %264 = vector.multi_reduction <add>, %263, %cst_111 [1] : vector<16x32xf32> to vector<16xf32>
    %265 = vector.shape_cast %264 : vector<16xf32> to vector<16x1xf32>
    %266 = arith.mulf %263, %263 : vector<16x32xf32>
    %cst_112 = arith.constant dense<0.000000e+00> : vector<16xf32>
    %267 = vector.multi_reduction <add>, %266, %cst_112 [1] : vector<16x32xf32> to vector<16xf32>
    %268 = vector.shape_cast %267 : vector<16xf32> to vector<16x1xf32>
    %cst_113 = arith.constant 3.125000e-02 : f32
    %269 = vector.broadcast %cst_113 : f32 to vector<16x1xf32>
    %270 = arith.mulf %265, %269 : vector<16x1xf32>
    %cst_114 = arith.constant 3.125000e-02 : f32
    %271 = vector.broadcast %cst_114 : f32 to vector<16x1xf32>
    %272 = arith.mulf %268, %271 : vector<16x1xf32>
    %273 = arith.mulf %270, %270 : vector<16x1xf32>
    %274 = arith.subf %272, %273 : vector<16x1xf32>
    %275 = vector.broadcast %270 : vector<16x1xf32> to vector<16x32xf32>
    %276 = arith.subf %263, %275 : vector<16x32xf32>
    %cst_115 = arith.constant 9.99999996E-13 : f32
    %277 = vector.broadcast %cst_115 : f32 to vector<16x1xf32>
    %278 = arith.addf %274, %277 : vector<16x1xf32>
    %279 = math.rsqrt %278 : vector<16x1xf32>
    %280 = vector.broadcast %279 : vector<16x1xf32> to vector<16x32xf32>
    %281 = arith.mulf %276, %280 : vector<16x32xf32>
    %282 = vector.broadcast %177 : vector<1x32xf32> to vector<16x32xf32>
    %283 = arith.mulf %281, %282 : vector<16x32xf32>
    %284 = vector.broadcast %179 : vector<1x32xf32> to vector<16x32xf32>
    %285 = arith.addf %283, %284 : vector<16x32xf32>
    %286 = vector.extract_strided_slice %285 {offsets = [0, 0], sizes = [1, 32], strides = [1, 1]} : vector<16x32xf32> to vector<1x32xf32>
    %287 = vector.extract_strided_slice %285 {offsets = [8, 0], sizes = [1, 32], strides = [1, 1]} : vector<16x32xf32> to vector<1x32xf32>
    %288 = tpu.concatenate %286, %287 in 0 : vector<1x32xf32>, vector<1x32xf32> -> vector<2x32xf32>
    %c0_116 = arith.constant 0 : index
    %c0_117 = arith.constant 0 : index
    %289 = vector.load %arg4[%c0_116, %c0_117] : memref<36x64xf32, #tpu.memory_space<vmem>>, vector<32x32xf32>
    %c0_118 = arith.constant 0 : index
    %c32 = arith.constant 32 : index
    %290 = vector.load %arg4[%c0_118, %c32] : memref<36x64xf32, #tpu.memory_space<vmem>>, vector<32x3xf32>
    %c32_119 = arith.constant 32 : index
    %c0_120 = arith.constant 0 : index
    %291 = vector.load %arg4[%c32_119, %c0_120] : memref<36x64xf32, #tpu.memory_space<vmem>>, vector<1x32xf32>
    %c33 = arith.constant 33 : index
    %c0_121 = arith.constant 0 : index
    %292 = vector.load %arg4[%c33, %c0_121] : memref<36x64xf32, #tpu.memory_space<vmem>>, vector<1x3xf32>
    %cst_122 = arith.constant dense<0.000000e+00> : vector<2x32xf32>
    %293 = tpu.matmul %288, %289, %cst_122 {dimension_numbers = #tpu.dot_dimension_numbers<[1], [0], [0], [1], [0, 0, 1, 1], [], []>} : vector<2x32xf32>, vector<32x32xf32>, vector<2x32xf32> -> vector<2x32xf32>
    %294 = vector.broadcast %291 : vector<1x32xf32> to vector<2x32xf32>
    %295 = arith.addf %293, %294 : vector<2x32xf32>
    %296 = math.tanh %295 : vector<2x32xf32>
    %cst_123 = arith.constant dense<0.000000e+00> : vector<2x3xf32>
    %297 = tpu.matmul %296, %290, %cst_123 {dimension_numbers = #tpu.dot_dimension_numbers<[1], [0], [0], [1], [0, 0, 1, 1], [], []>} : vector<2x32xf32>, vector<32x3xf32>, vector<2x3xf32> -> vector<2x3xf32>
    %298 = vector.broadcast %292 : vector<1x3xf32> to vector<2x3xf32>
    %299 = arith.addf %297, %298 : vector<2x3xf32>
    %c0_124 = arith.constant 0 : index
    %c0_125 = arith.constant 0 : index
    %300 = vector.load %arg5[%c0_124, %c0_125] : memref<2x3xf32, #tpu.memory_space<vmem>>, vector<2x3xf32>
    tpu.vector_store %arg5[%c0_124, %c0_125], %299 {strides = array<i32>} : memref<2x3xf32, #tpu.memory_space<vmem>>, vector<2x3xf32>,
    return
  }
}

</mosaic_0001>

<llo_original>
// kernel: my_bert_forward.1
$region0: #{my_bert_forward.1}
  #allocation0 [shape = 'u32[]', space=smem, size = 0x4, offset = 0x4, fixed_abs, tag = 'smem constant byte address 0x4 - core index']
  #allocation1 [shape = 'u32[144,128]{1,0:T(1,128)}', space=vmem, size = 0x12000, scoped, tag = 'internal scratch']
  %s0 = inlined_call_operand.vmem [shape: f32[16,32], index: 0, kind: input, shape index: {}]
  %s1 = inlined_call_operand.vmem [shape: f32[8,1,8], index: 1, kind: input, shape index: {}]
  %s2 = inlined_call_operand.vmem [shape: f32[2,64,224], index: 2, kind: input, shape index: {}]
  %s3 = inlined_call_operand.vmem [shape: f32[2,8,96], index: 3, kind: input, shape index: {}]
  %s4 = inlined_call_operand.vmem [shape: f32[36,64], index: 4, kind: input, shape index: {}]
  %s5 = inlined_call_operand.hbm [shape: f32[2,3], index: 5, kind: output, shape index: {}]
  %s6 = sld [smem:[#allocation0]]
  $region30: #{my_bert_forward.1} parent=0
    _
  %s8 = ssub.s32 1, %s6
  %s9 = scalar_select 0, %s8, %s6
  $region1: #{my_bert_forward.1} parent=0
    #allocation2 [shape = 'u8[1024]{0}', space=vmem, size = 0x400, scoped, tag = 'output window, operand 0, single buffered']
    #allocation3 [shape = 's32[1]{0}', space=sflag, size = 0x4, scoped, tag = 'scoped memory for my_bert_forward.1']
    %10 = vsyncpa [#allocation3], 0
    // Predicated region
    $region2: #{my_bert_forward.1} parent=1 // pred_check
      _
    $region3: #{my_bert_forward.1} parent=1 // pred_check_branch
      %12 = sbr.rel (0) target = $region5
    $region4: #{my_bert_forward.1} parent=1 // pred_region
      _
    $region5: #{my_bert_forward.1} parent=1 // pred_fallthru
      _
    // Predicated region
    $region6: #{my_bert_forward.1} parent=1 // pred_check
      _
    $region7: #{my_bert_forward.1} parent=1 // pred_check_branch
      %14 = sbr.rel (0) target = $region9
    $region8: #{my_bert_forward.1} parent=1 // pred_region
      _
    $region9: #{my_bert_forward.1} parent=1 // pred_fallthru
      _
    // Predicated region
    $region10: #{my_bert_forward.1} parent=1 // pred_check
      _
    $region11: #{my_bert_forward.1} parent=1 // pred_check_branch
      %16 = sbr.rel (0) target = $region13
    $region12: #{my_bert_forward.1} parent=1 // pred_region
      _
    $region13: #{my_bert_forward.1} parent=1 // pred_fallthru
      _
    // Predicated region
    $region14: #{my_bert_forward.1} parent=1 // pred_check
      _
    $region15: #{my_bert_forward.1} parent=1 // pred_check_branch
      %18 = sbr.rel (0) target = $region17
    $region16: #{my_bert_forward.1} parent=1 // pred_region
      _
    $region17: #{my_bert_forward.1} parent=1 // pred_fallthru
      _
    // Predicated region
    $region18: #{my_bert_forward.1} parent=1 // pred_check
      _
    $region19: #{my_bert_forward.1} parent=1 // pred_check_branch
      %20 = sbr.rel (0) target = $region21
    $region20: #{my_bert_forward.1} parent=1 // pred_region
      _
    $region21: #{my_bert_forward.1} parent=1 // pred_fallthru
      _
    %v21 = vld [vmem:[%s1] sm:$0x1]
    %v22 = vld [vmem:[%s1 + $0x1] sm:$0x1]
    %v23 = vld [vmem:[%s1 + $0x2] sm:$0x1]
    %v24 = vld [vmem:[%s1 + $0x3] sm:$0x1]
    %v25 = vld [vmem:[%s1 + $0x4] sm:$0x1]
    %v26 = vld [vmem:[%s1 + $0x5] sm:$0x1]
    %v27 = vld [vmem:[%s1 + $0x6] sm:$0x1]
    %v28 = vld [vmem:[%s1 + $0x7] sm:$0x1]
    %v29 = vld [vmem:[%s4 + $0x22] sm:$0x1]
    %v30 = vld [vmem:[%s4 + $0x23] sm:$0x1]
    %v31 = vld [vmem:[%s0] sm:$0xff]
    %v32 = vld [vmem:[%s0 + $0x8] sm:$0xff]
    %vm33 = vcmask 261120
    %v34 = vsel %vm33, %v31, 0.0
    %35 = vadd.xlane.f32.xlu0 %v34
    %v36 = vpop.xlane.xlu0 %35
    %v37 = vsel %vm33, %v32, 0.0
    %38 = vadd.xlane.f32.xlu0 %v37
    %v39 = vpop.xlane.xlu0 %38
    %v40 = vmul.f32 %v31, %v31
    %v41 = vmul.f32 %v32, %v32
    %v42 = vsel %vm33, %v40, 0.0
    %43 = vadd.xlane.f32.xlu0 %v42
    %v44 = vpop.xlane.xlu0 %43
    %v45 = vsel %vm33, %v41, 0.0
    %46 = vadd.xlane.f32.xlu0 %v45
    %v47 = vpop.xlane.xlu0 %46
    %v48 = vmul.f32 %v36, 0.03125
    %v49 = vmul.f32 %v39, 0.03125
    %v50 = vmul.f32 %v44, 0.03125
    %v51 = vmul.f32 %v47, 0.03125
    %v52 = vmul.f32 %v48, %v48
    %v53 = vmul.f32 %v49, %v49
    %v54 = vsub.f32 %v50, %v52
    %v55 = vsub.f32 %v51, %v53
    %v56 = vsub.f32 %v31, %v48
    %v57 = vsub.f32 %v32, %v49
    %v58 = vadd.f32 %v54, 1e-12
    %v59 = vadd.f32 %v55, 1e-12
    %v60 = vrsqrt.pop %v58
    %v61 = vrsqrt.pop %v59
    %v62 = vmul.f32 %v56, %v60
    %v63 = vmul.f32 %v57, %v61
    %v64 = vlaneseq
    %v65 = vshrl.u32 %v64, 7
    %v66 = vsub.s32 0, %v65
    %v67 = vrot.slane %v29, %v66
    %v68 = vmul.f32 %v62, %v67
    %v69 = vmul.f32 %v63, %v67
    %v70 = vlaneseq
    %v71 = vshrl.u32 %v70, 7
    %v72 = vsub.s32 0, %v71
    %v73 = vrot.slane %v30, %v72
    %v74 = vadd.f32 %v68, %v73
    %v75 = vadd.f32 %v69, %v73
    %v76 = vld [vmem:[%s2] sm:$0xff]
    %v77 = vld [vmem:[%s2 + $0x10] sm:$0xff]
    %v78 = vld [vmem:[%s2 + $0x20] sm:$0xff]
    %v79 = vld [vmem:[%s2 + $0x30] sm:$0xff]
    %v80 = vld [vmem:[%s2 + $0x8] sm:$0xff]
    %v81 = vld [vmem:[%s2 + $0x18] sm:$0xff]
    %v82 = vld [vmem:[%s2 + $0x28] sm:$0xff]
    %v83 = vld [vmem:[%s2 + $0x38] sm:$0xff]
    %v84 = vld [vmem:[%s2 + $0x48] sm:$0xff]
    %v85 = vld [vmem:[%s2 + $0x58] sm:$0xff]
    %v86 = vld [vmem:[%s2 + $0x68] sm:$0xff]
    %v87 = vld [vmem:[%s2 + $0x78] sm:$0xff]
    %v88 = vld [vmem:[%s3] sm:$0x1]
    %v89 = vld [vmem:[%s3 + $0x1] sm:$0x1]
    %v90 = vld [vmem:[%s3 + $0x2] sm:$0x1]
    %v91 = vld [vmem:[%s3 + $0x3] sm:$0x1]
    %v92 = vld [vmem:[%s3 + $0x4] sm:$0x1]
    %v93 = vld [vmem:[%s3 + $0x5] sm:$0x1]
    %v94 = vld [vmem:[%s3 + $0x6] sm:$0x1]
    %v95 = vld [vmem:[%s3 + $0x7] sm:$0x1]
    %v96 = vlaneseq
    %v97 = vshrl.u32 %v96, 7
    %v98 = vsub.s32 0, %v97
    %v99 = vrot.slane %v88, %v98
    %v101 = vsel %vm33, %v74, 0
    %v104 = vsel %vm33, %v75, 0
    %106 = vmatprep.subr.mxu0 0.0
    %107 = vmatpush1.msra.mxu0 %v76
    %108 = vmatprep.subr.mxu0 0.0
    %109 = vmatpush1.msra.mxu0 %v77
    %110 = vmatprep.subr.mxu0 0.0
    %111 = vmatpush1.msra.mxu0 %v78
    %112 = vmatprep.subr.mxu0 0.0
    %113 = vmatpush1.msra.mxu0 %v79
    %114 = vmatprep.subr.mxu0 0.0
    %115 = vmatpush1.msra.mxu0 0.0
    %116 = vmatprep.subr.mxu0 0.0
    %117 = vmatpush1.msra.mxu0 0.0
    %118 = vmatprep.subr.mxu0 0.0
    %119 = vmatpush1.msra.mxu0 0.0
    %120 = vmatprep.subr.mxu0 0.0
    %121 = vmatpush1.msra.mxu0 0.0
    %122 = vmatprep.subr.mxu0 0.0
    %123 = vmatpush1.msra.mxu0 0.0
    %124 = vmatprep.subr.mxu0 0.0
    %125 = vmatpush1.msra.mxu0 0.0
    %126 = vmatprep.subr.mxu0 0.0
    %127 = vmatpush1.msra.mxu0 0.0
    %128 = vmatprep.subr.mxu0 0.0
    %129 = vmatpush1.msra.mxu0 0.0
    %130 = vmatprep.subr.mxu0 0.0
    %131 = vmatpush1.msra.mxu0 0.0
    %132 = vmatprep.subr.mxu0 0.0
    %133 = vmatpush1.msra.mxu0 0.0
    %134 = vmatprep.subr.mxu0 0.0
    %135 = vmatpush1.msra.mxu0 0.0
    %136 = vmatprep.subr.mxu0 0.0
    %137 = vmatpush1.msra.mxu0 0.0
    %138 = vmatprep.subr.mxu0 0.0
    %139 = vmatpush1.msra.mxu0 0.0
    %140 = vmatprep.subr.mxu0 0.0
    %141 = vmatpush1.msra.mxu0 0.0
    %142 = vmatprep.subr.mxu0 0.0
    %143 = vmatpush1.msra.mxu0 0.0
    %144 = vmatprep.subr.mxu0 0.0
    %145 = vmatpush1.msra.mxu0 0.0
    %146 = vmatprep.subr.mxu0 0.0
    %147 = vmatpush1.msra.mxu0 0.0
    %148 = vmatprep.subr.mxu0 0.0
    %149 = vmatpush1.msra.mxu0 0.0
    %150 = vmatprep.subr.mxu0 0.0
    %151 = vmatpush1.msra.mxu0 0.0
    %152 = vmatprep.subr.mxu0 0.0
    %153 = vmatpush1.msra.mxu0 0.0
    %154 = vmatprep.subr.mxu0 0.0
    %155 = vmatpush1.msra.mxu0 0.0
    %156 = vmatprep.subr.mxu0 0.0
    %157 = vmatpush1.msra.mxu0 0.0
    %158 = vmatprep.subr.mxu0 0.0
    %159 = vmatpush1.msra.mxu0 0.0
    %160 = vmatprep.subr.mxu0 0.0
    %161 = vmatpush1.msra.mxu0 0.0
    %162 = vmatprep.subr.mxu0 0.0
    %163 = vmatpush1.msra.mxu0 0.0
    %164 = vmatprep.subr.mxu0 0.0
    %165 = vmatpush1.msra.mxu0 0.0
    %166 = vmatprep.subr.mxu0 0.0
    %167 = vmatpush1.msra.mxu0 0.0
    %168 = vmatprep.subr.mxu0 0.0
    %169 = vmatpush1.msra.mxu0 0.0
    %170 = vmatprep.mubr.f32.mxu0 0.0
    %171 = vmatmul.mubr.f32.gmra.mrb[0].mxu0 %v101
    %v172 = vpop.f32.mrb[0].mxu0
    %v173 = vadd.f32 %v99, %v172
    %v174 = vpop.f32.mrb[0].mxu0
    %175 = vmatprep.mubr.f32.mxu0 0.0
    %176 = vmatmul.mubr.f32.gmra.mrb[0].mxu0 %v104
    %v177 = vpop.f32.mrb[0].mxu0
    %v178 = vadd.f32 %v99, %v177
    %v179 = vpop.f32.mrb[0].mxu0
    %180 = vdwg.mxu0
    %183 = vrot.lane.b32.xlu0 %v173, 104
    %v184 = vpop.permute.xlu0 %183
    %185 = vrot.lane.b32.xlu0 %v178, 104
    %v186 = vpop.permute.xlu0 %185
    %187 = vrot.lane.b32.xlu0 %v173, 80
    %v188 = vpop.permute.xlu0 %187
    %189 = vrot.lane.b32.xlu0 %v178, 80
    %v190 = vpop.permute.xlu0 %189
    %191 = vrot.lane.b32.xlu0 %v173, 56
    %v192 = vpop.permute.xlu0 %191
    %193 = vrot.lane.b32.xlu0 %v178, 56
    %v194 = vpop.permute.xlu0 %193
    %v203 = vlaneseq
    %v204 = vshrl.u32 %v203, 7
    %v205 = vsub.s32 0, %v204
    %v206 = vrot.slane %v21, %v205
    %v207 = vlaneseq
    %v208 = vshrl.u32 %v207, 7
    %v209 = vsub.s32 0, %v208
    %v210 = vrot.slane %v22, %v209
    %v211 = vlaneseq
    %v212 = vshrl.u32 %v211, 7
    %v213 = vsub.s32 0, %v212
    %v214 = vrot.slane %v23, %v213
    %v215 = vlaneseq
    %v216 = vshrl.u32 %v215, 7
    %v217 = vsub.s32 0, %v216
    %v218 = vrot.slane %v24, %v217
    %v219 = vlaneseq
    %v220 = vshrl.u32 %v219, 7
    %v221 = vsub.s32 0, %v220
    %v222 = vrot.slane %v25, %v221
    %v223 = vlaneseq
    %v224 = vshrl.u32 %v223, 7
    %v225 = vsub.s32 0, %v224
    %v226 = vrot.slane %v26, %v225
    %v227 = vlaneseq
    %v228 = vshrl.u32 %v227, 7
    %v229 = vsub.s32 0, %v228
    %v230 = vrot.slane %v27, %v229
    %v231 = vlaneseq
    %v232 = vshrl.u32 %v231, 7
    %v233 = vsub.s32 0, %v232
    %v234 = vrot.slane %v28, %v233
    %243 = vrot.lane.b32.xlu0 %v173, 120
    %v244 = vpop.permute.xlu0 %243
    %vm245 = vcmask 64512
    %v246 = vsel %vm245, %v173, 0
    %v248 = vsel %vm245, %v244, 0
    %250 = vmatprep.subr.mxu0 0.0
    %251 = vmatpush1.xpose.msra.mxu0 %v248
    %252 = vmatprep.subr.mxu0 0.0
    %253 = vmatpush1.xpose.msra.mxu0 0.0
    %254 = vmatprep.subr.mxu0 0.0
    %255 = vmatpush1.xpose.msra.mxu0 0.0
    %256 = vmatprep.subr.mxu0 0.0
    %257 = vmatpush1.xpose.msra.mxu0 0.0
    %258 = vmatprep.subr.mxu0 0.0
    %259 = vmatpush1.xpose.msra.mxu0 0.0
    %260 = vmatprep.subr.mxu0 0.0
    %261 = vmatpush1.xpose.msra.mxu0 0.0
    %262 = vmatprep.subr.mxu0 0.0
    %263 = vmatpush1.xpose.msra.mxu0 0.0
    %264 = vmatprep.subr.mxu0 0.0
    %265 = vmatpush1.xpose.msra.mxu0 0.0
    %266 = vmatprep.subr.mxu0 0.0
    %267 = vmatpush1.xpose.msra.mxu0 0.0
    %268 = vmatprep.subr.mxu0 0.0
    %269 = vmatpush1.xpose.msra.mxu0 0.0
    %270 = vmatprep.subr.mxu0 0.0
    %271 = vmatpush1.xpose.msra.mxu0 0.0
    %272 = vmatprep.subr.mxu0 0.0
    %273 = vmatpush1.xpose.msra.mxu0 0.0
    %274 = vmatprep.subr.mxu0 0.0
    %275 = vmatpush1.xpose.msra.mxu0 0.0
    %276 = vmatprep.subr.mxu0 0.0
    %277 = vmatpush1.xpose.msra.mxu0 0.0
    %278 = vmatprep.subr.mxu0 0.0
    %279 = vmatpush1.xpose.msra.mxu0 0.0
    %280 = vmatprep.subr.mxu0 0.0
    %281 = vmatpush1.xpose.msra.mxu0 0.0
    %282 = vmatprep.subr.mxu0 0.0
    %283 = vmatpush1.xpose.msra.mxu0 0.0
    %284 = vmatprep.subr.mxu0 0.0
    %285 = vmatpush1.xpose.msra.mxu0 0.0
    %286 = vmatprep.subr.mxu0 0.0
    %287 = vmatpush1.xpose.msra.mxu0 0.0
    %288 = vmatprep.subr.mxu0 0.0
    %289 = vmatpush1.xpose.msra.mxu0 0.0
    %290 = vmatprep.subr.mxu0 0.0
    %291 = vmatpush1.xpose.msra.mxu0 0.0
    %292 = vmatprep.subr.mxu0 0.0
    %293 = vmatpush1.xpose.msra.mxu0 0.0
    %294 = vmatprep.subr.mxu0 0.0
    %295 = vmatpush1.xpose.msra.mxu0 0.0
    %296 = vmatprep.subr.mxu0 0.0
    %297 = vmatpush1.xpose.msra.mxu0 0.0
    %298 = vmatprep.subr.mxu0 0.0
    %299 = vmatpush1.xpose.msra.mxu0 0.0
    %300 = vmatprep.subr.mxu0 0.0
    %301 = vmatpush1.xpose.msra.mxu0 0.0
    %302 = vmatprep.subr.mxu0 0.0
    %303 = vmatpush1.xpose.msra.mxu0 0.0
    %304 = vmatprep.subr.mxu0 0.0
    %305 = vmatpush1.xpose.msra.mxu0 0.0
    %306 = vmatprep.subr.mxu0 0.0
    %307 = vmatpush1.xpose.msra.mxu0 0.0
    %308 = vmatprep.subr.mxu0 0.0
    %309 = vmatpush1.xpose.msra.mxu0 0.0
    %310 = vmatprep.subr.mxu0 0.0
    %311 = vmatpush1.xpose.msra.mxu0 0.0
    %312 = vmatprep.subr.mxu0 0.0
    %313 = vmatpush1.xpose.msra.mxu0 0.0
    %314 = vmatprep.mubr.f32.mxu0 0.0
    %315 = vmatmul.mubr.f32.gmra.mrb[0].mxu0 %v246
    %v316 = vpop.f32.mrb[0].mxu0
    %v317 = vadd.f32 %v206, %v316
    %v318 = vpop.f32.mrb[0].mxu0
    %319 = vdwg.mxu0
    %320 = vrot.lane.b32.xlu0 %v178, 120
    %v321 = vpop.permute.xlu0 %320
    %v322 = vsel %vm245, %v178, 0
    %v324 = vsel %vm245, %v321, 0
    %326 = vmatprep.subr.mxu0 0.0
    %327 = vmatpush1.xpose.msra.mxu0 %v324
    %328 = vmatprep.subr.mxu0 0.0
    %329 = vmatpush1.xpose.msra.mxu0 0.0
    %330 = vmatprep.subr.mxu0 0.0
    %331 = vmatpush1.xpose.msra.mxu0 0.0
    %332 = vmatprep.subr.mxu0 0.0
    %333 = vmatpush1.xpose.msra.mxu0 0.0
    %334 = vmatprep.subr.mxu0 0.0
    %335 = vmatpush1.xpose.msra.mxu0 0.0
    %336 = vmatprep.subr.mxu0 0.0
    %337 = vmatpush1.xpose.msra.mxu0 0.0
    %338 = vmatprep.subr.mxu0 0.0
    %339 = vmatpush1.xpose.msra.mxu0 0.0
    %340 = vmatprep.subr.mxu0 0.0
    %341 = vmatpush1.xpose.msra.mxu0 0.0
    %342 = vmatprep.subr.mxu0 0.0
    %343 = vmatpush1.xpose.msra.mxu0 0.0
    %344 = vmatprep.subr.mxu0 0.0
    %345 = vmatpush1.xpose.msra.mxu0 0.0
    %346 = vmatprep.subr.mxu0 0.0
    %347 = vmatpush1.xpose.msra.mxu0 0.0
    %348 = vmatprep.subr.mxu0 0.0
    %349 = vmatpush1.xpose.msra.mxu0 0.0
    %350 = vmatprep.subr.mxu0 0.0
    %351 = vmatpush1.xpose.msra.mxu0 0.0
    %352 = vmatprep.subr.mxu0 0.0
    %353 = vmatpush1.xpose.msra.mxu0 0.0
    %354 = vmatprep.subr.mxu0 0.0
    %355 = vmatpush1.xpose.msra.mxu0 0.0
    %356 = vmatprep.subr.mxu0 0.0
    %357 = vmatpush1.xpose.msra.mxu0 0.0
    %358 = vmatprep.subr.mxu0 0.0
    %359 = vmatpush1.xpose.msra.mxu0 0.0
    %360 = vmatprep.subr.mxu0 0.0
    %361 = vmatpush1.xpose.msra.mxu0 0.0
    %362 = vmatprep.subr.mxu0 0.0
    %363 = vmatpush1.xpose.msra.mxu0 0.0
    %364 = vmatprep.subr.mxu0 0.0
    %365 = vmatpush1.xpose.msra.mxu0 0.0
    %366 = vmatprep.subr.mxu0 0.0
    %367 = vmatpush1.xpose.msra.mxu0 0.0
    %368 = vmatprep.subr.mxu0 0.0
    %369 = vmatpush1.xpose.msra.mxu0 0.0
    %370 = vmatprep.subr.mxu0 0.0
    %371 = vmatpush1.xpose.msra.mxu0 0.0
    %372 = vmatprep.subr.mxu0 0.0
    %373 = vmatpush1.xpose.msra.mxu0 0.0
    %374 = vmatprep.subr.mxu0 0.0
    %375 = vmatpush1.xpose.msra.mxu0 0.0
    %376 = vmatprep.subr.mxu0 0.0
    %377 = vmatpush1.xpose.msra.mxu0 0.0
    %378 = vmatprep.subr.mxu0 0.0
    %379 = vmatpush1.xpose.msra.mxu0 0.0
    %380 = vmatprep.subr.mxu0 0.0
    %381 = vmatpush1.xpose.msra.mxu0 0.0
    %382 = vmatprep.subr.mxu0 0.0
    %383 = vmatpush1.xpose.msra.mxu0 0.0
    %384 = vmatprep.subr.mxu0 0.0
    %385 = vmatpush1.xpose.msra.mxu0 0.0
    %386 = vmatprep.subr.mxu0 0.0
    %387 = vmatpush1.xpose.msra.mxu0 0.0
    %388 = vmatprep.subr.mxu0 0.0
    %389 = vmatpush1.xpose.msra.mxu0 0.0
    %390 = vmatprep.mubr.f32.mxu0 0.0
    %391 = vmatmul.mubr.f32.gmra.mrb[0].mxu0 %v322
    %v392 = vpop.f32.mrb[0].mxu0
    %v393 = vadd.f32 %v210, %v392
    %v394 = vpop.f32.mrb[0].mxu0
    %395 = vdwg.mxu0
    %396 = vrot.lane.b32.xlu0 %v184, 120
    %v397 = vpop.permute.xlu0 %396
    %v398 = vsel %vm245, %v184, 0
    %v400 = vsel %vm245, %v397, 0
    %402 = vmatprep.subr.mxu0 0.0
    %403 = vmatpush1.xpose.msra.mxu0 %v400
    %404 = vmatprep.subr.mxu0 0.0
    %405 = vmatpush1.xpose.msra.mxu0 0.0
    %406 = vmatprep.subr.mxu0 0.0
    %407 = vmatpush1.xpose.msra.mxu0 0.0
    %408 = vmatprep.subr.mxu0 0.0
    %409 = vmatpush1.xpose.msra.mxu0 0.0
    %410 = vmatprep.subr.mxu0 0.0
    %411 = vmatpush1.xpose.msra.mxu0 0.0
    %412 = vmatprep.subr.mxu0 0.0
    %413 = vmatpush1.xpose.msra.mxu0 0.0
    %414 = vmatprep.subr.mxu0 0.0
    %415 = vmatpush1.xpose.msra.mxu0 0.0
    %416 = vmatprep.subr.mxu0 0.0
    %417 = vmatpush1.xpose.msra.mxu0 0.0
    %418 = vmatprep.subr.mxu0 0.0
    %419 = vmatpush1.xpose.msra.mxu0 0.0
    %420 = vmatprep.subr.mxu0 0.0
    %421 = vmatpush1.xpose.msra.mxu0 0.0
    %422 = vmatprep.subr.mxu0 0.0
    %423 = vmatpush1.xpose.msra.mxu0 0.0
    %424 = vmatprep.subr.mxu0 0.0
    %425 = vmatpush1.xpose.msra.mxu0 0.0
    %426 = vmatprep.subr.mxu0 0.0
    %427 = vmatpush1.xpose.msra.mxu0 0.0
    %428 = vmatprep.subr.mxu0 0.0
    %429 = vmatpush1.xpose.msra.mxu0 0.0
    %430 = vmatprep.subr.mxu0 0.0
    %431 = vmatpush1.xpose.msra.mxu0 0.0
    %432 = vmatprep.subr.mxu0 0.0
    %433 = vmatpush1.xpose.msra.mxu0 0.0
    %434 = vmatprep.subr.mxu0 0.0
    %435 = vmatpush1.xpose.msra.mxu0 0.0
    %436 = vmatprep.subr.mxu0 0.0
    %437 = vmatpush1.xpose.msra.mxu0 0.0
    %438 = vmatprep.subr.mxu0 0.0
    %439 = vmatpush1.xpose.msra.mxu0 0.0
    %440 = vmatprep.subr.mxu0 0.0
    %441 = vmatpush1.xpose.msra.mxu0 0.0
    %442 = vmatprep.subr.mxu0 0.0
    %443 = vmatpush1.xpose.msra.mxu0 0.0
    %444 = vmatprep.subr.mxu0 0.0
    %445 = vmatpush1.xpose.msra.mxu0 0.0
    %446 = vmatprep.subr.mxu0 0.0
    %447 = vmatpush1.xpose.msra.mxu0 0.0
    %448 = vmatprep.subr.mxu0 0.0
    %449 = vmatpush1.xpose.msra.mxu0 0.0
    %450 = vmatprep.subr.mxu0 0.0
    %451 = vmatpush1.xpose.msra.mxu0 0.0
    %452 = vmatprep.subr.mxu0 0.0
    %453 = vmatpush1.xpose.msra.mxu0 0.0
    %454 = vmatprep.subr.mxu0 0.0
    %455 = vmatpush1.xpose.msra.mxu0 0.0
    %456 = vmatprep.subr.mxu0 0.0
    %457 = vmatpush1.xpose.msra.mxu0 0.0
    %458 = vmatprep.subr.mxu0 0.0
    %459 = vmatpush1.xpose.msra.mxu0 0.0
    %460 = vmatprep.subr.mxu0 0.0
    %461 = vmatpush1.xpose.msra.mxu0 0.0
    %462 = vmatprep.subr.mxu0 0.0
    %463 = vmatpush1.xpose.msra.mxu0 0.0
    %464 = vmatprep.subr.mxu0 0.0
    %465 = vmatpush1.xpose.msra.mxu0 0.0
    %466 = vmatprep.mubr.f32.mxu0 0.0
    %467 = vmatmul.mubr.f32.gmra.mrb[0].mxu0 %v398
    %v468 = vpop.f32.mrb[0].mxu0
    %v469 = vadd.f32 %v214, %v468
    %v470 = vpop.f32.mrb[0].mxu0
    %471 = vdwg.mxu0
    %472 = vrot.lane.b32.xlu0 %v186, 120
    %v473 = vpop.permute.xlu0 %472
    %v474 = vsel %vm245, %v186, 0
    %v476 = vsel %vm245, %v473, 0
    %478 = vmatprep.subr.mxu0 0.0
    %479 = vmatpush1.xpose.msra.mxu0 %v476
    %480 = vmatprep.subr.mxu0 0.0
    %481 = vmatpush1.xpose.msra.mxu0 0.0
    %482 = vmatprep.subr.mxu0 0.0
    %483 = vmatpush1.xpose.msra.mxu0 0.0
    %484 = vmatprep.subr.mxu0 0.0
    %485 = vmatpush1.xpose.msra.mxu0 0.0
    %486 = vmatprep.subr.mxu0 0.0
    %487 = vmatpush1.xpose.msra.mxu0 0.0
    %488 = vmatprep.subr.mxu0 0.0
    %489 = vmatpush1.xpose.msra.mxu0 0.0
    %490 = vmatprep.subr.mxu0 0.0
    %491 = vmatpush1.xpose.msra.mxu0 0.0
    %492 = vmatprep.subr.mxu0 0.0
    %493 = vmatpush1.xpose.msra.mxu0 0.0
    %494 = vmatprep.subr.mxu0 0.0
    %495 = vmatpush1.xpose.msra.mxu0 0.0
    %496 = vmatprep.subr.mxu0 0.0
    %497 = vmatpush1.xpose.msra.mxu0 0.0
    %498 = vmatprep.subr.mxu0 0.0
    %499 = vmatpush1.xpose.msra.mxu0 0.0
    %500 = vmatprep.subr.mxu0 0.0
    %501 = vmatpush1.xpose.msra.mxu0 0.0
    %502 = vmatprep.subr.mxu0 0.0
    %503 = vmatpush1.xpose.msra.mxu0 0.0
    %504 = vmatprep.subr.mxu0 0.0
    %505 = vmatpush1.xpose.msra.mxu0 0.0
    %506 = vmatprep.subr.mxu0 0.0
    %507 = vmatpush1.xpose.msra.mxu0 0.0
    %508 = vmatprep.subr.mxu0 0.0
    %509 = vmatpush1.xpose.msra.mxu0 0.0
    %510 = vmatprep.subr.mxu0 0.0
    %511 = vmatpush1.xpose.msra.mxu0 0.0
    %512 = vmatprep.subr.mxu0 0.0
    %513 = vmatpush1.xpose.msra.mxu0 0.0
    %514 = vmatprep.subr.mxu0 0.0
    %515 = vmatpush1.xpose.msra.mxu0 0.0
    %516 = vmatprep.subr.mxu0 0.0
    %517 = vmatpush1.xpose.msra.mxu0 0.0
    %518 = vmatprep.subr.mxu0 0.0
    %519 = vmatpush1.xpose.msra.mxu0 0.0
    %520 = vmatprep.subr.mxu0 0.0
    %521 = vmatpush1.xpose.msra.mxu0 0.0
    %522 = vmatprep.subr.mxu0 0.0
    %523 = vmatpush1.xpose.msra.mxu0 0.0
    %524 = vmatprep.subr.mxu0 0.0
    %525 = vmatpush1.xpose.msra.mxu0 0.0
    %526 = vmatprep.subr.mxu0 0.0
    %527 = vmatpush1.xpose.msra.mxu0 0.0
    %528 = vmatprep.subr.mxu0 0.0
    %529 = vmatpush1.xpose.msra.mxu0 0.0
    %530 = vmatprep.subr.mxu0 0.0
    %531 = vmatpush1.xpose.msra.mxu0 0.0
    %532 = vmatprep.subr.mxu0 0.0
    %533 = vmatpush1.xpose.msra.mxu0 0.0
    %534 = vmatprep.subr.mxu0 0.0
    %535 = vmatpush1.xpose.msra.mxu0 0.0
    %536 = vmatprep.subr.mxu0 0.0
    %537 = vmatpush1.xpose.msra.mxu0 0.0
    %538 = vmatprep.subr.mxu0 0.0
    %539 = vmatpush1.xpose.msra.mxu0 0.0
    %540 = vmatprep.subr.mxu0 0.0
    %541 = vmatpush1.xpose.msra.mxu0 0.0
    %542 = vmatprep.mubr.f32.mxu0 0.0
    %543 = vmatmul.mubr.f32.gmra.mrb[0].mxu0 %v474
    %v544 = vpop.f32.mrb[0].mxu0
    %v545 = vadd.f32 %v218, %v544
    %v546 = vpop.f32.mrb[0].mxu0
    %547 = vdwg.mxu0
    %548 = vrot.lane.b32.xlu0 %v188, 120
    %v549 = vpop.permute.xlu0 %548
    %v550 = vsel %vm245, %v188, 0
    %v552 = vsel %vm245, %v549, 0
    %554 = vmatprep.subr.mxu0 0.0
    %555 = vmatpush1.xpose.msra.mxu0 %v552
    %556 = vmatprep.subr.mxu0 0.0
    %557 = vmatpush1.xpose.msra.mxu0 0.0
    %558 = vmatprep.subr.mxu0 0.0
    %559 = vmatpush1.xpose.msra.mxu0 0.0
    %560 = vmatprep.subr.mxu0 0.0
    %561 = vmatpush1.xpose.msra.mxu0 0.0
    %562 = vmatprep.subr.mxu0 0.0
    %563 = vmatpush1.xpose.msra.mxu0 0.0
    %564 = vmatprep.subr.mxu0 0.0
    %565 = vmatpush1.xpose.msra.mxu0 0.0
    %566 = vmatprep.subr.mxu0 0.0
    %567 = vmatpush1.xpose.msra.mxu0 0.0
    %568 = vmatprep.subr.mxu0 0.0
    %569 = vmatpush1.xpose.msra.mxu0 0.0
    %570 = vmatprep.subr.mxu0 0.0
    %571 = vmatpush1.xpose.msra.mxu0 0.0
    %572 = vmatprep.subr.mxu0 0.0
    %573 = vmatpush1.xpose.msra.mxu0 0.0
    %574 = vmatprep.subr.mxu0 0.0
    %575 = vmatpush1.xpose.msra.mxu0 0.0
    %576 = vmatprep.subr.mxu0 0.0
    %577 = vmatpush1.xpose.msra.mxu0 0.0
    %578 = vmatprep.subr.mxu0 0.0
    %579 = vmatpush1.xpose.msra.mxu0 0.0
    %580 = vmatprep.subr.mxu0 0.0
    %581 = vmatpush1.xpose.msra.mxu0 0.0
    %582 = vmatprep.subr.mxu0 0.0
    %583 = vmatpush1.xpose.msra.mxu0 0.0
    %584 = vmatprep.subr.mxu0 0.0
    %585 = vmatpush1.xpose.msra.mxu0 0.0
    %586 = vmatprep.subr.mxu0 0.0
    %587 = vmatpush1.xpose.msra.mxu0 0.0
    %588 = vmatprep.subr.mxu0 0.0
    %589 = vmatpush1.xpose.msra.mxu0 0.0
    %590 = vmatprep.subr.mxu0 0.0
    %591 = vmatpush1.xpose.msra.mxu0 0.0
    %592 = vmatprep.subr.mxu0 0.0
    %593 = vmatpush1.xpose.msra.mxu0 0.0
    %594 = vmatprep.subr.mxu0 0.0
    %595 = vmatpush1.xpose.msra.mxu0 0.0
    %596 = vmatprep.subr.mxu0 0.0
    %597 = vmatpush1.xpose.msra.mxu0 0.0
    %598 = vmatprep.subr.mxu0 0.0
    %599 = vmatpush1.xpose.msra.mxu0 0.0
    %600 = vmatprep.subr.mxu0 0.0
    %601 = vmatpush1.xpose.msra.mxu0 0.0
    %602 = vmatprep.subr.mxu0 0.0
    %603 = vmatpush1.xpose.msra.mxu0 0.0
    %604 = vmatprep.subr.mxu0 0.0
    %605 = vmatpush1.xpose.msra.mxu0 0.0
    %606 = vmatprep.subr.mxu0 0.0
    %607 = vmatpush1.xpose.msra.mxu0 0.0
    %608 = vmatprep.subr.mxu0 0.0
    %609 = vmatpush1.xpose.msra.mxu0 0.0
    %610 = vmatprep.subr.mxu0 0.0
    %611 = vmatpush1.xpose.msra.mxu0 0.0
    %612 = vmatprep.subr.mxu0 0.0
    %613 = vmatpush1.xpose.msra.mxu0 0.0
    %614 = vmatprep.subr.mxu0 0.0
    %615 = vmatpush1.xpose.msra.mxu0 0.0
    %616 = vmatprep.subr.mxu0 0.0
    %617 = vmatpush1.xpose.msra.mxu0 0.0
    %618 = vmatprep.mubr.f32.mxu0 0.0
    %619 = vmatmul.mubr.f32.gmra.mrb[0].mxu0 %v550
    %v620 = vpop.f32.mrb[0].mxu0
    %v621 = vadd.f32 %v222, %v620
    %v622 = vpop.f32.mrb[0].mxu0
    %623 = vdwg.mxu0
    %624 = vrot.lane.b32.xlu0 %v190, 120
    %v625 = vpop.permute.xlu0 %624
    %v626 = vsel %vm245, %v190, 0
    %v628 = vsel %vm245, %v625, 0
    %630 = vmatprep.subr.mxu0 0.0
    %631 = vmatpush1.xpose.msra.mxu0 %v628
    %632 = vmatprep.subr.mxu0 0.0
    %633 = vmatpush1.xpose.msra.mxu0 0.0
    %634 = vmatprep.subr.mxu0 0.0
    %635 = vmatpush1.xpose.msra.mxu0 0.0
    %636 = vmatprep.subr.mxu0 0.0
    %637 = vmatpush1.xpose.msra.mxu0 0.0
    %638 = vmatprep.subr.mxu0 0.0
    %639 = vmatpush1.xpose.msra.mxu0 0.0
    %640 = vmatprep.subr.mxu0 0.0
    %641 = vmatpush1.xpose.msra.mxu0 0.0
    %642 = vmatprep.subr.mxu0 0.0
    %643 = vmatpush1.xpose.msra.mxu0 0.0
    %644 = vmatprep.subr.mxu0 0.0
    %645 = vmatpush1.xpose.msra.mxu0 0.0
    %646 = vmatprep.subr.mxu0 0.0
    %647 = vmatpush1.xpose.msra.mxu0 0.0
    %648 = vmatprep.subr.mxu0 0.0
    %649 = vmatpush1.xpose.msra.mxu0 0.0
    %650 = vmatprep.subr.mxu0 0.0
    %651 = vmatpush1.xpose.msra.mxu0 0.0
    %652 = vmatprep.subr.mxu0 0.0
    %653 = vmatpush1.xpose.msra.mxu0 0.0
    %654 = vmatprep.subr.mxu0 0.0
    %655 = vmatpush1.xpose.msra.mxu0 0.0
    %656 = vmatprep.subr.mxu0 0.0
    %657 = vmatpush1.xpose.msra.mxu0 0.0
    %658 = vmatprep.subr.mxu0 0.0
    %659 = vmatpush1.xpose.msra.mxu0 0.0
    %660 = vmatprep.subr.mxu0 0.0
    %661 = vmatpush1.xpose.msra.mxu0 0.0
    %662 = vmatprep.subr.mxu0 0.0
    %663 = vmatpush1.xpose.msra.mxu0 0.0
    %664 = vmatprep.subr.mxu0 0.0
    %665 = vmatpush1.xpose.msra.mxu0 0.0
    %666 = vmatprep.subr.mxu0 0.0
    %667 = vmatpush1.xpose.msra.mxu0 0.0
    %668 = vmatprep.subr.mxu0 0.0
    %669 = vmatpush1.xpose.msra.mxu0 0.0
    %670 = vmatprep.subr.mxu0 0.0
    %671 = vmatpush1.xpose.msra.mxu0 0.0
    %672 = vmatprep.subr.mxu0 0.0
    %673 = vmatpush1.xpose.msra.mxu0 0.0
    %674 = vmatprep.subr.mxu0 0.0
    %675 = vmatpush1.xpose.msra.mxu0 0.0
    %676 = vmatprep.subr.mxu0 0.0
    %677 = vmatpush1.xpose.msra.mxu0 0.0
    %678 = vmatprep.subr.mxu0 0.0
    %679 = vmatpush1.xpose.msra.mxu0 0.0
    %680 = vmatprep.subr.mxu0 0.0
    %681 = vmatpush1.xpose.msra.mxu0 0.0
    %682 = vmatprep.subr.mxu0 0.0
    %683 = vmatpush1.xpose.msra.mxu0 0.0
    %684 = vmatprep.subr.mxu0 0.0
    %685 = vmatpush1.xpose.msra.mxu0 0.0
    %686 = vmatprep.subr.mxu0 0.0
    %687 = vmatpush1.xpose.msra.mxu0 0.0
    %688 = vmatprep.subr.mxu0 0.0
    %689 = vmatpush1.xpose.msra.mxu0 0.0
    %690 = vmatprep.subr.mxu0 0.0
    %691 = vmatpush1.xpose.msra.mxu0 0.0
    %692 = vmatprep.subr.mxu0 0.0
    %693 = vmatpush1.xpose.msra.mxu0 0.0
    %694 = vmatprep.mubr.f32.mxu0 0.0
    %695 = vmatmul.mubr.f32.gmra.mrb[0].mxu0 %v626
    %v696 = vpop.f32.mrb[0].mxu0
    %v697 = vadd.f32 %v226, %v696
    %v698 = vpop.f32.mrb[0].mxu0
    %699 = vdwg.mxu0
    %700 = vrot.lane.b32.xlu0 %v192, 120
    %v701 = vpop.permute.xlu0 %700
    %v702 = vsel %vm245, %v192, 0
    %v704 = vsel %vm245, %v701, 0
    %706 = vmatprep.subr.mxu0 0.0
    %707 = vmatpush1.xpose.msra.mxu0 %v704
    %708 = vmatprep.subr.mxu0 0.0
    %709 = vmatpush1.xpose.msra.mxu0 0.0
    %710 = vmatprep.subr.mxu0 0.0
    %711 = vmatpush1.xpose.msra.mxu0 0.0
    %712 = vmatprep.subr.mxu0 0.0
    %713 = vmatpush1.xpose.msra.mxu0 0.0
    %714 = vmatprep.subr.mxu0 0.0
    %715 = vmatpush1.xpose.msra.mxu0 0.0
    %716 = vmatprep.subr.mxu0 0.0
    %717 = vmatpush1.xpose.msra.mxu0 0.0
    %718 = vmatprep.subr.mxu0 0.0
    %719 = vmatpush1.xpose.msra.mxu0 0.0
    %720 = vmatprep.subr.mxu0 0.0
    %721 = vmatpush1.xpose.msra.mxu0 0.0
    %722 = vmatprep.subr.mxu0 0.0
    %723 = vmatpush1.xpose.msra.mxu0 0.0
    %724 = vmatprep.subr.mxu0 0.0
    %725 = vmatpush1.xpose.msra.mxu0 0.0
    %726 = vmatprep.subr.mxu0 0.0
    %727 = vmatpush1.xpose.msra.mxu0 0.0
    %728 = vmatprep.subr.mxu0 0.0
    %729 = vmatpush1.xpose.msra.mxu0 0.0
    %730 = vmatprep.subr.mxu0 0.0
    %731 = vmatpush1.xpose.msra.mxu0 0.0
    %732 = vmatprep.subr.mxu0 0.0
    %733 = vmatpush1.xpose.msra.mxu0 0.0
    %734 = vmatprep.subr.mxu0 0.0
    %735 = vmatpush1.xpose.msra.mxu0 0.0
    %736 = vmatprep.subr.mxu0 0.0
    %737 = vmatpush1.xpose.msra.mxu0 0.0
    %738 = vmatprep.subr.mxu0 0.0
    %739 = vmatpush1.xpose.msra.mxu0 0.0
    %740 = vmatprep.subr.mxu0 0.0
    %741 = vmatpush1.xpose.msra.mxu0 0.0
    %742 = vmatprep.subr.mxu0 0.0
    %743 = vmatpush1.xpose.msra.mxu0 0.0
    %744 = vmatprep.subr.mxu0 0.0
    %745 = vmatpush1.xpose.msra.mxu0 0.0
    %746 = vmatprep.subr.mxu0 0.0
    %747 = vmatpush1.xpose.msra.mxu0 0.0
    %748 = vmatprep.subr.mxu0 0.0
    %749 = vmatpush1.xpose.msra.mxu0 0.0
    %750 = vmatprep.subr.mxu0 0.0
    %751 = vmatpush1.xpose.msra.mxu0 0.0
    %752 = vmatprep.subr.mxu0 0.0
    %753 = vmatpush1.xpose.msra.mxu0 0.0
    %754 = vmatprep.subr.mxu0 0.0
    %755 = vmatpush1.xpose.msra.mxu0 0.0
    %756 = vmatprep.subr.mxu0 0.0
    %757 = vmatpush1.xpose.msra.mxu0 0.0
    %758 = vmatprep.subr.mxu0 0.0
    %759 = vmatpush1.xpose.msra.mxu0 0.0
    %760 = vmatprep.subr.mxu0 0.0
    %761 = vmatpush1.xpose.msra.mxu0 0.0
    %762 = vmatprep.subr.mxu0 0.0
    %763 = vmatpush1.xpose.msra.mxu0 0.0
    %764 = vmatprep.subr.mxu0 0.0
    %765 = vmatpush1.xpose.msra.mxu0 0.0
    %766 = vmatprep.subr.mxu0 0.0
    %767 = vmatpush1.xpose.msra.mxu0 0.0
    %768 = vmatprep.subr.mxu0 0.0
    %769 = vmatpush1.xpose.msra.mxu0 0.0
    %770 = vmatprep.mubr.f32.mxu0 0.0
    %771 = vmatmul.mubr.f32.gmra.mrb[0].mxu0 %v702
    %v772 = vpop.f32.mrb[0].mxu0
    %v773 = vadd.f32 %v230, %v772
    %v774 = vpop.f32.mrb[0].mxu0
    %775 = vdwg.mxu0
    %776 = vrot.lane.b32.xlu0 %v194, 120
    %v777 = vpop.permute.xlu0 %776
    %v778 = vsel %vm245, %v194, 0
    %v780 = vsel %vm245, %v777, 0
    %782 = vmatprep.subr.mxu0 0.0
    %783 = vmatpush1.xpose.msra.mxu0 %v780
    %784 = vmatprep.subr.mxu0 0.0
    %785 = vmatpush1.xpose.msra.mxu0 0.0
    %786 = vmatprep.subr.mxu0 0.0
    %787 = vmatpush1.xpose.msra.mxu0 0.0
    %788 = vmatprep.subr.mxu0 0.0
    %789 = vmatpush1.xpose.msra.mxu0 0.0
    %790 = vmatprep.subr.mxu0 0.0
    %791 = vmatpush1.xpose.msra.mxu0 0.0
    %792 = vmatprep.subr.mxu0 0.0
    %793 = vmatpush1.xpose.msra.mxu0 0.0
    %794 = vmatprep.subr.mxu0 0.0
    %795 = vmatpush1.xpose.msra.mxu0 0.0
    %796 = vmatprep.subr.mxu0 0.0
    %797 = vmatpush1.xpose.msra.mxu0 0.0
    %798 = vmatprep.subr.mxu0 0.0
    %799 = vmatpush1.xpose.msra.mxu0 0.0
    %800 = vmatprep.subr.mxu0 0.0
    %801 = vmatpush1.xpose.msra.mxu0 0.0
    %802 = vmatprep.subr.mxu0 0.0
    %803 = vmatpush1.xpose.msra.mxu0 0.0
    %804 = vmatprep.subr.mxu0 0.0
    %805 = vmatpush1.xpose.msra.mxu0 0.0
    %806 = vmatprep.subr.mxu0 0.0
    %807 = vmatpush1.xpose.msra.mxu0 0.0
    %808 = vmatprep.subr.mxu0 0.0
    %809 = vmatpush1.xpose.msra.mxu0 0.0
    %810 = vmatprep.subr.mxu0 0.0
    %811 = vmatpush1.xpose.msra.mxu0 0.0
    %812 = vmatprep.subr.mxu0 0.0
    %813 = vmatpush1.xpose.msra.mxu0 0.0
    %814 = vmatprep.subr.mxu0 0.0
    %815 = vmatpush1.xpose.msra.mxu0 0.0
    %816 = vmatprep.subr.mxu0 0.0
    %817 = vmatpush1.xpose.msra.mxu0 0.0
    %818 = vmatprep.subr.mxu0 0.0
    %819 = vmatpush1.xpose.msra.mxu0 0.0
    %820 = vmatprep.subr.mxu0 0.0
    %821 = vmatpush1.xpose.msra.mxu0 0.0
    %822 = vmatprep.subr.mxu0 0.0
    %823 = vmatpush1.xpose.msra.mxu0 0.0
    %824 = vmatprep.subr.mxu0 0.0
    %825 = vmatpush1.xpose.msra.mxu0 0.0
    %826 = vmatprep.subr.mxu0 0.0
    %827 = vmatpush1.xpose.msra.mxu0 0.0
    %828 = vmatprep.subr.mxu0 0.0
    %829 = vmatpush1.xpose.msra.mxu0 0.0
    %830 = vmatprep.subr.mxu0 0.0
    %831 = vmatpush1.xpose.msra.mxu0 0.0
    %832 = vmatprep.subr.mxu0 0.0
    %833 = vmatpush1.xpose.msra.mxu0 0.0
    %834 = vmatprep.subr.mxu0 0.0
    %835 = vmatpush1.xpose.msra.mxu0 0.0
    %836 = vmatprep.subr.mxu0 0.0
    %837 = vmatpush1.xpose.msra.mxu0 0.0
    %838 = vmatprep.subr.mxu0 0.0
    %839 = vmatpush1.xpose.msra.mxu0 0.0
    %840 = vmatprep.subr.mxu0 0.0
    %841 = vmatpush1.xpose.msra.mxu0 0.0
    %842 = vmatprep.subr.mxu0 0.0
    %843 = vmatpush1.xpose.msra.mxu0 0.0
    %844 = vmatprep.subr.mxu0 0.0
    %845 = vmatpush1.xpose.msra.mxu0 0.0
    %846 = vmatprep.mubr.f32.mxu0 0.0
    %847 = vmatmul.mubr.f32.gmra.mrb[0].mxu0 %v778
    %v848 = vpop.f32.mrb[0].mxu0
    %v849 = vadd.f32 %v234, %v848
    %v850 = vpop.f32.mrb[0].mxu0
    %851 = vdwg.mxu0
    %v852 = vsel %vm245, %v317, -inf
    %853 = vmax.xlane.f32.xlu0 %v852
    %v854 = vpop.xlane.xlu0 %853
    %v855 = vsel %vm245, %v393, -inf
    %856 = vmax.xlane.f32.xlu0 %v855
    %v857 = vpop.xlane.xlu0 %856
    %v858 = vsel %vm245, %v469, -inf
    %859 = vmax.xlane.f32.xlu0 %v858
    %v860 = vpop.xlane.xlu0 %859
    %v861 = vsel %vm245, %v545, -inf
    %862 = vmax.xlane.f32.xlu0 %v861
    %v863 = vpop.xlane.xlu0 %862
    %v864 = vsel %vm245, %v621, -inf
    %865 = vmax.xlane.f32.xlu0 %v864
    %v866 = vpop.xlane.xlu0 %865
    %v867 = vsel %vm245, %v697, -inf
    %868 = vmax.xlane.f32.xlu0 %v867
    %v869 = vpop.xlane.xlu0 %868
    %v870 = vsel %vm245, %v773, -inf
    %871 = vmax.xlane.f32.xlu0 %v870
    %v872 = vpop.xlane.xlu0 %871
    %v873 = vsel %vm245, %v849, -inf
    %874 = vmax.xlane.f32.xlu0 %v873
    %v875 = vpop.xlane.xlu0 %874
    %v876 = vsub.f32 %v317, %v854
    %v877 = vsub.f32 %v393, %v857
    %v878 = vsub.f32 %v469, %v860
    %v879 = vsub.f32 %v545, %v863
    %v880 = vsub.f32 %v621, %v866
    %v881 = vsub.f32 %v697, %v869
    %v882 = vsub.f32 %v773, %v872
    %v883 = vsub.f32 %v849, %v875
    %v884 = vmul.f32 %v876, 1.442695
    %v885 = vpow.pop %v884
    %v886 = vmul.f32 %v877, 1.442695
    %v887 = vpow.pop %v886
    %v888 = vmul.f32 %v878, 1.442695
    %v889 = vpow.pop %v888
    %v890 = vmul.f32 %v879, 1.442695
    %v891 = vpow.pop %v890
    %v892 = vmul.f32 %v880, 1.442695
    %v893 = vpow.pop %v892
    %v894 = vmul.f32 %v881, 1.442695
    %v895 = vpow.pop %v894
    %v896 = vmul.f32 %v882, 1.442695
    %v897 = vpow.pop %v896
    %v898 = vmul.f32 %v883, 1.442695
    %v899 = vpow.pop %v898
    %v900 = vsel %vm245, %v885, 0.0
    %901 = vadd.xlane.f32.xlu0 %v900
    %v902 = vpop.xlane.xlu0 %901
    %v903 = vsel %vm245, %v887, 0.0
    %904 = vadd.xlane.f32.xlu0 %v903
    %v905 = vpop.xlane.xlu0 %904
    %v906 = vsel %vm245, %v889, 0.0
    %907 = vadd.xlane.f32.xlu0 %v906
    %v908 = vpop.xlane.xlu0 %907
    %v909 = vsel %vm245, %v891, 0.0
    %910 = vadd.xlane.f32.xlu0 %v909
    %v911 = vpop.xlane.xlu0 %910
    %v912 = vsel %vm245, %v893, 0.0
    %913 = vadd.xlane.f32.xlu0 %v912
    %v914 = vpop.xlane.xlu0 %913
    %v915 = vsel %vm245, %v895, 0.0
    %916 = vadd.xlane.f32.xlu0 %v915
    %v917 = vpop.xlane.xlu0 %916
    %v918 = vsel %vm245, %v897, 0.0
    %919 = vadd.xlane.f32.xlu0 %v918
    %v920 = vpop.xlane.xlu0 %919
    %v921 = vsel %vm245, %v899, 0.0
    %922 = vadd.xlane.f32.xlu0 %v921
    %v923 = vpop.xlane.xlu0 %922
    %v924 = vrcp.pop %v902
    %v925 = vrcp.pop %v905
    %v926 = vrcp.pop %v908
    %v927 = vrcp.pop %v911
    %v928 = vrcp.pop %v914
    %v929 = vrcp.pop %v917
    %v930 = vrcp.pop %v920
    %v931 = vrcp.pop %v923
    %v932 = vmul.f32 %v885, %v924
    %v933 = vmul.f32 %v887, %v925
    %v934 = vmul.f32 %v889, %v926
    %v935 = vmul.f32 %v891, %v927
    %v936 = vmul.f32 %v893, %v928
    %v937 = vmul.f32 %v895, %v929
    %v938 = vmul.f32 %v897, %v930
    %v939 = vmul.f32 %v899, %v931
    %940 = vrot.lane.b32.xlu0 %v173, 112
    %v941 = vpop.permute.xlu0 %940
    %v944 = vsel %vm245, %v932, 0
    %946 = vmatprep.subr.mxu0 0.0
    %947 = vmatpush1.msra.mxu0 %v941
    %948 = vmatprep.subr.mxu0 0.0
    %949 = vmatpush1.msra.mxu0 0.0
    %950 = vmatprep.subr.mxu0 0.0
    %951 = vmatpush1.msra.mxu0 0.0
    %952 = vmatprep.subr.mxu0 0.0
    %953 = vmatpush1.msra.mxu0 0.0
    %954 = vmatprep.subr.mxu0 0.0
    %955 = vmatpush1.msra.mxu0 0.0
    %956 = vmatprep.subr.mxu0 0.0
    %957 = vmatpush1.msra.mxu0 0.0
    %958 = vmatprep.subr.mxu0 0.0
    %959 = vmatpush1.msra.mxu0 0.0
    %960 = vmatprep.subr.mxu0 0.0
    %961 = vmatpush1.msra.mxu0 0.0
    %962 = vmatprep.subr.mxu0 0.0
    %963 = vmatpush1.msra.mxu0 0.0
    %964 = vmatprep.subr.mxu0 0.0
    %965 = vmatpush1.msra.mxu0 0.0
    %966 = vmatprep.subr.mxu0 0.0
    %967 = vmatpush1.msra.mxu0 0.0
    %968 = vmatprep.subr.mxu0 0.0
    %969 = vmatpush1.msra.mxu0 0.0
    %970 = vmatprep.subr.mxu0 0.0
    %971 = vmatpush1.msra.mxu0 0.0
    %972 = vmatprep.subr.mxu0 0.0
    %973 = vmatpush1.msra.mxu0 0.0
    %974 = vmatprep.subr.mxu0 0.0
    %975 = vmatpush1.msra.mxu0 0.0
    %976 = vmatprep.subr.mxu0 0.0
    %977 = vmatpush1.msra.mxu0 0.0
    %978 = vmatprep.subr.mxu0 0.0
    %979 = vmatpush1.msra.mxu0 0.0
    %980 = vmatprep.subr.mxu0 0.0
    %981 = vmatpush1.msra.mxu0 0.0
    %982 = vmatprep.subr.mxu0 0.0
    %983 = vmatpush1.msra.mxu0 0.0
    %984 = vmatprep.subr.mxu0 0.0
    %985 = vmatpush1.msra.mxu0 0.0
    %986 = vmatprep.subr.mxu0 0.0
    %987 = vmatpush1.msra.mxu0 0.0
    %988 = vmatprep.subr.mxu0 0.0
    %989 = vmatpush1.msra.mxu0 0.0
    %990 = vmatprep.subr.mxu0 0.0
    %991 = vmatpush1.msra.mxu0 0.0
    %992 = vmatprep.subr.mxu0 0.0
    %993 = vmatpush1.msra.mxu0 0.0
    %994 = vmatprep.subr.mxu0 0.0
    %995 = vmatpush1.msra.mxu0 0.0
    %996 = vmatprep.subr.mxu0 0.0
    %997 = vmatpush1.msra.mxu0 0.0
    %998 = vmatprep.subr.mxu0 0.0
    %999 = vmatpush1.msra.mxu0 0.0
    %1000 = vmatprep.subr.mxu0 0.0
    %1001 = vmatpush1.msra.mxu0 0.0
    %1002 = vmatprep.subr.mxu0 0.0
    %1003 = vmatpush1.msra.mxu0 0.0
    %1004 = vmatprep.subr.mxu0 0.0
    %1005 = vmatpush1.msra.mxu0 0.0
    %1006 = vmatprep.subr.mxu0 0.0
    %1007 = vmatpush1.msra.mxu0 0.0
    %1008 = vmatprep.subr.mxu0 0.0
    %1009 = vmatpush1.msra.mxu0 0.0
    %1010 = vmatprep.mubr.f32.mxu0 0.0
    %1011 = vmatmul.mubr.f32.gmra.mrb[0].mxu0 %v944
    %v1012 = vpop.f32.mrb[0].mxu0
    %v1013 = vadd.f32 0.0, %v1012
    %v1014 = vpop.f32.mrb[0].mxu0
    %1015 = vdwg.mxu0
    %1016 = vrot.lane.b32.xlu0 %v178, 112
    %v1017 = vpop.permute.xlu0 %1016
    %v1020 = vsel %vm245, %v933, 0
    %1022 = vmatprep.subr.mxu0 0.0
    %1023 = vmatpush1.msra.mxu0 %v1017
    %1024 = vmatprep.subr.mxu0 0.0
    %1025 = vmatpush1.msra.mxu0 0.0
    %1026 = vmatprep.subr.mxu0 0.0
    %1027 = vmatpush1.msra.mxu0 0.0
    %1028 = vmatprep.subr.mxu0 0.0
    %1029 = vmatpush1.msra.mxu0 0.0
    %1030 = vmatprep.subr.mxu0 0.0
    %1031 = vmatpush1.msra.mxu0 0.0
    %1032 = vmatprep.subr.mxu0 0.0
    %1033 = vmatpush1.msra.mxu0 0.0
    %1034 = vmatprep.subr.mxu0 0.0
    %1035 = vmatpush1.msra.mxu0 0.0
    %1036 = vmatprep.subr.mxu0 0.0
    %1037 = vmatpush1.msra.mxu0 0.0
    %1038 = vmatprep.subr.mxu0 0.0
    %1039 = vmatpush1.msra.mxu0 0.0
    %1040 = vmatprep.subr.mxu0 0.0
    %1041 = vmatpush1.msra.mxu0 0.0
    %1042 = vmatprep.subr.mxu0 0.0
    %1043 = vmatpush1.msra.mxu0 0.0
    %1044 = vmatprep.subr.mxu0 0.0
    %1045 = vmatpush1.msra.mxu0 0.0
    %1046 = vmatprep.subr.mxu0 0.0
    %1047 = vmatpush1.msra.mxu0 0.0
    %1048 = vmatprep.subr.mxu0 0.0
    %1049 = vmatpush1.msra.mxu0 0.0
    %1050 = vmatprep.subr.mxu0 0.0
    %1051 = vmatpush1.msra.mxu0 0.0
    %1052 = vmatprep.subr.mxu0 0.0
    %1053 = vmatpush1.msra.mxu0 0.0
    %1054 = vmatprep.subr.mxu0 0.0
    %1055 = vmatpush1.msra.mxu0 0.0
    %1056 = vmatprep.subr.mxu0 0.0
    %1057 = vmatpush1.msra.mxu0 0.0
    %1058 = vmatprep.subr.mxu0 0.0
    %1059 = vmatpush1.msra.mxu0 0.0
    %1060 = vmatprep.subr.mxu0 0.0
    %1061 = vmatpush1.msra.mxu0 0.0
    %1062 = vmatprep.subr.mxu0 0.0
    %1063 = vmatpush1.msra.mxu0 0.0
    %1064 = vmatprep.subr.mxu0 0.0
    %1065 = vmatpush1.msra.mxu0 0.0
    %1066 = vmatprep.subr.mxu0 0.0
    %1067 = vmatpush1.msra.mxu0 0.0
    %1068 = vmatprep.subr.mxu0 0.0
    %1069 = vmatpush1.msra.mxu0 0.0
    %1070 = vmatprep.subr.mxu0 0.0
    %1071 = vmatpush1.msra.mxu0 0.0
    %1072 = vmatprep.subr.mxu0 0.0
    %1073 = vmatpush1.msra.mxu0 0.0
    %1074 = vmatprep.subr.mxu0 0.0
    %1075 = vmatpush1.msra.mxu0 0.0
    %1076 = vmatprep.subr.mxu0 0.0
    %1077 = vmatpush1.msra.mxu0 0.0
    %1078 = vmatprep.subr.mxu0 0.0
    %1079 = vmatpush1.msra.mxu0 0.0
    %1080 = vmatprep.subr.mxu0 0.0
    %1081 = vmatpush1.msra.mxu0 0.0
    %1082 = vmatprep.subr.mxu0 0.0
    %1083 = vmatpush1.msra.mxu0 0.0
    %1084 = vmatprep.subr.mxu0 0.0
    %1085 = vmatpush1.msra.mxu0 0.0
    %1086 = vmatprep.mubr.f32.mxu0 0.0
    %1087 = vmatmul.mubr.f32.gmra.mrb[0].mxu0 %v1020
    %v1088 = vpop.f32.mrb[0].mxu0
    %v1089 = vadd.f32 0.0, %v1088
    %v1090 = vpop.f32.mrb[0].mxu0
    %1091 = vdwg.mxu0
    %1092 = vrot.lane.b32.xlu0 %v184, 112
    %v1093 = vpop.permute.xlu0 %1092
    %v1096 = vsel %vm245, %v934, 0
    %1098 = vmatprep.subr.mxu0 0.0
    %1099 = vmatpush1.msra.mxu0 %v1093
    %1100 = vmatprep.subr.mxu0 0.0
    %1101 = vmatpush1.msra.mxu0 0.0
    %1102 = vmatprep.subr.mxu0 0.0
    %1103 = vmatpush1.msra.mxu0 0.0
    %1104 = vmatprep.subr.mxu0 0.0
    %1105 = vmatpush1.msra.mxu0 0.0
    %1106 = vmatprep.subr.mxu0 0.0
    %1107 = vmatpush1.msra.mxu0 0.0
    %1108 = vmatprep.subr.mxu0 0.0
    %1109 = vmatpush1.msra.mxu0 0.0
    %1110 = vmatprep.subr.mxu0 0.0
    %1111 = vmatpush1.msra.mxu0 0.0
    %1112 = vmatprep.subr.mxu0 0.0
    %1113 = vmatpush1.msra.mxu0 0.0
    %1114 = vmatprep.subr.mxu0 0.0
    %1115 = vmatpush1.msra.mxu0 0.0
    %1116 = vmatprep.subr.mxu0 0.0
    %1117 = vmatpush1.msra.mxu0 0.0
    %1118 = vmatprep.subr.mxu0 0.0
    %1119 = vmatpush1.msra.mxu0 0.0
    %1120 = vmatprep.subr.mxu0 0.0
    %1121 = vmatpush1.msra.mxu0 0.0
    %1122 = vmatprep.subr.mxu0 0.0
    %1123 = vmatpush1.msra.mxu0 0.0
    %1124 = vmatprep.subr.mxu0 0.0
    %1125 = vmatpush1.msra.mxu0 0.0
    %1126 = vmatprep.subr.mxu0 0.0
    %1127 = vmatpush1.msra.mxu0 0.0
    %1128 = vmatprep.subr.mxu0 0.0
    %1129 = vmatpush1.msra.mxu0 0.0
    %1130 = vmatprep.subr.mxu0 0.0
    %1131 = vmatpush1.msra.mxu0 0.0
    %1132 = vmatprep.subr.mxu0 0.0
    %1133 = vmatpush1.msra.mxu0 0.0
    %1134 = vmatprep.subr.mxu0 0.0
    %1135 = vmatpush1.msra.mxu0 0.0
    %1136 = vmatprep.subr.mxu0 0.0
    %1137 = vmatpush1.msra.mxu0 0.0
    %1138 = vmatprep.subr.mxu0 0.0
    %1139 = vmatpush1.msra.mxu0 0.0
    %1140 = vmatprep.subr.mxu0 0.0
    %1141 = vmatpush1.msra.mxu0 0.0
    %1142 = vmatprep.subr.mxu0 0.0
    %1143 = vmatpush1.msra.mxu0 0.0
    %1144 = vmatprep.subr.mxu0 0.0
    %1145 = vmatpush1.msra.mxu0 0.0
    %1146 = vmatprep.subr.mxu0 0.0
    %1147 = vmatpush1.msra.mxu0 0.0
    %1148 = vmatprep.subr.mxu0 0.0
    %1149 = vmatpush1.msra.mxu0 0.0
    %1150 = vmatprep.subr.mxu0 0.0
    %1151 = vmatpush1.msra.mxu0 0.0
    %1152 = vmatprep.subr.mxu0 0.0
    %1153 = vmatpush1.msra.mxu0 0.0
    %1154 = vmatprep.subr.mxu0 0.0
    %1155 = vmatpush1.msra.mxu0 0.0
    %1156 = vmatprep.subr.mxu0 0.0
    %1157 = vmatpush1.msra.mxu0 0.0
    %1158 = vmatprep.subr.mxu0 0.0
    %1159 = vmatpush1.msra.mxu0 0.0
    %1160 = vmatprep.subr.mxu0 0.0
    %1161 = vmatpush1.msra.mxu0 0.0
    %1162 = vmatprep.mubr.f32.mxu0 0.0
    %1163 = vmatmul.mubr.f32.gmra.mrb[0].mxu0 %v1096
    %v1164 = vpop.f32.mrb[0].mxu0
    %v1165 = vadd.f32 0.0, %v1164
    %v1166 = vpop.f32.mrb[0].mxu0
    %1167 = vdwg.mxu0
    %1168 = vrot.lane.b32.xlu0 %v186, 112
    %v1169 = vpop.permute.xlu0 %1168
    %v1172 = vsel %vm245, %v935, 0
    %1174 = vmatprep.subr.mxu0 0.0
    %1175 = vmatpush1.msra.mxu0 %v1169
    %1176 = vmatprep.subr.mxu0 0.0
    %1177 = vmatpush1.msra.mxu0 0.0
    %1178 = vmatprep.subr.mxu0 0.0
    %1179 = vmatpush1.msra.mxu0 0.0
    %1180 = vmatprep.subr.mxu0 0.0
    %1181 = vmatpush1.msra.mxu0 0.0
    %1182 = vmatprep.subr.mxu0 0.0
    %1183 = vmatpush1.msra.mxu0 0.0
    %1184 = vmatprep.subr.mxu0 0.0
    %1185 = vmatpush1.msra.mxu0 0.0
    %1186 = vmatprep.subr.mxu0 0.0
    %1187 = vmatpush1.msra.mxu0 0.0
    %1188 = vmatprep.subr.mxu0 0.0
    %1189 = vmatpush1.msra.mxu0 0.0
    %1190 = vmatprep.subr.mxu0 0.0
    %1191 = vmatpush1.msra.mxu0 0.0
    %1192 = vmatprep.subr.mxu0 0.0
    %1193 = vmatpush1.msra.mxu0 0.0
    %1194 = vmatprep.subr.mxu0 0.0
    %1195 = vmatpush1.msra.mxu0 0.0
    %1196 = vmatprep.subr.mxu0 0.0
    %1197 = vmatpush1.msra.mxu0 0.0
    %1198 = vmatprep.subr.mxu0 0.0
    %1199 = vmatpush1.msra.mxu0 0.0
    %1200 = vmatprep.subr.mxu0 0.0
    %1201 = vmatpush1.msra.mxu0 0.0
    %1202 = vmatprep.subr.mxu0 0.0
    %1203 = vmatpush1.msra.mxu0 0.0
    %1204 = vmatprep.subr.mxu0 0.0
    %1205 = vmatpush1.msra.mxu0 0.0
    %1206 = vmatprep.subr.mxu0 0.0
    %1207 = vmatpush1.msra.mxu0 0.0
    %1208 = vmatprep.subr.mxu0 0.0
    %1209 = vmatpush1.msra.mxu0 0.0
    %1210 = vmatprep.subr.mxu0 0.0
    %1211 = vmatpush1.msra.mxu0 0.0
    %1212 = vmatprep.subr.mxu0 0.0
    %1213 = vmatpush1.msra.mxu0 0.0
    %1214 = vmatprep.subr.mxu0 0.0
    %1215 = vmatpush1.msra.mxu0 0.0
    %1216 = vmatprep.subr.mxu0 0.0
    %1217 = vmatpush1.msra.mxu0 0.0
    %1218 = vmatprep.subr.mxu0 0.0
    %1219 = vmatpush1.msra.mxu0 0.0
    %1220 = vmatprep.subr.mxu0 0.0
    %1221 = vmatpush1.msra.mxu0 0.0
    %1222 = vmatprep.subr.mxu0 0.0
    %1223 = vmatpush1.msra.mxu0 0.0
    %1224 = vmatprep.subr.mxu0 0.0
    %1225 = vmatpush1.msra.mxu0 0.0
    %1226 = vmatprep.subr.mxu0 0.0
    %1227 = vmatpush1.msra.mxu0 0.0
    %1228 = vmatprep.subr.mxu0 0.0
    %1229 = vmatpush1.msra.mxu0 0.0
    %1230 = vmatprep.subr.mxu0 0.0
    %1231 = vmatpush1.msra.mxu0 0.0
    %1232 = vmatprep.subr.mxu0 0.0
    %1233 = vmatpush1.msra.mxu0 0.0
    %1234 = vmatprep.subr.mxu0 0.0
    %1235 = vmatpush1.msra.mxu0 0.0
    %1236 = vmatprep.subr.mxu0 0.0
    %1237 = vmatpush1.msra.mxu0 0.0
    %1238 = vmatprep.mubr.f32.mxu0 0.0
    %1239 = vmatmul.mubr.f32.gmra.mrb[0].mxu0 %v1172
    %v1240 = vpop.f32.mrb[0].mxu0
    %v1241 = vadd.f32 0.0, %v1240
    %v1242 = vpop.f32.mrb[0].mxu0
    %1243 = vdwg.mxu0
    %1244 = vrot.lane.b32.xlu0 %v188, 112
    %v1245 = vpop.permute.xlu0 %1244
    %v1248 = vsel %vm245, %v936, 0
    %1250 = vmatprep.subr.mxu0 0.0
    %1251 = vmatpush1.msra.mxu0 %v1245
    %1252 = vmatprep.subr.mxu0 0.0
    %1253 = vmatpush1.msra.mxu0 0.0
    %1254 = vmatprep.subr.mxu0 0.0
    %1255 = vmatpush1.msra.mxu0 0.0
    %1256 = vmatprep.subr.mxu0 0.0
    %1257 = vmatpush1.msra.mxu0 0.0
    %1258 = vmatprep.subr.mxu0 0.0
    %1259 = vmatpush1.msra.mxu0 0.0
    %1260 = vmatprep.subr.mxu0 0.0
    %1261 = vmatpush1.msra.mxu0 0.0
    %1262 = vmatprep.subr.mxu0 0.0
    %1263 = vmatpush1.msra.mxu0 0.0
    %1264 = vmatprep.subr.mxu0 0.0
    %1265 = vmatpush1.msra.mxu0 0.0
    %1266 = vmatprep.subr.mxu0 0.0
    %1267 = vmatpush1.msra.mxu0 0.0
    %1268 = vmatprep.subr.mxu0 0.0
    %1269 = vmatpush1.msra.mxu0 0.0
    %1270 = vmatprep.subr.mxu0 0.0
    %1271 = vmatpush1.msra.mxu0 0.0
    %1272 = vmatprep.subr.mxu0 0.0
    %1273 = vmatpush1.msra.mxu0 0.0
    %1274 = vmatprep.subr.mxu0 0.0
    %1275 = vmatpush1.msra.mxu0 0.0
    %1276 = vmatprep.subr.mxu0 0.0
    %1277 = vmatpush1.msra.mxu0 0.0
    %1278 = vmatprep.subr.mxu0 0.0
    %1279 = vmatpush1.msra.mxu0 0.0
    %1280 = vmatprep.subr.mxu0 0.0
    %1281 = vmatpush1.msra.mxu0 0.0
    %1282 = vmatprep.subr.mxu0 0.0
    %1283 = vmatpush1.msra.mxu0 0.0
    %1284 = vmatprep.subr.mxu0 0.0
    %1285 = vmatpush1.msra.mxu0 0.0
    %1286 = vmatprep.subr.mxu0 0.0
    %1287 = vmatpush1.msra.mxu0 0.0
    %1288 = vmatprep.subr.mxu0 0.0
    %1289 = vmatpush1.msra.mxu0 0.0
    %1290 = vmatprep.subr.mxu0 0.0
    %1291 = vmatpush1.msra.mxu0 0.0
    %1292 = vmatprep.subr.mxu0 0.0
    %1293 = vmatpush1.msra.mxu0 0.0
    %1294 = vmatprep.subr.mxu0 0.0
    %1295 = vmatpush1.msra.mxu0 0.0
    %1296 = vmatprep.subr.mxu0 0.0
    %1297 = vmatpush1.msra.mxu0 0.0
    %1298 = vmatprep.subr.mxu0 0.0
    %1299 = vmatpush1.msra.mxu0 0.0
    %1300 = vmatprep.subr.mxu0 0.0
    %1301 = vmatpush1.msra.mxu0 0.0
    %1302 = vmatprep.subr.mxu0 0.0
    %1303 = vmatpush1.msra.mxu0 0.0
    %1304 = vmatprep.subr.mxu0 0.0
    %1305 = vmatpush1.msra.mxu0 0.0
    %1306 = vmatprep.subr.mxu0 0.0
    %1307 = vmatpush1.msra.mxu0 0.0
    %1308 = vmatprep.subr.mxu0 0.0
    %1309 = vmatpush1.msra.mxu0 0.0
    %1310 = vmatprep.subr.mxu0 0.0
    %1311 = vmatpush1.msra.mxu0 0.0
    %1312 = vmatprep.subr.mxu0 0.0
    %1313 = vmatpush1.msra.mxu0 0.0
    %1314 = vmatprep.mubr.f32.mxu0 0.0
    %1315 = vmatmul.mubr.f32.gmra.mrb[0].mxu0 %v1248
    %v1316 = vpop.f32.mrb[0].mxu0
    %v1317 = vadd.f32 0.0, %v1316
    %v1318 = vpop.f32.mrb[0].mxu0
    %1319 = vdwg.mxu0
    %1320 = vrot.lane.b32.xlu0 %v190, 112
    %v1321 = vpop.permute.xlu0 %1320
    %v1324 = vsel %vm245, %v937, 0
    %1326 = vmatprep.subr.mxu0 0.0
    %1327 = vmatpush1.msra.mxu0 %v1321
    %1328 = vmatprep.subr.mxu0 0.0
    %1329 = vmatpush1.msra.mxu0 0.0
    %1330 = vmatprep.subr.mxu0 0.0
    %1331 = vmatpush1.msra.mxu0 0.0
    %1332 = vmatprep.subr.mxu0 0.0
    %1333 = vmatpush1.msra.mxu0 0.0
    %1334 = vmatprep.subr.mxu0 0.0
    %1335 = vmatpush1.msra.mxu0 0.0
    %1336 = vmatprep.subr.mxu0 0.0
    %1337 = vmatpush1.msra.mxu0 0.0
    %1338 = vmatprep.subr.mxu0 0.0
    %1339 = vmatpush1.msra.mxu0 0.0
    %1340 = vmatprep.subr.mxu0 0.0
    %1341 = vmatpush1.msra.mxu0 0.0
    %1342 = vmatprep.subr.mxu0 0.0
    %1343 = vmatpush1.msra.mxu0 0.0
    %1344 = vmatprep.subr.mxu0 0.0
    %1345 = vmatpush1.msra.mxu0 0.0
    %1346 = vmatprep.subr.mxu0 0.0
    %1347 = vmatpush1.msra.mxu0 0.0
    %1348 = vmatprep.subr.mxu0 0.0
    %1349 = vmatpush1.msra.mxu0 0.0
    %1350 = vmatprep.subr.mxu0 0.0
    %1351 = vmatpush1.msra.mxu0 0.0
    %1352 = vmatprep.subr.mxu0 0.0
    %1353 = vmatpush1.msra.mxu0 0.0
    %1354 = vmatprep.subr.mxu0 0.0
    %1355 = vmatpush1.msra.mxu0 0.0
    %1356 = vmatprep.subr.mxu0 0.0
    %1357 = vmatpush1.msra.mxu0 0.0
    %1358 = vmatprep.subr.mxu0 0.0
    %1359 = vmatpush1.msra.mxu0 0.0
    %1360 = vmatprep.subr.mxu0 0.0
    %1361 = vmatpush1.msra.mxu0 0.0
    %1362 = vmatprep.subr.mxu0 0.0
    %1363 = vmatpush1.msra.mxu0 0.0
    %1364 = vmatprep.subr.mxu0 0.0
    %1365 = vmatpush1.msra.mxu0 0.0
    %1366 = vmatprep.subr.mxu0 0.0
    %1367 = vmatpush1.msra.mxu0 0.0
    %1368 = vmatprep.subr.mxu0 0.0
    %1369 = vmatpush1.msra.mxu0 0.0
    %1370 = vmatprep.subr.mxu0 0.0
    %1371 = vmatpush1.msra.mxu0 0.0
    %1372 = vmatprep.subr.mxu0 0.0
    %1373 = vmatpush1.msra.mxu0 0.0
    %1374 = vmatprep.subr.mxu0 0.0
    %1375 = vmatpush1.msra.mxu0 0.0
    %1376 = vmatprep.subr.mxu0 0.0
    %1377 = vmatpush1.msra.mxu0 0.0
    %1378 = vmatprep.subr.mxu0 0.0
    %1379 = vmatpush1.msra.mxu0 0.0
    %1380 = vmatprep.subr.mxu0 0.0
    %1381 = vmatpush1.msra.mxu0 0.0
    %1382 = vmatprep.subr.mxu0 0.0
    %1383 = vmatpush1.msra.mxu0 0.0
    %1384 = vmatprep.subr.mxu0 0.0
    %1385 = vmatpush1.msra.mxu0 0.0
    %1386 = vmatprep.subr.mxu0 0.0
    %1387 = vmatpush1.msra.mxu0 0.0
    %1388 = vmatprep.subr.mxu0 0.0
    %1389 = vmatpush1.msra.mxu0 0.0
    %1390 = vmatprep.mubr.f32.mxu0 0.0
    %1391 = vmatmul.mubr.f32.gmra.mrb[0].mxu0 %v1324
    %v1392 = vpop.f32.mrb[0].mxu0
    %v1393 = vadd.f32 0.0, %v1392
    %v1394 = vpop.f32.mrb[0].mxu0
    %1395 = vdwg.mxu0
    %1396 = vrot.lane.b32.xlu0 %v192, 112
    %v1397 = vpop.permute.xlu0 %1396
    %v1400 = vsel %vm245, %v938, 0
    %1402 = vmatprep.subr.mxu0 0.0
    %1403 = vmatpush1.msra.mxu0 %v1397
    %1404 = vmatprep.subr.mxu0 0.0
    %1405 = vmatpush1.msra.mxu0 0.0
    %1406 = vmatprep.subr.mxu0 0.0
    %1407 = vmatpush1.msra.mxu0 0.0
    %1408 = vmatprep.subr.mxu0 0.0
    %1409 = vmatpush1.msra.mxu0 0.0
    %1410 = vmatprep.subr.mxu0 0.0
    %1411 = vmatpush1.msra.mxu0 0.0
    %1412 = vmatprep.subr.mxu0 0.0
    %1413 = vmatpush1.msra.mxu0 0.0
    %1414 = vmatprep.subr.mxu0 0.0
    %1415 = vmatpush1.msra.mxu0 0.0
    %1416 = vmatprep.subr.mxu0 0.0
    %1417 = vmatpush1.msra.mxu0 0.0
    %1418 = vmatprep.subr.mxu0 0.0
    %1419 = vmatpush1.msra.mxu0 0.0
    %1420 = vmatprep.subr.mxu0 0.0
    %1421 = vmatpush1.msra.mxu0 0.0
    %1422 = vmatprep.subr.mxu0 0.0
    %1423 = vmatpush1.msra.mxu0 0.0
    %1424 = vmatprep.subr.mxu0 0.0
    %1425 = vmatpush1.msra.mxu0 0.0
    %1426 = vmatprep.subr.mxu0 0.0
    %1427 = vmatpush1.msra.mxu0 0.0
    %1428 = vmatprep.subr.mxu0 0.0
    %1429 = vmatpush1.msra.mxu0 0.0
    %1430 = vmatprep.subr.mxu0 0.0
    %1431 = vmatpush1.msra.mxu0 0.0
    %1432 = vmatprep.subr.mxu0 0.0
    %1433 = vmatpush1.msra.mxu0 0.0
    %1434 = vmatprep.subr.mxu0 0.0
    %1435 = vmatpush1.msra.mxu0 0.0
    %1436 = vmatprep.subr.mxu0 0.0
    %1437 = vmatpush1.msra.mxu0 0.0
    %1438 = vmatprep.subr.mxu0 0.0
    %1439 = vmatpush1.msra.mxu0 0.0
    %1440 = vmatprep.subr.mxu0 0.0
    %1441 = vmatpush1.msra.mxu0 0.0
    %1442 = vmatprep.subr.mxu0 0.0
    %1443 = vmatpush1.msra.mxu0 0.0
    %1444 = vmatprep.subr.mxu0 0.0
    %1445 = vmatpush1.msra.mxu0 0.0
    %1446 = vmatprep.subr.mxu0 0.0
    %1447 = vmatpush1.msra.mxu0 0.0
    %1448 = vmatprep.subr.mxu0 0.0
    %1449 = vmatpush1.msra.mxu0 0.0
    %1450 = vmatprep.subr.mxu0 0.0
    %1451 = vmatpush1.msra.mxu0 0.0
    %1452 = vmatprep.subr.mxu0 0.0
    %1453 = vmatpush1.msra.mxu0 0.0
    %1454 = vmatprep.subr.mxu0 0.0
    %1455 = vmatpush1.msra.mxu0 0.0
    %1456 = vmatprep.subr.mxu0 0.0
    %1457 = vmatpush1.msra.mxu0 0.0
    %1458 = vmatprep.subr.mxu0 0.0
    %1459 = vmatpush1.msra.mxu0 0.0
    %1460 = vmatprep.subr.mxu0 0.0
    %1461 = vmatpush1.msra.mxu0 0.0
    %1462 = vmatprep.subr.mxu0 0.0
    %1463 = vmatpush1.msra.mxu0 0.0
    %1464 = vmatprep.subr.mxu0 0.0
    %1465 = vmatpush1.msra.mxu0 0.0
    %1466 = vmatprep.mubr.f32.mxu0 0.0
    %1467 = vmatmul.mubr.f32.gmra.mrb[0].mxu0 %v1400
    %v1468 = vpop.f32.mrb[0].mxu0
    %v1469 = vadd.f32 0.0, %v1468
    %v1470 = vpop.f32.mrb[0].mxu0
    %1471 = vdwg.mxu0
    %1472 = vrot.lane.b32.xlu0 %v194, 112
    %v1473 = vpop.permute.xlu0 %1472
    %v1476 = vsel %vm245, %v939, 0
    %1478 = vmatprep.subr.mxu0 0.0
    %1479 = vmatpush1.msra.mxu0 %v1473
    %1480 = vmatprep.subr.mxu0 0.0
    %1481 = vmatpush1.msra.mxu0 0.0
    %1482 = vmatprep.subr.mxu0 0.0
    %1483 = vmatpush1.msra.mxu0 0.0
    %1484 = vmatprep.subr.mxu0 0.0
    %1485 = vmatpush1.msra.mxu0 0.0
    %1486 = vmatprep.subr.mxu0 0.0
    %1487 = vmatpush1.msra.mxu0 0.0
    %1488 = vmatprep.subr.mxu0 0.0
    %1489 = vmatpush1.msra.mxu0 0.0
    %1490 = vmatprep.subr.mxu0 0.0
    %1491 = vmatpush1.msra.mxu0 0.0
    %1492 = vmatprep.subr.mxu0 0.0
    %1493 = vmatpush1.msra.mxu0 0.0
    %1494 = vmatprep.subr.mxu0 0.0
    %1495 = vmatpush1.msra.mxu0 0.0
    %1496 = vmatprep.subr.mxu0 0.0
    %1497 = vmatpush1.msra.mxu0 0.0
    %1498 = vmatprep.subr.mxu0 0.0
    %1499 = vmatpush1.msra.mxu0 0.0
    %1500 = vmatprep.subr.mxu0 0.0
    %1501 = vmatpush1.msra.mxu0 0.0
    %1502 = vmatprep.subr.mxu0 0.0
    %1503 = vmatpush1.msra.mxu0 0.0
    %1504 = vmatprep.subr.mxu0 0.0
    %1505 = vmatpush1.msra.mxu0 0.0
    %1506 = vmatprep.subr.mxu0 0.0
    %1507 = vmatpush1.msra.mxu0 0.0
    %1508 = vmatprep.subr.mxu0 0.0
    %1509 = vmatpush1.msra.mxu0 0.0
    %1510 = vmatprep.subr.mxu0 0.0
    %1511 = vmatpush1.msra.mxu0 0.0
    %1512 = vmatprep.subr.mxu0 0.0
    %1513 = vmatpush1.msra.mxu0 0.0
    %1514 = vmatprep.subr.mxu0 0.0
    %1515 = vmatpush1.msra.mxu0 0.0
    %1516 = vmatprep.subr.mxu0 0.0
    %1517 = vmatpush1.msra.mxu0 0.0
    %1518 = vmatprep.subr.mxu0 0.0
    %1519 = vmatpush1.msra.mxu0 0.0
    %1520 = vmatprep.subr.mxu0 0.0
    %1521 = vmatpush1.msra.mxu0 0.0
    %1522 = vmatprep.subr.mxu0 0.0
    %1523 = vmatpush1.msra.mxu0 0.0
    %1524 = vmatprep.subr.mxu0 0.0
    %1525 = vmatpush1.msra.mxu0 0.0
    %1526 = vmatprep.subr.mxu0 0.0
    %1527 = vmatpush1.msra.mxu0 0.0
    %1528 = vmatprep.subr.mxu0 0.0
    %1529 = vmatpush1.msra.mxu0 0.0
    %1530 = vmatprep.subr.mxu0 0.0
    %1531 = vmatpush1.msra.mxu0 0.0
    %1532 = vmatprep.subr.mxu0 0.0
    %1533 = vmatpush1.msra.mxu0 0.0
    %1534 = vmatprep.subr.mxu0 0.0
    %1535 = vmatpush1.msra.mxu0 0.0
    %1536 = vmatprep.subr.mxu0 0.0
    %1537 = vmatpush1.msra.mxu0 0.0
    %1538 = vmatprep.subr.mxu0 0.0
    %1539 = vmatpush1.msra.mxu0 0.0
    %1540 = vmatprep.subr.mxu0 0.0
    %1541 = vmatpush1.msra.mxu0 0.0
    %1542 = vmatprep.mubr.f32.mxu0 0.0
    %1543 = vmatmul.mubr.f32.gmra.mrb[0].mxu0 %v1476
    %v1544 = vpop.f32.mrb[0].mxu0
    %v1545 = vadd.f32 0.0, %v1544
    %v1546 = vpop.f32.mrb[0].mxu0
    %1547 = vdwg.mxu0
    %1550 = vrot.lane.b32.xlu0 %v1165, 8
    %v1551 = vpop.permute.xlu0 %1550
    %1552 = vrot.lane.b32.xlu0 %v1241, 8
    %v1553 = vpop.permute.xlu0 %1552
    %1558 = vrot.lane.b32.xlu0 %v1317, 16
    %v1559 = vpop.permute.xlu0 %1558
    %1560 = vrot.lane.b32.xlu0 %v1393, 16
    %v1561 = vpop.permute.xlu0 %1560
    %1566 = vrot.lane.b32.xlu0 %v1469, 24
    %v1567 = vpop.permute.xlu0 %1566
    %1568 = vrot.lane.b32.xlu0 %v1545, 24
    %v1569 = vpop.permute.xlu0 %1568
    %v1572 = vsel %vm245, %v1013, %v1551
    %v1573 = vsel %vm245, %v1089, %v1553
    %vm1574 = vcmask 130048
    %v1575 = vsel %vm1574, %v1572, %v1559
    %v1576 = vsel %vm1574, %v1573, %v1561
    %vm1577 = vcmask 195584
    %v1578 = vsel %vm1577, %v1575, %v1567
    %v1579 = vsel %vm1577, %v1576, %v1569
    %v1580 = vlaneseq
    %v1581 = vshrl.u32 %v1580, 7
    %v1582 = vsub.s32 0, %v1581
    %v1583 = vrot.slane %v89, %v1582
    %1588 = vrot.lane.b32.xlu0 %v76, 32
    %v1589 = vpop.permute.xlu0 %1588
    %1590 = vrot.lane.b32.xlu0 %v77, 32
    %v1591 = vpop.permute.xlu0 %1590
    %1592 = vrot.lane.b32.xlu0 %v78, 32
    %v1593 = vpop.permute.xlu0 %1592
    %1594 = vrot.lane.b32.xlu0 %v79, 32
    %v1595 = vpop.permute.xlu0 %1594
    %v1601 = vsel %vm33, %v1578, 0
    %v1604 = vsel %vm33, %v1579, 0
    %1606 = vmatprep.subr.mxu0 0.0
    %1607 = vmatpush1.msra.mxu0 %v1589
    %1608 = vmatprep.subr.mxu0 0.0
    %1609 = vmatpush1.msra.mxu0 %v1591
    %1610 = vmatprep.subr.mxu0 0.0
    %1611 = vmatpush1.msra.mxu0 %v1593
    %1612 = vmatprep.subr.mxu0 0.0
    %1613 = vmatpush1.msra.mxu0 %v1595
    %1614 = vmatprep.subr.mxu0 0.0
    %1615 = vmatpush1.msra.mxu0 0.0
    %1616 = vmatprep.subr.mxu0 0.0
    %1617 = vmatpush1.msra.mxu0 0.0
    %1618 = vmatprep.subr.mxu0 0.0
    %1619 = vmatpush1.msra.mxu0 0.0
    %1620 = vmatprep.subr.mxu0 0.0
    %1621 = vmatpush1.msra.mxu0 0.0
    %1622 = vmatprep.subr.mxu0 0.0
    %1623 = vmatpush1.msra.mxu0 0.0
    %1624 = vmatprep.subr.mxu0 0.0
    %1625 = vmatpush1.msra.mxu0 0.0
    %1626 = vmatprep.subr.mxu0 0.0
    %1627 = vmatpush1.msra.mxu0 0.0
    %1628 = vmatprep.subr.mxu0 0.0
    %1629 = vmatpush1.msra.mxu0 0.0
    %1630 = vmatprep.subr.mxu0 0.0
    %1631 = vmatpush1.msra.mxu0 0.0
    %1632 = vmatprep.subr.mxu0 0.0
    %1633 = vmatpush1.msra.mxu0 0.0
    %1634 = vmatprep.subr.mxu0 0.0
    %1635 = vmatpush1.msra.mxu0 0.0
    %1636 = vmatprep.subr.mxu0 0.0
    %1637 = vmatpush1.msra.mxu0 0.0
    %1638 = vmatprep.subr.mxu0 0.0
    %1639 = vmatpush1.msra.mxu0 0.0
    %1640 = vmatprep.subr.mxu0 0.0
    %1641 = vmatpush1.msra.mxu0 0.0
    %1642 = vmatprep.subr.mxu0 0.0
    %1643 = vmatpush1.msra.mxu0 0.0
    %1644 = vmatprep.subr.mxu0 0.0
    %1645 = vmatpush1.msra.mxu0 0.0
    %1646 = vmatprep.subr.mxu0 0.0
    %1647 = vmatpush1.msra.mxu0 0.0
    %1648 = vmatprep.subr.mxu0 0.0
    %1649 = vmatpush1.msra.mxu0 0.0
    %1650 = vmatprep.subr.mxu0 0.0
    %1651 = vmatpush1.msra.mxu0 0.0
    %1652 = vmatprep.subr.mxu0 0.0
    %1653 = vmatpush1.msra.mxu0 0.0
    %1654 = vmatprep.subr.mxu0 0.0
    %1655 = vmatpush1.msra.mxu0 0.0
    %1656 = vmatprep.subr.mxu0 0.0
    %1657 = vmatpush1.msra.mxu0 0.0
    %1658 = vmatprep.subr.mxu0 0.0
    %1659 = vmatpush1.msra.mxu0 0.0
    %1660 = vmatprep.subr.mxu0 0.0
    %1661 = vmatpush1.msra.mxu0 0.0
    %1662 = vmatprep.subr.mxu0 0.0
    %1663 = vmatpush1.msra.mxu0 0.0
    %1664 = vmatprep.subr.mxu0 0.0
    %1665 = vmatpush1.msra.mxu0 0.0
    %1666 = vmatprep.subr.mxu0 0.0
    %1667 = vmatpush1.msra.mxu0 0.0
    %1668 = vmatprep.subr.mxu0 0.0
    %1669 = vmatpush1.msra.mxu0 0.0
    %1670 = vmatprep.mubr.f32.mxu0 0.0
    %1671 = vmatmul.mubr.f32.gmra.mrb[0].mxu0 %v1601
    %v1672 = vpop.f32.mrb[0].mxu0
    %v1673 = vadd.f32 %v1583, %v1672
    %v1674 = vpop.f32.mrb[0].mxu0
    %1675 = vmatprep.mubr.f32.mxu0 0.0
    %1676 = vmatmul.mubr.f32.gmra.mrb[0].mxu0 %v1604
    %v1677 = vpop.f32.mrb[0].mxu0
    %v1678 = vadd.f32 %v1583, %v1677
    %v1679 = vpop.f32.mrb[0].mxu0
    %1680 = vdwg.mxu0
    %v1681 = vadd.f32 %v1673, %v74
    %v1682 = vadd.f32 %v1678, %v75
    %v1683 = vsel %vm33, %v1681, 0.0
    %1684 = vadd.xlane.f32.xlu0 %v1683
    %v1685 = vpop.xlane.xlu0 %1684
    %v1686 = vsel %vm33, %v1682, 0.0
    %1687 = vadd.xlane.f32.xlu0 %v1686
    %v1688 = vpop.xlane.xlu0 %1687
    %v1689 = vmul.f32 %v1681, %v1681
    %v1690 = vmul.f32 %v1682, %v1682
    %v1691 = vsel %vm33, %v1689, 0.0
    %1692 = vadd.xlane.f32.xlu0 %v1691
    %v1693 = vpop.xlane.xlu0 %1692
    %v1694 = vsel %vm33, %v1690, 0.0
    %1695 = vadd.xlane.f32.xlu0 %v1694
    %v1696 = vpop.xlane.xlu0 %1695
    %v1697 = vmul.f32 %v1685, 0.03125
    %v1698 = vmul.f32 %v1688, 0.03125
    %v1699 = vmul.f32 %v1693, 0.03125
    %v1700 = vmul.f32 %v1696, 0.03125
    %v1701 = vmul.f32 %v1697, %v1697
    %v1702 = vmul.f32 %v1698, %v1698
    %v1703 = vsub.f32 %v1699, %v1701
    %v1704 = vsub.f32 %v1700, %v1702
    %v1705 = vsub.f32 %v1681, %v1697
    %v1706 = vsub.f32 %v1682, %v1698
    %v1707 = vadd.f32 %v1703, 1e-12
    %v1708 = vadd.f32 %v1704, 1e-12
    %v1709 = vrsqrt.pop %v1707
    %v1710 = vrsqrt.pop %v1708
    %v1711 = vmul.f32 %v1705, %v1709
    %v1712 = vmul.f32 %v1706, %v1710
    %v1713 = vlaneseq
    %v1714 = vshrl.u32 %v1713, 7
    %v1715 = vsub.s32 0, %v1714
    %v1716 = vrot.slane %v90, %v1715
    %v1717 = vmul.f32 %v1711, %v1716
    %v1718 = vmul.f32 %v1712, %v1716
    %v1719 = vlaneseq
    %v1720 = vshrl.u32 %v1719, 7
    %v1721 = vsub.s32 0, %v1720
    %v1722 = vrot.slane %v91, %v1721
    %v1723 = vadd.f32 %v1717, %v1722
    %v1724 = vadd.f32 %v1718, %v1722
    %v1725 = vlaneseq
    %v1726 = vshrl.u32 %v1725, 7
    %v1727 = vsub.s32 0, %v1726
    %v1728 = vrot.slane %v92, %v1727
    %v1730 = vsel %vm33, %v1723, 0
    %v1733 = vsel %vm33, %v1724, 0
    %1735 = vmatprep.subr.mxu0 0.0
    %1736 = vmatpush1.msra.mxu0 %v80
    %1737 = vmatprep.subr.mxu0 0.0
    %1738 = vmatpush1.msra.mxu0 %v81
    %1739 = vmatprep.subr.mxu0 0.0
    %1740 = vmatpush1.msra.mxu0 %v82
    %1741 = vmatprep.subr.mxu0 0.0
    %1742 = vmatpush1.msra.mxu0 %v83
    %1743 = vmatprep.subr.mxu0 0.0
    %1744 = vmatpush1.msra.mxu0 0.0
    %1745 = vmatprep.subr.mxu0 0.0
    %1746 = vmatpush1.msra.mxu0 0.0
    %1747 = vmatprep.subr.mxu0 0.0
    %1748 = vmatpush1.msra.mxu0 0.0
    %1749 = vmatprep.subr.mxu0 0.0
    %1750 = vmatpush1.msra.mxu0 0.0
    %1751 = vmatprep.subr.mxu0 0.0
    %1752 = vmatpush1.msra.mxu0 0.0
    %1753 = vmatprep.subr.mxu0 0.0
    %1754 = vmatpush1.msra.mxu0 0.0
    %1755 = vmatprep.subr.mxu0 0.0
    %1756 = vmatpush1.msra.mxu0 0.0
    %1757 = vmatprep.subr.mxu0 0.0
    %1758 = vmatpush1.msra.mxu0 0.0
    %1759 = vmatprep.subr.mxu0 0.0
    %1760 = vmatpush1.msra.mxu0 0.0
    %1761 = vmatprep.subr.mxu0 0.0
    %1762 = vmatpush1.msra.mxu0 0.0
    %1763 = vmatprep.subr.mxu0 0.0
    %1764 = vmatpush1.msra.mxu0 0.0
    %1765 = vmatprep.subr.mxu0 0.0
    %1766 = vmatpush1.msra.mxu0 0.0
    %1767 = vmatprep.subr.mxu0 0.0
    %1768 = vmatpush1.msra.mxu0 0.0
    %1769 = vmatprep.subr.mxu0 0.0
    %1770 = vmatpush1.msra.mxu0 0.0
    %1771 = vmatprep.subr.mxu0 0.0
    %1772 = vmatpush1.msra.mxu0 0.0
    %1773 = vmatprep.subr.mxu0 0.0
    %1774 = vmatpush1.msra.mxu0 0.0
    %1775 = vmatprep.subr.mxu0 0.0
    %1776 = vmatpush1.msra.mxu0 0.0
    %1777 = vmatprep.subr.mxu0 0.0
    %1778 = vmatpush1.msra.mxu0 0.0
    %1779 = vmatprep.subr.mxu0 0.0
    %1780 = vmatpush1.msra.mxu0 0.0
    %1781 = vmatprep.subr.mxu0 0.0
    %1782 = vmatpush1.msra.mxu0 0.0
    %1783 = vmatprep.subr.mxu0 0.0
    %1784 = vmatpush1.msra.mxu0 0.0
    %1785 = vmatprep.subr.mxu0 0.0
    %1786 = vmatpush1.msra.mxu0 0.0
    %1787 = vmatprep.subr.mxu0 0.0
    %1788 = vmatpush1.msra.mxu0 0.0
    %1789 = vmatprep.subr.mxu0 0.0
    %1790 = vmatpush1.msra.mxu0 0.0
    %1791 = vmatprep.subr.mxu0 0.0
    %1792 = vmatpush1.msra.mxu0 0.0
    %1793 = vmatprep.subr.mxu0 0.0
    %1794 = vmatpush1.msra.mxu0 0.0
    %1795 = vmatprep.subr.mxu0 0.0
    %1796 = vmatpush1.msra.mxu0 0.0
    %1797 = vmatprep.subr.mxu0 0.0
    %1798 = vmatpush1.msra.mxu0 0.0
    %1799 = vmatprep.mubr.f32.mxu0 0.0
    %1800 = vmatmul.mubr.f32.gmra.mrb[0].mxu0 %v1730
    %v1801 = vpop.f32.mrb[0].mxu0
    %v1802 = vadd.f32 %v1728, %v1801
    %v1803 = vpop.f32.mrb[0].mxu0
    %1804 = vmatprep.mubr.f32.mxu0 0.0
    %1805 = vmatmul.mubr.f32.gmra.mrb[0].mxu0 %v1733
    %v1806 = vpop.f32.mrb[0].mxu0
    %v1807 = vadd.f32 %v1728, %v1806
    %v1808 = vpop.f32.mrb[0].mxu0
    %1809 = vdwg.mxu0
    %v1810 = vmul.f32 %v1802, 0.5
    %v1811 = vmul.f32 %v1807, 0.5
    %v1812 = vmul.f32 %v1802, 0.044715
    %v1813 = vmul.f32 %v1807, 0.044715
    %v1814 = vmul.f32 %v1812, %v1802
    %v1815 = vmul.f32 %v1813, %v1807
    %v1816 = vmul.f32 %v1814, %v1802
    %v1817 = vmul.f32 %v1815, %v1807
    %v1818 = vadd.f32 %v1802, %v1816
    %v1819 = vadd.f32 %v1807, %v1817
    %v1820 = vmul.f32 %v1818, 0.7978846
    %v1821 = vmul.f32 %v1819, 0.7978846
    %v1822 = vtanh.pop %v1820
    %v1823 = vtanh.pop %v1821
    %v1824 = vadd.f32 %v1822, 1.0
    %v1825 = vadd.f32 %v1823, 1.0
    %v1826 = vmul.f32 %v1810, %v1824
    %v1827 = vmul.f32 %v1811, %v1825
    %v1828 = vlaneseq
    %v1829 = vshrl.u32 %v1828, 7
    %v1830 = vsub.s32 0, %v1829
    %v1831 = vrot.slane %v93, %v1830
    %1840 = vrot.lane.b32.xlu0 %v80, 64
    %v1841 = vpop.permute.xlu0 %1840
    %1842 = vrot.lane.b32.xlu0 %v81, 64
    %v1843 = vpop.permute.xlu0 %1842
    %1844 = vrot.lane.b32.xlu0 %v82, 64
    %v1845 = vpop.permute.xlu0 %1844
    %1846 = vrot.lane.b32.xlu0 %v83, 64
    %v1847 = vpop.permute.xlu0 %1846
    %1848 = vrot.lane.b32.xlu0 %v84, 64
    %v1849 = vpop.permute.xlu0 %1848
    %1850 = vrot.lane.b32.xlu0 %v85, 64
    %v1851 = vpop.permute.xlu0 %1850
    %1852 = vrot.lane.b32.xlu0 %v86, 64
    %v1853 = vpop.permute.xlu0 %1852
    %1854 = vrot.lane.b32.xlu0 %v87, 64
    %v1855 = vpop.permute.xlu0 %1854
    %vm1864 = vcmask 523264
    %v1866 = vsel %vm1864, %v1826, 0
    %v1869 = vsel %vm1864, %v1827, 0
    %1871 = vmatprep.subr.mxu0 0.0
    %1872 = vmatpush1.msra.mxu0 %v1841
    %1873 = vmatprep.subr.mxu0 0.0
    %1874 = vmatpush1.msra.mxu0 %v1843
    %1875 = vmatprep.subr.mxu0 0.0
    %1876 = vmatpush1.msra.mxu0 %v1845
    %1877 = vmatprep.subr.mxu0 0.0
    %1878 = vmatpush1.msra.mxu0 %v1847
    %1879 = vmatprep.subr.mxu0 0.0
    %1880 = vmatpush1.msra.mxu0 %v1849
    %1881 = vmatprep.subr.mxu0 0.0
    %1882 = vmatpush1.msra.mxu0 %v1851
    %1883 = vmatprep.subr.mxu0 0.0
    %1884 = vmatpush1.msra.mxu0 %v1853
    %1885 = vmatprep.subr.mxu0 0.0
    %1886 = vmatpush1.msra.mxu0 %v1855
    %1887 = vmatprep.subr.mxu0 0.0
    %1888 = vmatpush1.msra.mxu0 0.0
    %1889 = vmatprep.subr.mxu0 0.0
    %1890 = vmatpush1.msra.mxu0 0.0
    %1891 = vmatprep.subr.mxu0 0.0
    %1892 = vmatpush1.msra.mxu0 0.0
    %1893 = vmatprep.subr.mxu0 0.0
    %1894 = vmatpush1.msra.mxu0 0.0
    %1895 = vmatprep.subr.mxu0 0.0
    %1896 = vmatpush1.msra.mxu0 0.0
    %1897 = vmatprep.subr.mxu0 0.0
    %1898 = vmatpush1.msra.mxu0 0.0
    %1899 = vmatprep.subr.mxu0 0.0
    %1900 = vmatpush1.msra.mxu0 0.0
    %1901 = vmatprep.subr.mxu0 0.0
    %1902 = vmatpush1.msra.mxu0 0.0
    %1903 = vmatprep.subr.mxu0 0.0
    %1904 = vmatpush1.msra.mxu0 0.0
    %1905 = vmatprep.subr.mxu0 0.0
    %1906 = vmatpush1.msra.mxu0 0.0
    %1907 = vmatprep.subr.mxu0 0.0
    %1908 = vmatpush1.msra.mxu0 0.0
    %1909 = vmatprep.subr.mxu0 0.0
    %1910 = vmatpush1.msra.mxu0 0.0
    %1911 = vmatprep.subr.mxu0 0.0
    %1912 = vmatpush1.msra.mxu0 0.0
    %1913 = vmatprep.subr.mxu0 0.0
    %1914 = vmatpush1.msra.mxu0 0.0
    %1915 = vmatprep.subr.mxu0 0.0
    %1916 = vmatpush1.msra.mxu0 0.0
    %1917 = vmatprep.subr.mxu0 0.0
    %1918 = vmatpush1.msra.mxu0 0.0
    %1919 = vmatprep.subr.mxu0 0.0
    %1920 = vmatpush1.msra.mxu0 0.0
    %1921 = vmatprep.subr.mxu0 0.0
    %1922 = vmatpush1.msra.mxu0 0.0
    %1923 = vmatprep.subr.mxu0 0.0
    %1924 = vmatpush1.msra.mxu0 0.0
    %1925 = vmatprep.subr.mxu0 0.0
    %1926 = vmatpush1.msra.mxu0 0.0
    %1927 = vmatprep.subr.mxu0 0.0
    %1928 = vmatpush1.msra.mxu0 0.0
    %1929 = vmatprep.subr.mxu0 0.0
    %1930 = vmatpush1.msra.mxu0 0.0
    %1931 = vmatprep.subr.mxu0 0.0
    %1932 = vmatpush1.msra.mxu0 0.0
    %1933 = vmatprep.subr.mxu0 0.0
    %1934 = vmatpush1.msra.mxu0 0.0
    %1935 = vmatprep.mubr.f32.mxu0 0.0
    %1936 = vmatmul.mubr.f32.gmra.mrb[0].mxu0 %v1866
    %v1937 = vpop.f32.mrb[0].mxu0
    %v1938 = vadd.f32 %v1831, %v1937
    %v1939 = vpop.f32.mrb[0].mxu0
    %1940 = vmatprep.mubr.f32.mxu0 0.0
    %1941 = vmatmul.mubr.f32.gmra.mrb[0].mxu0 %v1869
    %v1942 = vpop.f32.mrb[0].mxu0
    %v1943 = vadd.f32 %v1831, %v1942
    %v1944 = vpop.f32.mrb[0].mxu0
    %1945 = vdwg.mxu0
    %v1946 = vadd.f32 %v1938, %v1723
    %v1947 = vadd.f32 %v1943, %v1724
    %v1948 = vsel %vm33, %v1946, 0.0
    %1949 = vadd.xlane.f32.xlu0 %v1948
    %v1950 = vpop.xlane.xlu0 %1949
    %v1951 = vsel %vm33, %v1947, 0.0
    %1952 = vadd.xlane.f32.xlu0 %v1951
    %v1953 = vpop.xlane.xlu0 %1952
    %v1954 = vmul.f32 %v1946, %v1946
    %v1955 = vmul.f32 %v1947, %v1947
    %v1956 = vsel %vm33, %v1954, 0.0
    %1957 = vadd.xlane.f32.xlu0 %v1956
    %v1958 = vpop.xlane.xlu0 %1957
    %v1959 = vsel %vm33, %v1955, 0.0
    %1960 = vadd.xlane.f32.xlu0 %v1959
    %v1961 = vpop.xlane.xlu0 %1960
    %v1962 = vmul.f32 %v1950, 0.03125
    %v1963 = vmul.f32 %v1953, 0.03125
    %v1964 = vmul.f32 %v1958, 0.03125
    %v1965 = vmul.f32 %v1961, 0.03125
    %v1966 = vmul.f32 %v1962, %v1962
    %v1967 = vmul.f32 %v1963, %v1963
    %v1968 = vsub.f32 %v1964, %v1966
    %v1969 = vsub.f32 %v1965, %v1967
    %v1970 = vsub.f32 %v1946, %v1962
    %v1971 = vsub.f32 %v1947, %v1963
    %v1972 = vadd.f32 %v1968, 1e-12
    %v1973 = vadd.f32 %v1969, 1e-12
    %v1974 = vrsqrt.pop %v1972
    %v1975 = vrsqrt.pop %v1973
    %v1976 = vmul.f32 %v1970, %v1974
    %v1977 = vmul.f32 %v1971, %v1975
    %v1978 = vlaneseq
    %v1979 = vshrl.u32 %v1978, 7
    %v1980 = vsub.s32 0, %v1979
    %v1981 = vrot.slane %v94, %v1980
    %v1982 = vmul.f32 %v1976, %v1981
    %v1983 = vmul.f32 %v1977, %v1981
    %v1984 = vlaneseq
    %v1985 = vshrl.u32 %v1984, 7
    %v1986 = vsub.s32 0, %v1985
    %v1987 = vrot.slane %v95, %v1986
    %v1988 = vadd.f32 %v1982, %v1987
    %v1989 = vadd.f32 %v1983, %v1987
    %s1990 = scalar_lea.vmem %s2, 128
    %v1991 = vld [vmem:[%s1990] sm:$0xff]
    %v1992 = vld [vmem:[%s1990 + $0x10] sm:$0xff]
    %v1993 = vld [vmem:[%s1990 + $0x20] sm:$0xff]
    %v1994 = vld [vmem:[%s1990 + $0x30] sm:$0xff]
    %v1995 = vld [vmem:[%s1990 + $0x8] sm:$0xff]
    %v1996 = vld [vmem:[%s1990 + $0x18] sm:$0xff]
    %v1997 = vld [vmem:[%s1990 + $0x28] sm:$0xff]
    %v1998 = vld [vmem:[%s1990 + $0x38] sm:$0xff]
    %v1999 = vld [vmem:[%s1990 + $0x48] sm:$0xff]
    %v2000 = vld [vmem:[%s1990 + $0x58] sm:$0xff]
    %v2001 = vld [vmem:[%s1990 + $0x68] sm:$0xff]
    %v2002 = vld [vmem:[%s1990 + $0x78] sm:$0xff]
    %s2003 = scalar_lea.vmem %s3, 8
    %v2004 = vld [vmem:[%s2003] sm:$0x1]
    %v2005 = vld [vmem:[%s2003 + $0x1] sm:$0x1]
    %v2006 = vld [vmem:[%s2003 + $0x2] sm:$0x1]
    %v2007 = vld [vmem:[%s2003 + $0x3] sm:$0x1]
    %v2008 = vld [vmem:[%s2003 + $0x4] sm:$0x1]
    %v2009 = vld [vmem:[%s2003 + $0x5] sm:$0x1]
    %v2010 = vld [vmem:[%s2003 + $0x6] sm:$0x1]
    %v2011 = vld [vmem:[%s2003 + $0x7] sm:$0x1]
    %v2012 = vlaneseq
    %v2013 = vshrl.u32 %v2012, 7
    %v2014 = vsub.s32 0, %v2013
    %v2015 = vrot.slane %v2004, %v2014
    %v2017 = vsel %vm33, %v1988, 0
    %v2020 = vsel %vm33, %v1989, 0
    %2022 = vmatprep.subr.mxu0 0.0
    %2023 = vmatpush1.msra.mxu0 %v1991
    %2024 = vmatprep.subr.mxu0 0.0
    %2025 = vmatpush1.msra.mxu0 %v1992
    %2026 = vmatprep.subr.mxu0 0.0
    %2027 = vmatpush1.msra.mxu0 %v1993
    %2028 = vmatprep.subr.mxu0 0.0
    %2029 = vmatpush1.msra.mxu0 %v1994
    %2030 = vmatprep.subr.mxu0 0.0
    %2031 = vmatpush1.msra.mxu0 0.0
    %2032 = vmatprep.subr.mxu0 0.0
    %2033 = vmatpush1.msra.mxu0 0.0
    %2034 = vmatprep.subr.mxu0 0.0
    %2035 = vmatpush1.msra.mxu0 0.0
    %2036 = vmatprep.subr.mxu0 0.0
    %2037 = vmatpush1.msra.mxu0 0.0
    %2038 = vmatprep.subr.mxu0 0.0
    %2039 = vmatpush1.msra.mxu0 0.0
    %2040 = vmatprep.subr.mxu0 0.0
    %2041 = vmatpush1.msra.mxu0 0.0
    %2042 = vmatprep.subr.mxu0 0.0
    %2043 = vmatpush1.msra.mxu0 0.0
    %2044 = vmatprep.subr.mxu0 0.0
    %2045 = vmatpush1.msra.mxu0 0.0
    %2046 = vmatprep.subr.mxu0 0.0
    %2047 = vmatpush1.msra.mxu0 0.0
    %2048 = vmatprep.subr.mxu0 0.0
    %2049 = vmatpush1.msra.mxu0 0.0
    %2050 = vmatprep.subr.mxu0 0.0
    %2051 = vmatpush1.msra.mxu0 0.0
    %2052 = vmatprep.subr.mxu0 0.0
    %2053 = vmatpush1.msra.mxu0 0.0
    %2054 = vmatprep.subr.mxu0 0.0
    %2055 = vmatpush1.msra.mxu0 0.0
    %2056 = vmatprep.subr.mxu0 0.0
    %2057 = vmatpush1.msra.mxu0 0.0
    %2058 = vmatprep.subr.mxu0 0.0
    %2059 = vmatpush1.msra.mxu0 0.0
    %2060 = vmatprep.subr.mxu0 0.0
    %2061 = vmatpush1.msra.mxu0 0.0
    %2062 = vmatprep.subr.mxu0 0.0
    %2063 = vmatpush1.msra.mxu0 0.0
    %2064 = vmatprep.subr.mxu0 0.0
    %2065 = vmatpush1.msra.mxu0 0.0
    %2066 = vmatprep.subr.mxu0 0.0
    %2067 = vmatpush1.msra.mxu0 0.0
    %2068 = vmatprep.subr.mxu0 0.0
    %2069 = vmatpush1.msra.mxu0 0.0
    %2070 = vmatprep.subr.mxu0 0.0
    %2071 = vmatpush1.msra.mxu0 0.0
    %2072 = vmatprep.subr.mxu0 0.0
    %2073 = vmatpush1.msra.mxu0 0.0
    %2074 = vmatprep.subr.mxu0 0.0
    %2075 = vmatpush1.msra.mxu0 0.0
    %2076 = vmatprep.subr.mxu0 0.0
    %2077 = vmatpush1.msra.mxu0 0.0
    %2078 = vmatprep.subr.mxu0 0.0
    %2079 = vmatpush1.msra.mxu0 0.0
    %2080 = vmatprep.subr.mxu0 0.0
    %2081 = vmatpush1.msra.mxu0 0.0
    %2082 = vmatprep.subr.mxu0 0.0
    %2083 = vmatpush1.msra.mxu0 0.0
    %2084 = vmatprep.subr.mxu0 0.0
    %2085 = vmatpush1.msra.mxu0 0.0
    %2086 = vmatprep.mubr.f32.mxu0 0.0
    %2087 = vmatmul.mubr.f32.gmra.mrb[0].mxu0 %v2017
    %v2088 = vpop.f32.mrb[0].mxu0
    %v2089 = vadd.f32 %v2015, %v2088
    %v2090 = vpop.f32.mrb[0].mxu0
    %2091 = vmatprep.mubr.f32.mxu0 0.0
    %2092 = vmatmul.mubr.f32.gmra.mrb[0].mxu0 %v2020
    %v2093 = vpop.f32.mrb[0].mxu0
    %v2094 = vadd.f32 %v2015, %v2093
    %v2095 = vpop.f32.mrb[0].mxu0
    %2096 = vdwg.mxu0
    %2099 = vrot.lane.b32.xlu0 %v2089, 104
    %v2100 = vpop.permute.xlu0 %2099
    %2101 = vrot.lane.b32.xlu0 %v2094, 104
    %v2102 = vpop.permute.xlu0 %2101
    %2103 = vrot.lane.b32.xlu0 %v2089, 80
    %v2104 = vpop.permute.xlu0 %2103
    %2105 = vrot.lane.b32.xlu0 %v2094, 80
    %v2106 = vpop.permute.xlu0 %2105
    %2107 = vrot.lane.b32.xlu0 %v2089, 56
    %v2108 = vpop.permute.xlu0 %2107
    %2109 = vrot.lane.b32.xlu0 %v2094, 56
    %v2110 = vpop.permute.xlu0 %2109
    %2111 = vrot.lane.b32.xlu0 %v2089, 120
    %v2112 = vpop.permute.xlu0 %2111
    %v2113 = vsel %vm245, %v2089, 0
    %v2115 = vsel %vm245, %v2112, 0
    %2117 = vmatprep.subr.mxu0 0.0
    %2118 = vmatpush1.xpose.msra.mxu0 %v2115
    %2119 = vmatprep.subr.mxu0 0.0
    %2120 = vmatpush1.xpose.msra.mxu0 0.0
    %2121 = vmatprep.subr.mxu0 0.0
    %2122 = vmatpush1.xpose.msra.mxu0 0.0
    %2123 = vmatprep.subr.mxu0 0.0
    %2124 = vmatpush1.xpose.msra.mxu0 0.0
    %2125 = vmatprep.subr.mxu0 0.0
    %2126 = vmatpush1.xpose.msra.mxu0 0.0
    %2127 = vmatprep.subr.mxu0 0.0
    %2128 = vmatpush1.xpose.msra.mxu0 0.0
    %2129 = vmatprep.subr.mxu0 0.0
    %2130 = vmatpush1.xpose.msra.mxu0 0.0
    %2131 = vmatprep.subr.mxu0 0.0
    %2132 = vmatpush1.xpose.msra.mxu0 0.0
    %2133 = vmatprep.subr.mxu0 0.0
    %2134 = vmatpush1.xpose.msra.mxu0 0.0
    %2135 = vmatprep.subr.mxu0 0.0
    %2136 = vmatpush1.xpose.msra.mxu0 0.0
    %2137 = vmatprep.subr.mxu0 0.0
    %2138 = vmatpush1.xpose.msra.mxu0 0.0
    %2139 = vmatprep.subr.mxu0 0.0
    %2140 = vmatpush1.xpose.msra.mxu0 0.0
    %2141 = vmatprep.subr.mxu0 0.0
    %2142 = vmatpush1.xpose.msra.mxu0 0.0
    %2143 = vmatprep.subr.mxu0 0.0
    %2144 = vmatpush1.xpose.msra.mxu0 0.0
    %2145 = vmatprep.subr.mxu0 0.0
    %2146 = vmatpush1.xpose.msra.mxu0 0.0
    %2147 = vmatprep.subr.mxu0 0.0
    %2148 = vmatpush1.xpose.msra.mxu0 0.0
    %2149 = vmatprep.subr.mxu0 0.0
    %2150 = vmatpush1.xpose.msra.mxu0 0.0
    %2151 = vmatprep.subr.mxu0 0.0
    %2152 = vmatpush1.xpose.msra.mxu0 0.0
    %2153 = vmatprep.subr.mxu0 0.0
    %2154 = vmatpush1.xpose.msra.mxu0 0.0
    %2155 = vmatprep.subr.mxu0 0.0
    %2156 = vmatpush1.xpose.msra.mxu0 0.0
    %2157 = vmatprep.subr.mxu0 0.0
    %2158 = vmatpush1.xpose.msra.mxu0 0.0
    %2159 = vmatprep.subr.mxu0 0.0
    %2160 = vmatpush1.xpose.msra.mxu0 0.0
    %2161 = vmatprep.subr.mxu0 0.0
    %2162 = vmatpush1.xpose.msra.mxu0 0.0
    %2163 = vmatprep.subr.mxu0 0.0
    %2164 = vmatpush1.xpose.msra.mxu0 0.0
    %2165 = vmatprep.subr.mxu0 0.0
    %2166 = vmatpush1.xpose.msra.mxu0 0.0
    %2167 = vmatprep.subr.mxu0 0.0
    %2168 = vmatpush1.xpose.msra.mxu0 0.0
    %2169 = vmatprep.subr.mxu0 0.0
    %2170 = vmatpush1.xpose.msra.mxu0 0.0
    %2171 = vmatprep.subr.mxu0 0.0
    %2172 = vmatpush1.xpose.msra.mxu0 0.0
    %2173 = vmatprep.subr.mxu0 0.0
    %2174 = vmatpush1.xpose.msra.mxu0 0.0
    %2175 = vmatprep.subr.mxu0 0.0
    %2176 = vmatpush1.xpose.msra.mxu0 0.0
    %2177 = vmatprep.subr.mxu0 0.0
    %2178 = vmatpush1.xpose.msra.mxu0 0.0
    %2179 = vmatprep.subr.mxu0 0.0
    %2180 = vmatpush1.xpose.msra.mxu0 0.0
    %2181 = vmatprep.mubr.f32.mxu0 0.0
    %2182 = vmatmul.mubr.f32.gmra.mrb[0].mxu0 %v2113
    %v2183 = vpop.f32.mrb[0].mxu0
    %v2184 = vadd.f32 %v206, %v2183
    %v2185 = vpop.f32.mrb[0].mxu0
    %2186 = vdwg.mxu0
    %2187 = vrot.lane.b32.xlu0 %v2094, 120
    %v2188 = vpop.permute.xlu0 %2187
    %v2189 = vsel %vm245, %v2094, 0
    %v2191 = vsel %vm245, %v2188, 0
    %2193 = vmatprep.subr.mxu0 0.0
    %2194 = vmatpush1.xpose.msra.mxu0 %v2191
    %2195 = vmatprep.subr.mxu0 0.0
    %2196 = vmatpush1.xpose.msra.mxu0 0.0
    %2197 = vmatprep.subr.mxu0 0.0
    %2198 = vmatpush1.xpose.msra.mxu0 0.0
    %2199 = vmatprep.subr.mxu0 0.0
    %2200 = vmatpush1.xpose.msra.mxu0 0.0
    %2201 = vmatprep.subr.mxu0 0.0
    %2202 = vmatpush1.xpose.msra.mxu0 0.0
    %2203 = vmatprep.subr.mxu0 0.0
    %2204 = vmatpush1.xpose.msra.mxu0 0.0
    %2205 = vmatprep.subr.mxu0 0.0
    %2206 = vmatpush1.xpose.msra.mxu0 0.0
    %2207 = vmatprep.subr.mxu0 0.0
    %2208 = vmatpush1.xpose.msra.mxu0 0.0
    %2209 = vmatprep.subr.mxu0 0.0
    %2210 = vmatpush1.xpose.msra.mxu0 0.0
    %2211 = vmatprep.subr.mxu0 0.0
    %2212 = vmatpush1.xpose.msra.mxu0 0.0
    %2213 = vmatprep.subr.mxu0 0.0
    %2214 = vmatpush1.xpose.msra.mxu0 0.0
    %2215 = vmatprep.subr.mxu0 0.0
    %2216 = vmatpush1.xpose.msra.mxu0 0.0
    %2217 = vmatprep.subr.mxu0 0.0
    %2218 = vmatpush1.xpose.msra.mxu0 0.0
    %2219 = vmatprep.subr.mxu0 0.0
    %2220 = vmatpush1.xpose.msra.mxu0 0.0
    %2221 = vmatprep.subr.mxu0 0.0
    %2222 = vmatpush1.xpose.msra.mxu0 0.0
    %2223 = vmatprep.subr.mxu0 0.0
    %2224 = vmatpush1.xpose.msra.mxu0 0.0
    %2225 = vmatprep.subr.mxu0 0.0
    %2226 = vmatpush1.xpose.msra.mxu0 0.0
    %2227 = vmatprep.subr.mxu0 0.0
    %2228 = vmatpush1.xpose.msra.mxu0 0.0
    %2229 = vmatprep.subr.mxu0 0.0
    %2230 = vmatpush1.xpose.msra.mxu0 0.0
    %2231 = vmatprep.subr.mxu0 0.0
    %2232 = vmatpush1.xpose.msra.mxu0 0.0
    %2233 = vmatprep.subr.mxu0 0.0
    %2234 = vmatpush1.xpose.msra.mxu0 0.0
    %2235 = vmatprep.subr.mxu0 0.0
    %2236 = vmatpush1.xpose.msra.mxu0 0.0
    %2237 = vmatprep.subr.mxu0 0.0
    %2238 = vmatpush1.xpose.msra.mxu0 0.0
    %2239 = vmatprep.subr.mxu0 0.0
    %2240 = vmatpush1.xpose.msra.mxu0 0.0
    %2241 = vmatprep.subr.mxu0 0.0
    %2242 = vmatpush1.xpose.msra.mxu0 0.0
    %2243 = vmatprep.subr.mxu0 0.0
    %2244 = vmatpush1.xpose.msra.mxu0 0.0
    %2245 = vmatprep.subr.mxu0 0.0
    %2246 = vmatpush1.xpose.msra.mxu0 0.0
    %2247 = vmatprep.subr.mxu0 0.0
    %2248 = vmatpush1.xpose.msra.mxu0 0.0
    %2249 = vmatprep.subr.mxu0 0.0
    %2250 = vmatpush1.xpose.msra.mxu0 0.0
    %2251 = vmatprep.subr.mxu0 0.0
    %2252 = vmatpush1.xpose.msra.mxu0 0.0
    %2253 = vmatprep.subr.mxu0 0.0
    %2254 = vmatpush1.xpose.msra.mxu0 0.0
    %2255 = vmatprep.subr.mxu0 0.0
    %2256 = vmatpush1.xpose.msra.mxu0 0.0
    %2257 = vmatprep.mubr.f32.mxu0 0.0
    %2258 = vmatmul.mubr.f32.gmra.mrb[0].mxu0 %v2189
    %v2259 = vpop.f32.mrb[0].mxu0
    %v2260 = vadd.f32 %v210, %v2259
    %v2261 = vpop.f32.mrb[0].mxu0
    %2262 = vdwg.mxu0
    %2263 = vrot.lane.b32.xlu0 %v2100, 120
    %v2264 = vpop.permute.xlu0 %2263
    %v2265 = vsel %vm245, %v2100, 0
    %v2267 = vsel %vm245, %v2264, 0
    %2269 = vmatprep.subr.mxu0 0.0
    %2270 = vmatpush1.xpose.msra.mxu0 %v2267
    %2271 = vmatprep.subr.mxu0 0.0
    %2272 = vmatpush1.xpose.msra.mxu0 0.0
    %2273 = vmatprep.subr.mxu0 0.0
    %2274 = vmatpush1.xpose.msra.mxu0 0.0
    %2275 = vmatprep.subr.mxu0 0.0
    %2276 = vmatpush1.xpose.msra.mxu0 0.0
    %2277 = vmatprep.subr.mxu0 0.0
    %2278 = vmatpush1.xpose.msra.mxu0 0.0
    %2279 = vmatprep.subr.mxu0 0.0
    %2280 = vmatpush1.xpose.msra.mxu0 0.0
    %2281 = vmatprep.subr.mxu0 0.0
    %2282 = vmatpush1.xpose.msra.mxu0 0.0
    %2283 = vmatprep.subr.mxu0 0.0
    %2284 = vmatpush1.xpose.msra.mxu0 0.0
    %2285 = vmatprep.subr.mxu0 0.0
    %2286 = vmatpush1.xpose.msra.mxu0 0.0
    %2287 = vmatprep.subr.mxu0 0.0
    %2288 = vmatpush1.xpose.msra.mxu0 0.0
    %2289 = vmatprep.subr.mxu0 0.0
    %2290 = vmatpush1.xpose.msra.mxu0 0.0
    %2291 = vmatprep.subr.mxu0 0.0
    %2292 = vmatpush1.xpose.msra.mxu0 0.0
    %2293 = vmatprep.subr.mxu0 0.0
    %2294 = vmatpush1.xpose.msra.mxu0 0.0
    %2295 = vmatprep.subr.mxu0 0.0
    %2296 = vmatpush1.xpose.msra.mxu0 0.0
    %2297 = vmatprep.subr.mxu0 0.0
    %2298 = vmatpush1.xpose.msra.mxu0 0.0
    %2299 = vmatprep.subr.mxu0 0.0
    %2300 = vmatpush1.xpose.msra.mxu0 0.0
    %2301 = vmatprep.subr.mxu0 0.0
    %2302 = vmatpush1.xpose.msra.mxu0 0.0
    %2303 = vmatprep.subr.mxu0 0.0
    %2304 = vmatpush1.xpose.msra.mxu0 0.0
    %2305 = vmatprep.subr.mxu0 0.0
    %2306 = vmatpush1.xpose.msra.mxu0 0.0
    %2307 = vmatprep.subr.mxu0 0.0
    %2308 = vmatpush1.xpose.msra.mxu0 0.0
    %2309 = vmatprep.subr.mxu0 0.0
    %2310 = vmatpush1.xpose.msra.mxu0 0.0
    %2311 = vmatprep.subr.mxu0 0.0
    %2312 = vmatpush1.xpose.msra.mxu0 0.0
    %2313 = vmatprep.subr.mxu0 0.0
    %2314 = vmatpush1.xpose.msra.mxu0 0.0
    %2315 = vmatprep.subr.mxu0 0.0
    %2316 = vmatpush1.xpose.msra.mxu0 0.0
    %2317 = vmatprep.subr.mxu0 0.0
    %2318 = vmatpush1.xpose.msra.mxu0 0.0
    %2319 = vmatprep.subr.mxu0 0.0
    %2320 = vmatpush1.xpose.msra.mxu0 0.0
    %2321 = vmatprep.subr.mxu0 0.0
    %2322 = vmatpush1.xpose.msra.mxu0 0.0
    %2323 = vmatprep.subr.mxu0 0.0
    %2324 = vmatpush1.xpose.msra.mxu0 0.0
    %2325 = vmatprep.subr.mxu0 0.0
    %2326 = vmatpush1.xpose.msra.mxu0 0.0
    %2327 = vmatprep.subr.mxu0 0.0
    %2328 = vmatpush1.xpose.msra.mxu0 0.0
    %2329 = vmatprep.subr.mxu0 0.0
    %2330 = vmatpush1.xpose.msra.mxu0 0.0
    %2331 = vmatprep.subr.mxu0 0.0
    %2332 = vmatpush1.xpose.msra.mxu0 0.0
    %2333 = vmatprep.mubr.f32.mxu0 0.0
    %2334 = vmatmul.mubr.f32.gmra.mrb[0].mxu0 %v2265
    %v2335 = vpop.f32.mrb[0].mxu0
    %v2336 = vadd.f32 %v214, %v2335
    %v2337 = vpop.f32.mrb[0].mxu0
    %2338 = vdwg.mxu0
    %2339 = vrot.lane.b32.xlu0 %v2102, 120
    %v2340 = vpop.permute.xlu0 %2339
    %v2341 = vsel %vm245, %v2102, 0
    %v2343 = vsel %vm245, %v2340, 0
    %2345 = vmatprep.subr.mxu0 0.0
    %2346 = vmatpush1.xpose.msra.mxu0 %v2343
    %2347 = vmatprep.subr.mxu0 0.0
    %2348 = vmatpush1.xpose.msra.mxu0 0.0
    %2349 = vmatprep.subr.mxu0 0.0
    %2350 = vmatpush1.xpose.msra.mxu0 0.0
    %2351 = vmatprep.subr.mxu0 0.0
    %2352 = vmatpush1.xpose.msra.mxu0 0.0
    %2353 = vmatprep.subr.mxu0 0.0
    %2354 = vmatpush1.xpose.msra.mxu0 0.0
    %2355 = vmatprep.subr.mxu0 0.0
    %2356 = vmatpush1.xpose.msra.mxu0 0.0
    %2357 = vmatprep.subr.mxu0 0.0
    %2358 = vmatpush1.xpose.msra.mxu0 0.0
    %2359 = vmatprep.subr.mxu0 0.0
    %2360 = vmatpush1.xpose.msra.mxu0 0.0
    %2361 = vmatprep.subr.mxu0 0.0
    %2362 = vmatpush1.xpose.msra.mxu0 0.0
    %2363 = vmatprep.subr.mxu0 0.0
    %2364 = vmatpush1.xpose.msra.mxu0 0.0
    %2365 = vmatprep.subr.mxu0 0.0
    %2366 = vmatpush1.xpose.msra.mxu0 0.0
    %2367 = vmatprep.subr.mxu0 0.0
    %2368 = vmatpush1.xpose.msra.mxu0 0.0
    %2369 = vmatprep.subr.mxu0 0.0
    %2370 = vmatpush1.xpose.msra.mxu0 0.0
    %2371 = vmatprep.subr.mxu0 0.0
    %2372 = vmatpush1.xpose.msra.mxu0 0.0
    %2373 = vmatprep.subr.mxu0 0.0
    %2374 = vmatpush1.xpose.msra.mxu0 0.0
    %2375 = vmatprep.subr.mxu0 0.0
    %2376 = vmatpush1.xpose.msra.mxu0 0.0
    %2377 = vmatprep.subr.mxu0 0.0
    %2378 = vmatpush1.xpose.msra.mxu0 0.0
    %2379 = vmatprep.subr.mxu0 0.0
    %2380 = vmatpush1.xpose.msra.mxu0 0.0
    %2381 = vmatprep.subr.mxu0 0.0
    %2382 = vmatpush1.xpose.msra.mxu0 0.0
    %2383 = vmatprep.subr.mxu0 0.0
    %2384 = vmatpush1.xpose.msra.mxu0 0.0
    %2385 = vmatprep.subr.mxu0 0.0
    %2386 = vmatpush1.xpose.msra.mxu0 0.0
    %2387 = vmatprep.subr.mxu0 0.0
    %2388 = vmatpush1.xpose.msra.mxu0 0.0
    %2389 = vmatprep.subr.mxu0 0.0
    %2390 = vmatpush1.xpose.msra.mxu0 0.0
    %2391 = vmatprep.subr.mxu0 0.0
    %2392 = vmatpush1.xpose.msra.mxu0 0.0
    %2393 = vmatprep.subr.mxu0 0.0
    %2394 = vmatpush1.xpose.msra.mxu0 0.0
    %2395 = vmatprep.subr.mxu0 0.0
    %2396 = vmatpush1.xpose.msra.mxu0 0.0
    %2397 = vmatprep.subr.mxu0 0.0
    %2398 = vmatpush1.xpose.msra.mxu0 0.0
    %2399 = vmatprep.subr.mxu0 0.0
    %2400 = vmatpush1.xpose.msra.mxu0 0.0
    %2401 = vmatprep.subr.mxu0 0.0
    %2402 = vmatpush1.xpose.msra.mxu0 0.0
    %2403 = vmatprep.subr.mxu0 0.0
    %2404 = vmatpush1.xpose.msra.mxu0 0.0
    %2405 = vmatprep.subr.mxu0 0.0
    %2406 = vmatpush1.xpose.msra.mxu0 0.0
    %2407 = vmatprep.subr.mxu0 0.0
    %2408 = vmatpush1.xpose.msra.mxu0 0.0
    %2409 = vmatprep.mubr.f32.mxu0 0.0
    %2410 = vmatmul.mubr.f32.gmra.mrb[0].mxu0 %v2341
    %v2411 = vpop.f32.mrb[0].mxu0
    %v2412 = vadd.f32 %v218, %v2411
    %v2413 = vpop.f32.mrb[0].mxu0
    %2414 = vdwg.mxu0
    %2415 = vrot.lane.b32.xlu0 %v2104, 120
    %v2416 = vpop.permute.xlu0 %2415
    %v2417 = vsel %vm245, %v2104, 0
    %v2419 = vsel %vm245, %v2416, 0
    %2421 = vmatprep.subr.mxu0 0.0
    %2422 = vmatpush1.xpose.msra.mxu0 %v2419
    %2423 = vmatprep.subr.mxu0 0.0
    %2424 = vmatpush1.xpose.msra.mxu0 0.0
    %2425 = vmatprep.subr.mxu0 0.0
    %2426 = vmatpush1.xpose.msra.mxu0 0.0
    %2427 = vmatprep.subr.mxu0 0.0
    %2428 = vmatpush1.xpose.msra.mxu0 0.0
    %2429 = vmatprep.subr.mxu0 0.0
    %2430 = vmatpush1.xpose.msra.mxu0 0.0
    %2431 = vmatprep.subr.mxu0 0.0
    %2432 = vmatpush1.xpose.msra.mxu0 0.0
    %2433 = vmatprep.subr.mxu0 0.0
    %2434 = vmatpush1.xpose.msra.mxu0 0.0
    %2435 = vmatprep.subr.mxu0 0.0
    %2436 = vmatpush1.xpose.msra.mxu0 0.0
    %2437 = vmatprep.subr.mxu0 0.0
    %2438 = vmatpush1.xpose.msra.mxu0 0.0
    %2439 = vmatprep.subr.mxu0 0.0
    %2440 = vmatpush1.xpose.msra.mxu0 0.0
    %2441 = vmatprep.subr.mxu0 0.0
    %2442 = vmatpush1.xpose.msra.mxu0 0.0
    %2443 = vmatprep.subr.mxu0 0.0
    %2444 = vmatpush1.xpose.msra.mxu0 0.0
    %2445 = vmatprep.subr.mxu0 0.0
    %2446 = vmatpush1.xpose.msra.mxu0 0.0
    %2447 = vmatprep.subr.mxu0 0.0
    %2448 = vmatpush1.xpose.msra.mxu0 0.0
    %2449 = vmatprep.subr.mxu0 0.0
    %2450 = vmatpush1.xpose.msra.mxu0 0.0
    %2451 = vmatprep.subr.mxu0 0.0
    %2452 = vmatpush1.xpose.msra.mxu0 0.0
    %2453 = vmatprep.subr.mxu0 0.0
    %2454 = vmatpush1.xpose.msra.mxu0 0.0
    %2455 = vmatprep.subr.mxu0 0.0
    %2456 = vmatpush1.xpose.msra.mxu0 0.0
    %2457 = vmatprep.subr.mxu0 0.0
    %2458 = vmatpush1.xpose.msra.mxu0 0.0
    %2459 = vmatprep.subr.mxu0 0.0
    %2460 = vmatpush1.xpose.msra.mxu0 0.0
    %2461 = vmatprep.subr.mxu0 0.0
    %2462 = vmatpush1.xpose.msra.mxu0 0.0
    %2463 = vmatprep.subr.mxu0 0.0
    %2464 = vmatpush1.xpose.msra.mxu0 0.0
    %2465 = vmatprep.subr.mxu0 0.0
    %2466 = vmatpush1.xpose.msra.mxu0 0.0
    %2467 = vmatprep.subr.mxu0 0.0
    %2468 = vmatpush1.xpose.msra.mxu0 0.0
    %2469 = vmatprep.subr.mxu0 0.0
    %2470 = vmatpush1.xpose.msra.mxu0 0.0
    %2471 = vmatprep.subr.mxu0 0.0
    %2472 = vmatpush1.xpose.msra.mxu0 0.0
    %2473 = vmatprep.subr.mxu0 0.0
    %2474 = vmatpush1.xpose.msra.mxu0 0.0
    %2475 = vmatprep.subr.mxu0 0.0
    %2476 = vmatpush1.xpose.msra.mxu0 0.0
    %2477 = vmatprep.subr.mxu0 0.0
    %2478 = vmatpush1.xpose.msra.mxu0 0.0
    %2479 = vmatprep.subr.mxu0 0.0
    %2480 = vmatpush1.xpose.msra.mxu0 0.0
    %2481 = vmatprep.subr.mxu0 0.0
    %2482 = vmatpush1.xpose.msra.mxu0 0.0
    %2483 = vmatprep.subr.mxu0 0.0
    %2484 = vmatpush1.xpose.msra.mxu0 0.0
    %2485 = vmatprep.mubr.f32.mxu0 0.0
    %2486 = vmatmul.mubr.f32.gmra.mrb[0].mxu0 %v2417
    %v2487 = vpop.f32.mrb[0].mxu0
    %v2488 = vadd.f32 %v222, %v2487
    %v2489 = vpop.f32.mrb[0].mxu0
    %2490 = vdwg.mxu0
    %2491 = vrot.lane.b32.xlu0 %v2106, 120
    %v2492 = vpop.permute.xlu0 %2491
    %v2493 = vsel %vm245, %v2106, 0
    %v2495 = vsel %vm245, %v2492, 0
    %2497 = vmatprep.subr.mxu0 0.0
    %2498 = vmatpush1.xpose.msra.mxu0 %v2495
    %2499 = vmatprep.subr.mxu0 0.0
    %2500 = vmatpush1.xpose.msra.mxu0 0.0
    %2501 = vmatprep.subr.mxu0 0.0
    %2502 = vmatpush1.xpose.msra.mxu0 0.0
    %2503 = vmatprep.subr.mxu0 0.0
    %2504 = vmatpush1.xpose.msra.mxu0 0.0
    %2505 = vmatprep.subr.mxu0 0.0
    %2506 = vmatpush1.xpose.msra.mxu0 0.0
    %2507 = vmatprep.subr.mxu0 0.0
    %2508 = vmatpush1.xpose.msra.mxu0 0.0
    %2509 = vmatprep.subr.mxu0 0.0
    %2510 = vmatpush1.xpose.msra.mxu0 0.0
    %2511 = vmatprep.subr.mxu0 0.0
    %2512 = vmatpush1.xpose.msra.mxu0 0.0
    %2513 = vmatprep.subr.mxu0 0.0
    %2514 = vmatpush1.xpose.msra.mxu0 0.0
    %2515 = vmatprep.subr.mxu0 0.0
    %2516 = vmatpush1.xpose.msra.mxu0 0.0
    %2517 = vmatprep.subr.mxu0 0.0
    %2518 = vmatpush1.xpose.msra.mxu0 0.0
    %2519 = vmatprep.subr.mxu0 0.0
    %2520 = vmatpush1.xpose.msra.mxu0 0.0
    %2521 = vmatprep.subr.mxu0 0.0
    %2522 = vmatpush1.xpose.msra.mxu0 0.0
    %2523 = vmatprep.subr.mxu0 0.0
    %2524 = vmatpush1.xpose.msra.mxu0 0.0
    %2525 = vmatprep.subr.mxu0 0.0
    %2526 = vmatpush1.xpose.msra.mxu0 0.0
    %2527 = vmatprep.subr.mxu0 0.0
    %2528 = vmatpush1.xpose.msra.mxu0 0.0
    %2529 = vmatprep.subr.mxu0 0.0
    %2530 = vmatpush1.xpose.msra.mxu0 0.0
    %2531 = vmatprep.subr.mxu0 0.0
    %2532 = vmatpush1.xpose.msra.mxu0 0.0
    %2533 = vmatprep.subr.mxu0 0.0
    %2534 = vmatpush1.xpose.msra.mxu0 0.0
    %2535 = vmatprep.subr.mxu0 0.0
    %2536 = vmatpush1.xpose.msra.mxu0 0.0
    %2537 = vmatprep.subr.mxu0 0.0
    %2538 = vmatpush1.xpose.msra.mxu0 0.0
    %2539 = vmatprep.subr.mxu0 0.0
    %2540 = vmatpush1.xpose.msra.mxu0 0.0
    %2541 = vmatprep.subr.mxu0 0.0
    %2542 = vmatpush1.xpose.msra.mxu0 0.0
    %2543 = vmatprep.subr.mxu0 0.0
    %2544 = vmatpush1.xpose.msra.mxu0 0.0
    %2545 = vmatprep.subr.mxu0 0.0
    %2546 = vmatpush1.xpose.msra.mxu0 0.0
    %2547 = vmatprep.subr.mxu0 0.0
    %2548 = vmatpush1.xpose.msra.mxu0 0.0
    %2549 = vmatprep.subr.mxu0 0.0
    %2550 = vmatpush1.xpose.msra.mxu0 0.0
    %2551 = vmatprep.subr.mxu0 0.0
    %2552 = vmatpush1.xpose.msra.mxu0 0.0
    %2553 = vmatprep.subr.mxu0 0.0
    %2554 = vmatpush1.xpose.msra.mxu0 0.0
    %2555 = vmatprep.subr.mxu0 0.0
    %2556 = vmatpush1.xpose.msra.mxu0 0.0
    %2557 = vmatprep.subr.mxu0 0.0
    %2558 = vmatpush1.xpose.msra.mxu0 0.0
    %2559 = vmatprep.subr.mxu0 0.0
    %2560 = vmatpush1.xpose.msra.mxu0 0.0
    %2561 = vmatprep.mubr.f32.mxu0 0.0
    %2562 = vmatmul.mubr.f32.gmra.mrb[0].mxu0 %v2493
    %v2563 = vpop.f32.mrb[0].mxu0
    %v2564 = vadd.f32 %v226, %v2563
    %v2565 = vpop.f32.mrb[0].mxu0
    %2566 = vdwg.mxu0
    %2567 = vrot.lane.b32.xlu0 %v2108, 120
    %v2568 = vpop.permute.xlu0 %2567
    %v2569 = vsel %vm245, %v2108, 0
    %v2571 = vsel %vm245, %v2568, 0
    %2573 = vmatprep.subr.mxu0 0.0
    %2574 = vmatpush1.xpose.msra.mxu0 %v2571
    %2575 = vmatprep.subr.mxu0 0.0
    %2576 = vmatpush1.xpose.msra.mxu0 0.0
    %2577 = vmatprep.subr.mxu0 0.0
    %2578 = vmatpush1.xpose.msra.mxu0 0.0
    %2579 = vmatprep.subr.mxu0 0.0
    %2580 = vmatpush1.xpose.msra.mxu0 0.0
    %2581 = vmatprep.subr.mxu0 0.0
    %2582 = vmatpush1.xpose.msra.mxu0 0.0
    %2583 = vmatprep.subr.mxu0 0.0
    %2584 = vmatpush1.xpose.msra.mxu0 0.0
    %2585 = vmatprep.subr.mxu0 0.0
    %2586 = vmatpush1.xpose.msra.mxu0 0.0
    %2587 = vmatprep.subr.mxu0 0.0
    %2588 = vmatpush1.xpose.msra.mxu0 0.0
    %2589 = vmatprep.subr.mxu0 0.0
    %2590 = vmatpush1.xpose.msra.mxu0 0.0
    %2591 = vmatprep.subr.mxu0 0.0
    %2592 = vmatpush1.xpose.msra.mxu0 0.0
    %2593 = vmatprep.subr.mxu0 0.0
    %2594 = vmatpush1.xpose.msra.mxu0 0.0
    %2595 = vmatprep.subr.mxu0 0.0
    %2596 = vmatpush1.xpose.msra.mxu0 0.0
    %2597 = vmatprep.subr.mxu0 0.0
    %2598 = vmatpush1.xpose.msra.mxu0 0.0
    %2599 = vmatprep.subr.mxu0 0.0
    %2600 = vmatpush1.xpose.msra.mxu0 0.0
    %2601 = vmatprep.subr.mxu0 0.0
    %2602 = vmatpush1.xpose.msra.mxu0 0.0
    %2603 = vmatprep.subr.mxu0 0.0
    %2604 = vmatpush1.xpose.msra.mxu0 0.0
    %2605 = vmatprep.subr.mxu0 0.0
    %2606 = vmatpush1.xpose.msra.mxu0 0.0
    %2607 = vmatprep.subr.mxu0 0.0
    %2608 = vmatpush1.xpose.msra.mxu0 0.0
    %2609 = vmatprep.subr.mxu0 0.0
    %2610 = vmatpush1.xpose.msra.mxu0 0.0
    %2611 = vmatprep.subr.mxu0 0.0
    %2612 = vmatpush1.xpose.msra.mxu0 0.0
    %2613 = vmatprep.subr.mxu0 0.0
    %2614 = vmatpush1.xpose.msra.mxu0 0.0
    %2615 = vmatprep.subr.mxu0 0.0
    %2616 = vmatpush1.xpose.msra.mxu0 0.0
    %2617 = vmatprep.subr.mxu0 0.0
    %2618 = vmatpush1.xpose.msra.mxu0 0.0
    %2619 = vmatprep.subr.mxu0 0.0
    %2620 = vmatpush1.xpose.msra.mxu0 0.0
    %2621 = vmatprep.subr.mxu0 0.0
    %2622 = vmatpush1.xpose.msra.mxu0 0.0
    %2623 = vmatprep.subr.mxu0 0.0
    %2624 = vmatpush1.xpose.msra.mxu0 0.0
    %2625 = vmatprep.subr.mxu0 0.0
    %2626 = vmatpush1.xpose.msra.mxu0 0.0
    %2627 = vmatprep.subr.mxu0 0.0
    %2628 = vmatpush1.xpose.msra.mxu0 0.0
    %2629 = vmatprep.subr.mxu0 0.0
    %2630 = vmatpush1.xpose.msra.mxu0 0.0
    %2631 = vmatprep.subr.mxu0 0.0
    %2632 = vmatpush1.xpose.msra.mxu0 0.0
    %2633 = vmatprep.subr.mxu0 0.0
    %2634 = vmatpush1.xpose.msra.mxu0 0.0
    %2635 = vmatprep.subr.mxu0 0.0
    %2636 = vmatpush1.xpose.msra.mxu0 0.0
    %2637 = vmatprep.mubr.f32.mxu0 0.0
    %2638 = vmatmul.mubr.f32.gmra.mrb[0].mxu0 %v2569
    %v2639 = vpop.f32.mrb[0].mxu0
    %v2640 = vadd.f32 %v230, %v2639
    %v2641 = vpop.f32.mrb[0].mxu0
    %2642 = vdwg.mxu0
    %2643 = vrot.lane.b32.xlu0 %v2110, 120
    %v2644 = vpop.permute.xlu0 %2643
    %v2645 = vsel %vm245, %v2110, 0
    %v2647 = vsel %vm245, %v2644, 0
    %2649 = vmatprep.subr.mxu0 0.0
    %2650 = vmatpush1.xpose.msra.mxu0 %v2647
    %2651 = vmatprep.subr.mxu0 0.0
    %2652 = vmatpush1.xpose.msra.mxu0 0.0
    %2653 = vmatprep.subr.mxu0 0.0
    %2654 = vmatpush1.xpose.msra.mxu0 0.0
    %2655 = vmatprep.subr.mxu0 0.0
    %2656 = vmatpush1.xpose.msra.mxu0 0.0
    %2657 = vmatprep.subr.mxu0 0.0
    %2658 = vmatpush1.xpose.msra.mxu0 0.0
    %2659 = vmatprep.subr.mxu0 0.0
    %2660 = vmatpush1.xpose.msra.mxu0 0.0
    %2661 = vmatprep.subr.mxu0 0.0
    %2662 = vmatpush1.xpose.msra.mxu0 0.0
    %2663 = vmatprep.subr.mxu0 0.0
    %2664 = vmatpush1.xpose.msra.mxu0 0.0
    %2665 = vmatprep.subr.mxu0 0.0
    %2666 = vmatpush1.xpose.msra.mxu0 0.0
    %2667 = vmatprep.subr.mxu0 0.0
    %2668 = vmatpush1.xpose.msra.mxu0 0.0
    %2669 = vmatprep.subr.mxu0 0.0
    %2670 = vmatpush1.xpose.msra.mxu0 0.0
    %2671 = vmatprep.subr.mxu0 0.0
    %2672 = vmatpush1.xpose.msra.mxu0 0.0
    %2673 = vmatprep.subr.mxu0 0.0
    %2674 = vmatpush1.xpose.msra.mxu0 0.0
    %2675 = vmatprep.subr.mxu0 0.0
    %2676 = vmatpush1.xpose.msra.mxu0 0.0
    %2677 = vmatprep.subr.mxu0 0.0
    %2678 = vmatpush1.xpose.msra.mxu0 0.0
    %2679 = vmatprep.subr.mxu0 0.0
    %2680 = vmatpush1.xpose.msra.mxu0 0.0
    %2681 = vmatprep.subr.mxu0 0.0
    %2682 = vmatpush1.xpose.msra.mxu0 0.0
    %2683 = vmatprep.subr.mxu0 0.0
    %2684 = vmatpush1.xpose.msra.mxu0 0.0
    %2685 = vmatprep.subr.mxu0 0.0
    %2686 = vmatpush1.xpose.msra.mxu0 0.0
    %2687 = vmatprep.subr.mxu0 0.0
    %2688 = vmatpush1.xpose.msra.mxu0 0.0
    %2689 = vmatprep.subr.mxu0 0.0
    %2690 = vmatpush1.xpose.msra.mxu0 0.0
    %2691 = vmatprep.subr.mxu0 0.0
    %2692 = vmatpush1.xpose.msra.mxu0 0.0
    %2693 = vmatprep.subr.mxu0 0.0
    %2694 = vmatpush1.xpose.msra.mxu0 0.0
    %2695 = vmatprep.subr.mxu0 0.0
    %2696 = vmatpush1.xpose.msra.mxu0 0.0
    %2697 = vmatprep.subr.mxu0 0.0
    %2698 = vmatpush1.xpose.msra.mxu0 0.0
    %2699 = vmatprep.subr.mxu0 0.0
    %2700 = vmatpush1.xpose.msra.mxu0 0.0
    %2701 = vmatprep.subr.mxu0 0.0
    %2702 = vmatpush1.xpose.msra.mxu0 0.0
    %2703 = vmatprep.subr.mxu0 0.0
    %2704 = vmatpush1.xpose.msra.mxu0 0.0
    %2705 = vmatprep.subr.mxu0 0.0
    %2706 = vmatpush1.xpose.msra.mxu0 0.0
    %2707 = vmatprep.subr.mxu0 0.0
    %2708 = vmatpush1.xpose.msra.mxu0 0.0
    %2709 = vmatprep.subr.mxu0 0.0
    %2710 = vmatpush1.xpose.msra.mxu0 0.0
    %2711 = vmatprep.subr.mxu0 0.0
    %2712 = vmatpush1.xpose.msra.mxu0 0.0
    %2713 = vmatprep.mubr.f32.mxu0 0.0
    %2714 = vmatmul.mubr.f32.gmra.mrb[0].mxu0 %v2645
    %v2715 = vpop.f32.mrb[0].mxu0
    %v2716 = vadd.f32 %v234, %v2715
    %v2717 = vpop.f32.mrb[0].mxu0
    %2718 = vdwg.mxu0
    %v2719 = vsel %vm245, %v2184, -inf
    %2720 = vmax.xlane.f32.xlu0 %v2719
    %v2721 = vpop.xlane.xlu0 %2720
    %v2722 = vsel %vm245, %v2260, -inf
    %2723 = vmax.xlane.f32.xlu0 %v2722
    %v2724 = vpop.xlane.xlu0 %2723
    %v2725 = vsel %vm245, %v2336, -inf
    %2726 = vmax.xlane.f32.xlu0 %v2725
    %v2727 = vpop.xlane.xlu0 %2726
    %v2728 = vsel %vm245, %v2412, -inf
    %2729 = vmax.xlane.f32.xlu0 %v2728
    %v2730 = vpop.xlane.xlu0 %2729
    %v2731 = vsel %vm245, %v2488, -inf
    %2732 = vmax.xlane.f32.xlu0 %v2731
    %v2733 = vpop.xlane.xlu0 %2732
    %v2734 = vsel %vm245, %v2564, -inf
    %2735 = vmax.xlane.f32.xlu0 %v2734
    %v2736 = vpop.xlane.xlu0 %2735
    %v2737 = vsel %vm245, %v2640, -inf
    %2738 = vmax.xlane.f32.xlu0 %v2737
    %v2739 = vpop.xlane.xlu0 %2738
    %v2740 = vsel %vm245, %v2716, -inf
    %2741 = vmax.xlane.f32.xlu0 %v2740
    %v2742 = vpop.xlane.xlu0 %2741
    %v2743 = vsub.f32 %v2184, %v2721
    %v2744 = vsub.f32 %v2260, %v2724
    %v2745 = vsub.f32 %v2336, %v2727
    %v2746 = vsub.f32 %v2412, %v2730
    %v2747 = vsub.f32 %v2488, %v2733
    %v2748 = vsub.f32 %v2564, %v2736
    %v2749 = vsub.f32 %v2640, %v2739
    %v2750 = vsub.f32 %v2716, %v2742
    %v2751 = vmul.f32 %v2743, 1.442695
    %v2752 = vpow.pop %v2751
    %v2753 = vmul.f32 %v2744, 1.442695
    %v2754 = vpow.pop %v2753
    %v2755 = vmul.f32 %v2745, 1.442695
    %v2756 = vpow.pop %v2755
    %v2757 = vmul.f32 %v2746, 1.442695
    %v2758 = vpow.pop %v2757
    %v2759 = vmul.f32 %v2747, 1.442695
    %v2760 = vpow.pop %v2759
    %v2761 = vmul.f32 %v2748, 1.442695
    %v2762 = vpow.pop %v2761
    %v2763 = vmul.f32 %v2749, 1.442695
    %v2764 = vpow.pop %v2763
    %v2765 = vmul.f32 %v2750, 1.442695
    %v2766 = vpow.pop %v2765
    %v2767 = vsel %vm245, %v2752, 0.0
    %2768 = vadd.xlane.f32.xlu0 %v2767
    %v2769 = vpop.xlane.xlu0 %2768
    %v2770 = vsel %vm245, %v2754, 0.0
    %2771 = vadd.xlane.f32.xlu0 %v2770
    %v2772 = vpop.xlane.xlu0 %2771
    %v2773 = vsel %vm245, %v2756, 0.0
    %2774 = vadd.xlane.f32.xlu0 %v2773
    %v2775 = vpop.xlane.xlu0 %2774
    %v2776 = vsel %vm245, %v2758, 0.0
    %2777 = vadd.xlane.f32.xlu0 %v2776
    %v2778 = vpop.xlane.xlu0 %2777
    %v2779 = vsel %vm245, %v2760, 0.0
    %2780 = vadd.xlane.f32.xlu0 %v2779
    %v2781 = vpop.xlane.xlu0 %2780
    %v2782 = vsel %vm245, %v2762, 0.0
    %2783 = vadd.xlane.f32.xlu0 %v2782
    %v2784 = vpop.xlane.xlu0 %2783
    %v2785 = vsel %vm245, %v2764, 0.0
    %2786 = vadd.xlane.f32.xlu0 %v2785
    %v2787 = vpop.xlane.xlu0 %2786
    %v2788 = vsel %vm245, %v2766, 0.0
    %2789 = vadd.xlane.f32.xlu0 %v2788
    %v2790 = vpop.xlane.xlu0 %2789
    %v2791 = vrcp.pop %v2769
    %v2792 = vrcp.pop %v2772
    %v2793 = vrcp.pop %v2775
    %v2794 = vrcp.pop %v2778
    %v2795 = vrcp.pop %v2781
    %v2796 = vrcp.pop %v2784
    %v2797 = vrcp.pop %v2787
    %v2798 = vrcp.pop %v2790
    %v2799 = vmul.f32 %v2752, %v2791
    %v2800 = vmul.f32 %v2754, %v2792
    %v2801 = vmul.f32 %v2756, %v2793
    %v2802 = vmul.f32 %v2758, %v2794
    %v2803 = vmul.f32 %v2760, %v2795
    %v2804 = vmul.f32 %v2762, %v2796
    %v2805 = vmul.f32 %v2764, %v2797
    %v2806 = vmul.f32 %v2766, %v2798
    %2807 = vrot.lane.b32.xlu0 %v2089, 112
    %v2808 = vpop.permute.xlu0 %2807
    %v2811 = vsel %vm245, %v2799, 0
    %2813 = vmatprep.subr.mxu0 0.0
    %2814 = vmatpush1.msra.mxu0 %v2808
    %2815 = vmatprep.subr.mxu0 0.0
    %2816 = vmatpush1.msra.mxu0 0.0
    %2817 = vmatprep.subr.mxu0 0.0
    %2818 = vmatpush1.msra.mxu0 0.0
    %2819 = vmatprep.subr.mxu0 0.0
    %2820 = vmatpush1.msra.mxu0 0.0
    %2821 = vmatprep.subr.mxu0 0.0
    %2822 = vmatpush1.msra.mxu0 0.0
    %2823 = vmatprep.subr.mxu0 0.0
    %2824 = vmatpush1.msra.mxu0 0.0
    %2825 = vmatprep.subr.mxu0 0.0
    %2826 = vmatpush1.msra.mxu0 0.0
    %2827 = vmatprep.subr.mxu0 0.0
    %2828 = vmatpush1.msra.mxu0 0.0
    %2829 = vmatprep.subr.mxu0 0.0
    %2830 = vmatpush1.msra.mxu0 0.0
    %2831 = vmatprep.subr.mxu0 0.0
    %2832 = vmatpush1.msra.mxu0 0.0
    %2833 = vmatprep.subr.mxu0 0.0
    %2834 = vmatpush1.msra.mxu0 0.0
    %2835 = vmatprep.subr.mxu0 0.0
    %2836 = vmatpush1.msra.mxu0 0.0
    %2837 = vmatprep.subr.mxu0 0.0
    %2838 = vmatpush1.msra.mxu0 0.0
    %2839 = vmatprep.subr.mxu0 0.0
    %2840 = vmatpush1.msra.mxu0 0.0
    %2841 = vmatprep.subr.mxu0 0.0
    %2842 = vmatpush1.msra.mxu0 0.0
    %2843 = vmatprep.subr.mxu0 0.0
    %2844 = vmatpush1.msra.mxu0 0.0
    %2845 = vmatprep.subr.mxu0 0.0
    %2846 = vmatpush1.msra.mxu0 0.0
    %2847 = vmatprep.subr.mxu0 0.0
    %2848 = vmatpush1.msra.mxu0 0.0
    %2849 = vmatprep.subr.mxu0 0.0
    %2850 = vmatpush1.msra.mxu0 0.0
    %2851 = vmatprep.subr.mxu0 0.0
    %2852 = vmatpush1.msra.mxu0 0.0
    %2853 = vmatprep.subr.mxu0 0.0
    %2854 = vmatpush1.msra.mxu0 0.0
    %2855 = vmatprep.subr.mxu0 0.0
    %2856 = vmatpush1.msra.mxu0 0.0
    %2857 = vmatprep.subr.mxu0 0.0
    %2858 = vmatpush1.msra.mxu0 0.0
    %2859 = vmatprep.subr.mxu0 0.0
    %2860 = vmatpush1.msra.mxu0 0.0
    %2861 = vmatprep.subr.mxu0 0.0
    %2862 = vmatpush1.msra.mxu0 0.0
    %2863 = vmatprep.subr.mxu0 0.0
    %2864 = vmatpush1.msra.mxu0 0.0
    %2865 = vmatprep.subr.mxu0 0.0
    %2866 = vmatpush1.msra.mxu0 0.0
    %2867 = vmatprep.subr.mxu0 0.0
    %2868 = vmatpush1.msra.mxu0 0.0
    %2869 = vmatprep.subr.mxu0 0.0
    %2870 = vmatpush1.msra.mxu0 0.0
    %2871 = vmatprep.subr.mxu0 0.0
    %2872 = vmatpush1.msra.mxu0 0.0
    %2873 = vmatprep.subr.mxu0 0.0
    %2874 = vmatpush1.msra.mxu0 0.0
    %2875 = vmatprep.subr.mxu0 0.0
    %2876 = vmatpush1.msra.mxu0 0.0
    %2877 = vmatprep.mubr.f32.mxu0 0.0
    %2878 = vmatmul.mubr.f32.gmra.mrb[0].mxu0 %v2811
    %v2879 = vpop.f32.mrb[0].mxu0
    %v2880 = vadd.f32 0.0, %v2879
    %v2881 = vpop.f32.mrb[0].mxu0
    %2882 = vdwg.mxu0
    %2883 = vrot.lane.b32.xlu0 %v2094, 112
    %v2884 = vpop.permute.xlu0 %2883
    %v2887 = vsel %vm245, %v2800, 0
    %2889 = vmatprep.subr.mxu0 0.0
    %2890 = vmatpush1.msra.mxu0 %v2884
    %2891 = vmatprep.subr.mxu0 0.0
    %2892 = vmatpush1.msra.mxu0 0.0
    %2893 = vmatprep.subr.mxu0 0.0
    %2894 = vmatpush1.msra.mxu0 0.0
    %2895 = vmatprep.subr.mxu0 0.0
    %2896 = vmatpush1.msra.mxu0 0.0
    %2897 = vmatprep.subr.mxu0 0.0
    %2898 = vmatpush1.msra.mxu0 0.0
    %2899 = vmatprep.subr.mxu0 0.0
    %2900 = vmatpush1.msra.mxu0 0.0
    %2901 = vmatprep.subr.mxu0 0.0
    %2902 = vmatpush1.msra.mxu0 0.0
    %2903 = vmatprep.subr.mxu0 0.0
    %2904 = vmatpush1.msra.mxu0 0.0
    %2905 = vmatprep.subr.mxu0 0.0
    %2906 = vmatpush1.msra.mxu0 0.0
    %2907 = vmatprep.subr.mxu0 0.0
    %2908 = vmatpush1.msra.mxu0 0.0
    %2909 = vmatprep.subr.mxu0 0.0
    %2910 = vmatpush1.msra.mxu0 0.0
    %2911 = vmatprep.subr.mxu0 0.0
    %2912 = vmatpush1.msra.mxu0 0.0
    %2913 = vmatprep.subr.mxu0 0.0
    %2914 = vmatpush1.msra.mxu0 0.0
    %2915 = vmatprep.subr.mxu0 0.0
    %2916 = vmatpush1.msra.mxu0 0.0
    %2917 = vmatprep.subr.mxu0 0.0
    %2918 = vmatpush1.msra.mxu0 0.0
    %2919 = vmatprep.subr.mxu0 0.0
    %2920 = vmatpush1.msra.mxu0 0.0
    %2921 = vmatprep.subr.mxu0 0.0
    %2922 = vmatpush1.msra.mxu0 0.0
    %2923 = vmatprep.subr.mxu0 0.0
    %2924 = vmatpush1.msra.mxu0 0.0
    %2925 = vmatprep.subr.mxu0 0.0
    %2926 = vmatpush1.msra.mxu0 0.0
    %2927 = vmatprep.subr.mxu0 0.0
    %2928 = vmatpush1.msra.mxu0 0.0
    %2929 = vmatprep.subr.mxu0 0.0
    %2930 = vmatpush1.msra.mxu0 0.0
    %2931 = vmatprep.subr.mxu0 0.0
    %2932 = vmatpush1.msra.mxu0 0.0
    %2933 = vmatprep.subr.mxu0 0.0
    %2934 = vmatpush1.msra.mxu0 0.0
    %2935 = vmatprep.subr.mxu0 0.0
    %2936 = vmatpush1.msra.mxu0 0.0
    %2937 = vmatprep.subr.mxu0 0.0
    %2938 = vmatpush1.msra.mxu0 0.0
    %2939 = vmatprep.subr.mxu0 0.0
    %2940 = vmatpush1.msra.mxu0 0.0
    %2941 = vmatprep.subr.mxu0 0.0
    %2942 = vmatpush1.msra.mxu0 0.0
    %2943 = vmatprep.subr.mxu0 0.0
    %2944 = vmatpush1.msra.mxu0 0.0
    %2945 = vmatprep.subr.mxu0 0.0
    %2946 = vmatpush1.msra.mxu0 0.0
    %2947 = vmatprep.subr.mxu0 0.0
    %2948 = vmatpush1.msra.mxu0 0.0
    %2949 = vmatprep.subr.mxu0 0.0
    %2950 = vmatpush1.msra.mxu0 0.0
    %2951 = vmatprep.subr.mxu0 0.0
    %2952 = vmatpush1.msra.mxu0 0.0
    %2953 = vmatprep.mubr.f32.mxu0 0.0
    %2954 = vmatmul.mubr.f32.gmra.mrb[0].mxu0 %v2887
    %v2955 = vpop.f32.mrb[0].mxu0
    %v2956 = vadd.f32 0.0, %v2955
    %v2957 = vpop.f32.mrb[0].mxu0
    %2958 = vdwg.mxu0
    %2959 = vrot.lane.b32.xlu0 %v2100, 112
    %v2960 = vpop.permute.xlu0 %2959
    %v2963 = vsel %vm245, %v2801, 0
    %2965 = vmatprep.subr.mxu0 0.0
    %2966 = vmatpush1.msra.mxu0 %v2960
    %2967 = vmatprep.subr.mxu0 0.0
    %2968 = vmatpush1.msra.mxu0 0.0
    %2969 = vmatprep.subr.mxu0 0.0
    %2970 = vmatpush1.msra.mxu0 0.0
    %2971 = vmatprep.subr.mxu0 0.0
    %2972 = vmatpush1.msra.mxu0 0.0
    %2973 = vmatprep.subr.mxu0 0.0
    %2974 = vmatpush1.msra.mxu0 0.0
    %2975 = vmatprep.subr.mxu0 0.0
    %2976 = vmatpush1.msra.mxu0 0.0
    %2977 = vmatprep.subr.mxu0 0.0
    %2978 = vmatpush1.msra.mxu0 0.0
    %2979 = vmatprep.subr.mxu0 0.0
    %2980 = vmatpush1.msra.mxu0 0.0
    %2981 = vmatprep.subr.mxu0 0.0
    %2982 = vmatpush1.msra.mxu0 0.0
    %2983 = vmatprep.subr.mxu0 0.0
    %2984 = vmatpush1.msra.mxu0 0.0
    %2985 = vmatprep.subr.mxu0 0.0
    %2986 = vmatpush1.msra.mxu0 0.0
    %2987 = vmatprep.subr.mxu0 0.0
    %2988 = vmatpush1.msra.mxu0 0.0
    %2989 = vmatprep.subr.mxu0 0.0
    %2990 = vmatpush1.msra.mxu0 0.0
    %2991 = vmatprep.subr.mxu0 0.0
    %2992 = vmatpush1.msra.mxu0 0.0
    %2993 = vmatprep.subr.mxu0 0.0
    %2994 = vmatpush1.msra.mxu0 0.0
    %2995 = vmatprep.subr.mxu0 0.0
    %2996 = vmatpush1.msra.mxu0 0.0
    %2997 = vmatprep.subr.mxu0 0.0
    %2998 = vmatpush1.msra.mxu0 0.0
    %2999 = vmatprep.subr.mxu0 0.0
    %3000 = vmatpush1.msra.mxu0 0.0
    %3001 = vmatprep.subr.mxu0 0.0
    %3002 = vmatpush1.msra.mxu0 0.0
    %3003 = vmatprep.subr.mxu0 0.0
    %3004 = vmatpush1.msra.mxu0 0.0
    %3005 = vmatprep.subr.mxu0 0.0
    %3006 = vmatpush1.msra.mxu0 0.0
    %3007 = vmatprep.subr.mxu0 0.0
    %3008 = vmatpush1.msra.mxu0 0.0
    %3009 = vmatprep.subr.mxu0 0.0
    %3010 = vmatpush1.msra.mxu0 0.0
    %3011 = vmatprep.subr.mxu0 0.0
    %3012 = vmatpush1.msra.mxu0 0.0
    %3013 = vmatprep.subr.mxu0 0.0
    %3014 = vmatpush1.msra.mxu0 0.0
    %3015 = vmatprep.subr.mxu0 0.0
    %3016 = vmatpush1.msra.mxu0 0.0
    %3017 = vmatprep.subr.mxu0 0.0
    %3018 = vmatpush1.msra.mxu0 0.0
    %3019 = vmatprep.subr.mxu0 0.0
    %3020 = vmatpush1.msra.mxu0 0.0
    %3021 = vmatprep.subr.mxu0 0.0
    %3022 = vmatpush1.msra.mxu0 0.0
    %3023 = vmatprep.subr.mxu0 0.0
    %3024 = vmatpush1.msra.mxu0 0.0
    %3025 = vmatprep.subr.mxu0 0.0
    %3026 = vmatpush1.msra.mxu0 0.0
    %3027 = vmatprep.subr.mxu0 0.0
    %3028 = vmatpush1.msra.mxu0 0.0
    %3029 = vmatprep.mubr.f32.mxu0 0.0
    %3030 = vmatmul.mubr.f32.gmra.mrb[0].mxu0 %v2963
    %v3031 = vpop.f32.mrb[0].mxu0
    %v3032 = vadd.f32 0.0, %v3031
    %v3033 = vpop.f32.mrb[0].mxu0
    %3034 = vdwg.mxu0
    %3035 = vrot.lane.b32.xlu0 %v2102, 112
    %v3036 = vpop.permute.xlu0 %3035
    %v3039 = vsel %vm245, %v2802, 0
    %3041 = vmatprep.subr.mxu0 0.0
    %3042 = vmatpush1.msra.mxu0 %v3036
    %3043 = vmatprep.subr.mxu0 0.0
    %3044 = vmatpush1.msra.mxu0 0.0
    %3045 = vmatprep.subr.mxu0 0.0
    %3046 = vmatpush1.msra.mxu0 0.0
    %3047 = vmatprep.subr.mxu0 0.0
    %3048 = vmatpush1.msra.mxu0 0.0
    %3049 = vmatprep.subr.mxu0 0.0
    %3050 = vmatpush1.msra.mxu0 0.0
    %3051 = vmatprep.subr.mxu0 0.0
    %3052 = vmatpush1.msra.mxu0 0.0
    %3053 = vmatprep.subr.mxu0 0.0
    %3054 = vmatpush1.msra.mxu0 0.0
    %3055 = vmatprep.subr.mxu0 0.0
    %3056 = vmatpush1.msra.mxu0 0.0
    %3057 = vmatprep.subr.mxu0 0.0
    %3058 = vmatpush1.msra.mxu0 0.0
    %3059 = vmatprep.subr.mxu0 0.0
    %3060 = vmatpush1.msra.mxu0 0.0
    %3061 = vmatprep.subr.mxu0 0.0
    %3062 = vmatpush1.msra.mxu0 0.0
    %3063 = vmatprep.subr.mxu0 0.0
    %3064 = vmatpush1.msra.mxu0 0.0
    %3065 = vmatprep.subr.mxu0 0.0
    %3066 = vmatpush1.msra.mxu0 0.0
    %3067 = vmatprep.subr.mxu0 0.0
    %3068 = vmatpush1.msra.mxu0 0.0
    %3069 = vmatprep.subr.mxu0 0.0
    %3070 = vmatpush1.msra.mxu0 0.0
    %3071 = vmatprep.subr.mxu0 0.0
    %3072 = vmatpush1.msra.mxu0 0.0
    %3073 = vmatprep.subr.mxu0 0.0
    %3074 = vmatpush1.msra.mxu0 0.0
    %3075 = vmatprep.subr.mxu0 0.0
    %3076 = vmatpush1.msra.mxu0 0.0
    %3077 = vmatprep.subr.mxu0 0.0
    %3078 = vmatpush1.msra.mxu0 0.0
    %3079 = vmatprep.subr.mxu0 0.0
    %3080 = vmatpush1.msra.mxu0 0.0
    %3081 = vmatprep.subr.mxu0 0.0
    %3082 = vmatpush1.msra.mxu0 0.0
    %3083 = vmatprep.subr.mxu0 0.0
    %3084 = vmatpush1.msra.mxu0 0.0
    %3085 = vmatprep.subr.mxu0 0.0
    %3086 = vmatpush1.msra.mxu0 0.0
    %3087 = vmatprep.subr.mxu0 0.0
    %3088 = vmatpush1.msra.mxu0 0.0
    %3089 = vmatprep.subr.mxu0 0.0
    %3090 = vmatpush1.msra.mxu0 0.0
    %3091 = vmatprep.subr.mxu0 0.0
    %3092 = vmatpush1.msra.mxu0 0.0
    %3093 = vmatprep.subr.mxu0 0.0
    %3094 = vmatpush1.msra.mxu0 0.0
    %3095 = vmatprep.subr.mxu0 0.0
    %3096 = vmatpush1.msra.mxu0 0.0
    %3097 = vmatprep.subr.mxu0 0.0
    %3098 = vmatpush1.msra.mxu0 0.0
    %3099 = vmatprep.subr.mxu0 0.0
    %3100 = vmatpush1.msra.mxu0 0.0
    %3101 = vmatprep.subr.mxu0 0.0
    %3102 = vmatpush1.msra.mxu0 0.0
    %3103 = vmatprep.subr.mxu0 0.0
    %3104 = vmatpush1.msra.mxu0 0.0
    %3105 = vmatprep.mubr.f32.mxu0 0.0
    %3106 = vmatmul.mubr.f32.gmra.mrb[0].mxu0 %v3039
    %v3107 = vpop.f32.mrb[0].mxu0
    %v3108 = vadd.f32 0.0, %v3107
    %v3109 = vpop.f32.mrb[0].mxu0
    %3110 = vdwg.mxu0
    %3111 = vrot.lane.b32.xlu0 %v2104, 112
    %v3112 = vpop.permute.xlu0 %3111
    %v3115 = vsel %vm245, %v2803, 0
    %3117 = vmatprep.subr.mxu0 0.0
    %3118 = vmatpush1.msra.mxu0 %v3112
    %3119 = vmatprep.subr.mxu0 0.0
    %3120 = vmatpush1.msra.mxu0 0.0
    %3121 = vmatprep.subr.mxu0 0.0
    %3122 = vmatpush1.msra.mxu0 0.0
    %3123 = vmatprep.subr.mxu0 0.0
    %3124 = vmatpush1.msra.mxu0 0.0
    %3125 = vmatprep.subr.mxu0 0.0
    %3126 = vmatpush1.msra.mxu0 0.0
    %3127 = vmatprep.subr.mxu0 0.0
    %3128 = vmatpush1.msra.mxu0 0.0
    %3129 = vmatprep.subr.mxu0 0.0
    %3130 = vmatpush1.msra.mxu0 0.0
    %3131 = vmatprep.subr.mxu0 0.0
    %3132 = vmatpush1.msra.mxu0 0.0
    %3133 = vmatprep.subr.mxu0 0.0
    %3134 = vmatpush1.msra.mxu0 0.0
    %3135 = vmatprep.subr.mxu0 0.0
    %3136 = vmatpush1.msra.mxu0 0.0
    %3137 = vmatprep.subr.mxu0 0.0
    %3138 = vmatpush1.msra.mxu0 0.0
    %3139 = vmatprep.subr.mxu0 0.0
    %3140 = vmatpush1.msra.mxu0 0.0
    %3141 = vmatprep.subr.mxu0 0.0
    %3142 = vmatpush1.msra.mxu0 0.0
    %3143 = vmatprep.subr.mxu0 0.0
    %3144 = vmatpush1.msra.mxu0 0.0
    %3145 = vmatprep.subr.mxu0 0.0
    %3146 = vmatpush1.msra.mxu0 0.0
    %3147 = vmatprep.subr.mxu0 0.0
    %3148 = vmatpush1.msra.mxu0 0.0
    %3149 = vmatprep.subr.mxu0 0.0
    %3150 = vmatpush1.msra.mxu0 0.0
    %3151 = vmatprep.subr.mxu0 0.0
    %3152 = vmatpush1.msra.mxu0 0.0
    %3153 = vmatprep.subr.mxu0 0.0
    %3154 = vmatpush1.msra.mxu0 0.0
    %3155 = vmatprep.subr.mxu0 0.0
    %3156 = vmatpush1.msra.mxu0 0.0
    %3157 = vmatprep.subr.mxu0 0.0
    %3158 = vmatpush1.msra.mxu0 0.0
    %3159 = vmatprep.subr.mxu0 0.0
    %3160 = vmatpush1.msra.mxu0 0.0
    %3161 = vmatprep.subr.mxu0 0.0
    %3162 = vmatpush1.msra.mxu0 0.0
    %3163 = vmatprep.subr.mxu0 0.0
    %3164 = vmatpush1.msra.mxu0 0.0
    %3165 = vmatprep.subr.mxu0 0.0
    %3166 = vmatpush1.msra.mxu0 0.0
    %3167 = vmatprep.subr.mxu0 0.0
    %3168 = vmatpush1.msra.mxu0 0.0
    %3169 = vmatprep.subr.mxu0 0.0
    %3170 = vmatpush1.msra.mxu0 0.0
    %3171 = vmatprep.subr.mxu0 0.0
    %3172 = vmatpush1.msra.mxu0 0.0
    %3173 = vmatprep.subr.mxu0 0.0
    %3174 = vmatpush1.msra.mxu0 0.0
    %3175 = vmatprep.subr.mxu0 0.0
    %3176 = vmatpush1.msra.mxu0 0.0
    %3177 = vmatprep.subr.mxu0 0.0
    %3178 = vmatpush1.msra.mxu0 0.0
    %3179 = vmatprep.subr.mxu0 0.0
    %3180 = vmatpush1.msra.mxu0 0.0
    %3181 = vmatprep.mubr.f32.mxu0 0.0
    %3182 = vmatmul.mubr.f32.gmra.mrb[0].mxu0 %v3115
    %v3183 = vpop.f32.mrb[0].mxu0
    %v3184 = vadd.f32 0.0, %v3183
    %v3185 = vpop.f32.mrb[0].mxu0
    %3186 = vdwg.mxu0
    %3187 = vrot.lane.b32.xlu0 %v2106, 112
    %v3188 = vpop.permute.xlu0 %3187
    %v3191 = vsel %vm245, %v2804, 0
    %3193 = vmatprep.subr.mxu0 0.0
    %3194 = vmatpush1.msra.mxu0 %v3188
    %3195 = vmatprep.subr.mxu0 0.0
    %3196 = vmatpush1.msra.mxu0 0.0
    %3197 = vmatprep.subr.mxu0 0.0
    %3198 = vmatpush1.msra.mxu0 0.0
    %3199 = vmatprep.subr.mxu0 0.0
    %3200 = vmatpush1.msra.mxu0 0.0
    %3201 = vmatprep.subr.mxu0 0.0
    %3202 = vmatpush1.msra.mxu0 0.0
    %3203 = vmatprep.subr.mxu0 0.0
    %3204 = vmatpush1.msra.mxu0 0.0
    %3205 = vmatprep.subr.mxu0 0.0
    %3206 = vmatpush1.msra.mxu0 0.0
    %3207 = vmatprep.subr.mxu0 0.0
    %3208 = vmatpush1.msra.mxu0 0.0
    %3209 = vmatprep.subr.mxu0 0.0
    %3210 = vmatpush1.msra.mxu0 0.0
    %3211 = vmatprep.subr.mxu0 0.0
    %3212 = vmatpush1.msra.mxu0 0.0
    %3213 = vmatprep.subr.mxu0 0.0
    %3214 = vmatpush1.msra.mxu0 0.0
    %3215 = vmatprep.subr.mxu0 0.0
    %3216 = vmatpush1.msra.mxu0 0.0
    %3217 = vmatprep.subr.mxu0 0.0
    %3218 = vmatpush1.msra.mxu0 0.0
    %3219 = vmatprep.subr.mxu0 0.0
    %3220 = vmatpush1.msra.mxu0 0.0
    %3221 = vmatprep.subr.mxu0 0.0
    %3222 = vmatpush1.msra.mxu0 0.0
    %3223 = vmatprep.subr.mxu0 0.0
    %3224 = vmatpush1.msra.mxu0 0.0
    %3225 = vmatprep.subr.mxu0 0.0
    %3226 = vmatpush1.msra.mxu0 0.0
    %3227 = vmatprep.subr.mxu0 0.0
    %3228 = vmatpush1.msra.mxu0 0.0
    %3229 = vmatprep.subr.mxu0 0.0
    %3230 = vmatpush1.msra.mxu0 0.0
    %3231 = vmatprep.subr.mxu0 0.0
    %3232 = vmatpush1.msra.mxu0 0.0
    %3233 = vmatprep.subr.mxu0 0.0
    %3234 = vmatpush1.msra.mxu0 0.0
    %3235 = vmatprep.subr.mxu0 0.0
    %3236 = vmatpush1.msra.mxu0 0.0
    %3237 = vmatprep.subr.mxu0 0.0
    %3238 = vmatpush1.msra.mxu0 0.0
    %3239 = vmatprep.subr.mxu0 0.0
    %3240 = vmatpush1.msra.mxu0 0.0
    %3241 = vmatprep.subr.mxu0 0.0
    %3242 = vmatpush1.msra.mxu0 0.0
    %3243 = vmatprep.subr.mxu0 0.0
    %3244 = vmatpush1.msra.mxu0 0.0
    %3245 = vmatprep.subr.mxu0 0.0
    %3246 = vmatpush1.msra.mxu0 0.0
    %3247 = vmatprep.subr.mxu0 0.0
    %3248 = vmatpush1.msra.mxu0 0.0
    %3249 = vmatprep.subr.mxu0 0.0
    %3250 = vmatpush1.msra.mxu0 0.0
    %3251 = vmatprep.subr.mxu0 0.0
    %3252 = vmatpush1.msra.mxu0 0.0
    %3253 = vmatprep.subr.mxu0 0.0
    %3254 = vmatpush1.msra.mxu0 0.0
    %3255 = vmatprep.subr.mxu0 0.0
    %3256 = vmatpush1.msra.mxu0 0.0
    %3257 = vmatprep.mubr.f32.mxu0 0.0
    %3258 = vmatmul.mubr.f32.gmra.mrb[0].mxu0 %v3191
    %v3259 = vpop.f32.mrb[0].mxu0
    %v3260 = vadd.f32 0.0, %v3259
    %v3261 = vpop.f32.mrb[0].mxu0
    %3262 = vdwg.mxu0
    %3263 = vrot.lane.b32.xlu0 %v2108, 112
    %v3264 = vpop.permute.xlu0 %3263
    %v3267 = vsel %vm245, %v2805, 0
    %3269 = vmatprep.subr.mxu0 0.0
    %3270 = vmatpush1.msra.mxu0 %v3264
    %3271 = vmatprep.subr.mxu0 0.0
    %3272 = vmatpush1.msra.mxu0 0.0
    %3273 = vmatprep.subr.mxu0 0.0
    %3274 = vmatpush1.msra.mxu0 0.0
    %3275 = vmatprep.subr.mxu0 0.0
    %3276 = vmatpush1.msra.mxu0 0.0
    %3277 = vmatprep.subr.mxu0 0.0
    %3278 = vmatpush1.msra.mxu0 0.0
    %3279 = vmatprep.subr.mxu0 0.0
    %3280 = vmatpush1.msra.mxu0 0.0
    %3281 = vmatprep.subr.mxu0 0.0
    %3282 = vmatpush1.msra.mxu0 0.0
    %3283 = vmatprep.subr.mxu0 0.0
    %3284 = vmatpush1.msra.mxu0 0.0
    %3285 = vmatprep.subr.mxu0 0.0
    %3286 = vmatpush1.msra.mxu0 0.0
    %3287 = vmatprep.subr.mxu0 0.0
    %3288 = vmatpush1.msra.mxu0 0.0
    %3289 = vmatprep.subr.mxu0 0.0
    %3290 = vmatpush1.msra.mxu0 0.0
    %3291 = vmatprep.subr.mxu0 0.0
    %3292 = vmatpush1.msra.mxu0 0.0
    %3293 = vmatprep.subr.mxu0 0.0
    %3294 = vmatpush1.msra.mxu0 0.0
    %3295 = vmatprep.subr.mxu0 0.0
    %3296 = vmatpush1.msra.mxu0 0.0
    %3297 = vmatprep.subr.mxu0 0.0
    %3298 = vmatpush1.msra.mxu0 0.0
    %3299 = vmatprep.subr.mxu0 0.0
    %3300 = vmatpush1.msra.mxu0 0.0
    %3301 = vmatprep.subr.mxu0 0.0
    %3302 = vmatpush1.msra.mxu0 0.0
    %3303 = vmatprep.subr.mxu0 0.0
    %3304 = vmatpush1.msra.mxu0 0.0
    %3305 = vmatprep.subr.mxu0 0.0
    %3306 = vmatpush1.msra.mxu0 0.0
    %3307 = vmatprep.subr.mxu0 0.0
    %3308 = vmatpush1.msra.mxu0 0.0
    %3309 = vmatprep.subr.mxu0 0.0
    %3310 = vmatpush1.msra.mxu0 0.0
    %3311 = vmatprep.subr.mxu0 0.0
    %3312 = vmatpush1.msra.mxu0 0.0
    %3313 = vmatprep.subr.mxu0 0.0
    %3314 = vmatpush1.msra.mxu0 0.0
    %3315 = vmatprep.subr.mxu0 0.0
    %3316 = vmatpush1.msra.mxu0 0.0
    %3317 = vmatprep.subr.mxu0 0.0
    %3318 = vmatpush1.msra.mxu0 0.0
    %3319 = vmatprep.subr.mxu0 0.0
    %3320 = vmatpush1.msra.mxu0 0.0
    %3321 = vmatprep.subr.mxu0 0.0
    %3322 = vmatpush1.msra.mxu0 0.0
    %3323 = vmatprep.subr.mxu0 0.0
    %3324 = vmatpush1.msra.mxu0 0.0
    %3325 = vmatprep.subr.mxu0 0.0
    %3326 = vmatpush1.msra.mxu0 0.0
    %3327 = vmatprep.subr.mxu0 0.0
    %3328 = vmatpush1.msra.mxu0 0.0
    %3329 = vmatprep.subr.mxu0 0.0
    %3330 = vmatpush1.msra.mxu0 0.0
    %3331 = vmatprep.subr.mxu0 0.0
    %3332 = vmatpush1.msra.mxu0 0.0
    %3333 = vmatprep.mubr.f32.mxu0 0.0
    %3334 = vmatmul.mubr.f32.gmra.mrb[0].mxu0 %v3267
    %v3335 = vpop.f32.mrb[0].mxu0
    %v3336 = vadd.f32 0.0, %v3335
    %v3337 = vpop.f32.mrb[0].mxu0
    %3338 = vdwg.mxu0
    %3339 = vrot.lane.b32.xlu0 %v2110, 112
    %v3340 = vpop.permute.xlu0 %3339
    %v3343 = vsel %vm245, %v2806, 0
    %3345 = vmatprep.subr.mxu0 0.0
    %3346 = vmatpush1.msra.mxu0 %v3340
    %3347 = vmatprep.subr.mxu0 0.0
    %3348 = vmatpush1.msra.mxu0 0.0
    %3349 = vmatprep.subr.mxu0 0.0
    %3350 = vmatpush1.msra.mxu0 0.0
    %3351 = vmatprep.subr.mxu0 0.0
    %3352 = vmatpush1.msra.mxu0 0.0
    %3353 = vmatprep.subr.mxu0 0.0
    %3354 = vmatpush1.msra.mxu0 0.0
    %3355 = vmatprep.subr.mxu0 0.0
    %3356 = vmatpush1.msra.mxu0 0.0
    %3357 = vmatprep.subr.mxu0 0.0
    %3358 = vmatpush1.msra.mxu0 0.0
    %3359 = vmatprep.subr.mxu0 0.0
    %3360 = vmatpush1.msra.mxu0 0.0
    %3361 = vmatprep.subr.mxu0 0.0
    %3362 = vmatpush1.msra.mxu0 0.0
    %3363 = vmatprep.subr.mxu0 0.0
    %3364 = vmatpush1.msra.mxu0 0.0
    %3365 = vmatprep.subr.mxu0 0.0
    %3366 = vmatpush1.msra.mxu0 0.0
    %3367 = vmatprep.subr.mxu0 0.0
    %3368 = vmatpush1.msra.mxu0 0.0
    %3369 = vmatprep.subr.mxu0 0.0
    %3370 = vmatpush1.msra.mxu0 0.0
    %3371 = vmatprep.subr.mxu0 0.0
    %3372 = vmatpush1.msra.mxu0 0.0
    %3373 = vmatprep.subr.mxu0 0.0
    %3374 = vmatpush1.msra.mxu0 0.0
    %3375 = vmatprep.subr.mxu0 0.0
    %3376 = vmatpush1.msra.mxu0 0.0
    %3377 = vmatprep.subr.mxu0 0.0
    %3378 = vmatpush1.msra.mxu0 0.0
    %3379 = vmatprep.subr.mxu0 0.0
    %3380 = vmatpush1.msra.mxu0 0.0
    %3381 = vmatprep.subr.mxu0 0.0
    %3382 = vmatpush1.msra.mxu0 0.0
    %3383 = vmatprep.subr.mxu0 0.0
    %3384 = vmatpush1.msra.mxu0 0.0
    %3385 = vmatprep.subr.mxu0 0.0
    %3386 = vmatpush1.msra.mxu0 0.0
    %3387 = vmatprep.subr.mxu0 0.0
    %3388 = vmatpush1.msra.mxu0 0.0
    %3389 = vmatprep.subr.mxu0 0.0
    %3390 = vmatpush1.msra.mxu0 0.0
    %3391 = vmatprep.subr.mxu0 0.0
    %3392 = vmatpush1.msra.mxu0 0.0
    %3393 = vmatprep.subr.mxu0 0.0
    %3394 = vmatpush1.msra.mxu0 0.0
    %3395 = vmatprep.subr.mxu0 0.0
    %3396 = vmatpush1.msra.mxu0 0.0
    %3397 = vmatprep.subr.mxu0 0.0
    %3398 = vmatpush1.msra.mxu0 0.0
    %3399 = vmatprep.subr.mxu0 0.0
    %3400 = vmatpush1.msra.mxu0 0.0
    %3401 = vmatprep.subr.mxu0 0.0
    %3402 = vmatpush1.msra.mxu0 0.0
    %3403 = vmatprep.subr.mxu0 0.0
    %3404 = vmatpush1.msra.mxu0 0.0
    %3405 = vmatprep.subr.mxu0 0.0
    %3406 = vmatpush1.msra.mxu0 0.0
    %3407 = vmatprep.subr.mxu0 0.0
    %3408 = vmatpush1.msra.mxu0 0.0
    %3409 = vmatprep.mubr.f32.mxu0 0.0
    %3410 = vmatmul.mubr.f32.gmra.mrb[0].mxu0 %v3343
    %v3411 = vpop.f32.mrb[0].mxu0
    %v3412 = vadd.f32 0.0, %v3411
    %v3413 = vpop.f32.mrb[0].mxu0
    %3414 = vdwg.mxu0
    %3417 = vrot.lane.b32.xlu0 %v3032, 8
    %v3418 = vpop.permute.xlu0 %3417
    %3419 = vrot.lane.b32.xlu0 %v3108, 8
    %v3420 = vpop.permute.xlu0 %3419
    %3425 = vrot.lane.b32.xlu0 %v3184, 16
    %v3426 = vpop.permute.xlu0 %3425
    %3427 = vrot.lane.b32.xlu0 %v3260, 16
    %v3428 = vpop.permute.xlu0 %3427
    %3433 = vrot.lane.b32.xlu0 %v3336, 24
    %v3434 = vpop.permute.xlu0 %3433
    %3435 = vrot.lane.b32.xlu0 %v3412, 24
    %v3436 = vpop.permute.xlu0 %3435
    %v3439 = vsel %vm245, %v2880, %v3418
    %v3440 = vsel %vm245, %v2956, %v3420
    %v3441 = vsel %vm1574, %v3439, %v3426
    %v3442 = vsel %vm1574, %v3440, %v3428
    %v3443 = vsel %vm1577, %v3441, %v3434
    %v3444 = vsel %vm1577, %v3442, %v3436
    %v3445 = vlaneseq
    %v3446 = vshrl.u32 %v3445, 7
    %v3447 = vsub.s32 0, %v3446
    %v3448 = vrot.slane %v2005, %v3447
    %3453 = vrot.lane.b32.xlu0 %v1991, 32
    %v3454 = vpop.permute.xlu0 %3453
    %3455 = vrot.lane.b32.xlu0 %v1992, 32
    %v3456 = vpop.permute.xlu0 %3455
    %3457 = vrot.lane.b32.xlu0 %v1993, 32
    %v3458 = vpop.permute.xlu0 %3457
    %3459 = vrot.lane.b32.xlu0 %v1994, 32
    %v3460 = vpop.permute.xlu0 %3459
    %v3466 = vsel %vm33, %v3443, 0
    %v3469 = vsel %vm33, %v3444, 0
    %3471 = vmatprep.subr.mxu0 0.0
    %3472 = vmatpush1.msra.mxu0 %v3454
    %3473 = vmatprep.subr.mxu0 0.0
    %3474 = vmatpush1.msra.mxu0 %v3456
    %3475 = vmatprep.subr.mxu0 0.0
    %3476 = vmatpush1.msra.mxu0 %v3458
    %3477 = vmatprep.subr.mxu0 0.0
    %3478 = vmatpush1.msra.mxu0 %v3460
    %3479 = vmatprep.subr.mxu0 0.0
    %3480 = vmatpush1.msra.mxu0 0.0
    %3481 = vmatprep.subr.mxu0 0.0
    %3482 = vmatpush1.msra.mxu0 0.0
    %3483 = vmatprep.subr.mxu0 0.0
    %3484 = vmatpush1.msra.mxu0 0.0
    %3485 = vmatprep.subr.mxu0 0.0
    %3486 = vmatpush1.msra.mxu0 0.0
    %3487 = vmatprep.subr.mxu0 0.0
    %3488 = vmatpush1.msra.mxu0 0.0
    %3489 = vmatprep.subr.mxu0 0.0
    %3490 = vmatpush1.msra.mxu0 0.0
    %3491 = vmatprep.subr.mxu0 0.0
    %3492 = vmatpush1.msra.mxu0 0.0
    %3493 = vmatprep.subr.mxu0 0.0
    %3494 = vmatpush1.msra.mxu0 0.0
    %3495 = vmatprep.subr.mxu0 0.0
    %3496 = vmatpush1.msra.mxu0 0.0
    %3497 = vmatprep.subr.mxu0 0.0
    %3498 = vmatpush1.msra.mxu0 0.0
    %3499 = vmatprep.subr.mxu0 0.0
    %3500 = vmatpush1.msra.mxu0 0.0
    %3501 = vmatprep.subr.mxu0 0.0
    %3502 = vmatpush1.msra.mxu0 0.0
    %3503 = vmatprep.subr.mxu0 0.0
    %3504 = vmatpush1.msra.mxu0 0.0
    %3505 = vmatprep.subr.mxu0 0.0
    %3506 = vmatpush1.msra.mxu0 0.0
    %3507 = vmatprep.subr.mxu0 0.0
    %3508 = vmatpush1.msra.mxu0 0.0
    %3509 = vmatprep.subr.mxu0 0.0
    %3510 = vmatpush1.msra.mxu0 0.0
    %3511 = vmatprep.subr.mxu0 0.0
    %3512 = vmatpush1.msra.mxu0 0.0
    %3513 = vmatprep.subr.mxu0 0.0
    %3514 = vmatpush1.msra.mxu0 0.0
    %3515 = vmatprep.subr.mxu0 0.0
    %3516 = vmatpush1.msra.mxu0 0.0
    %3517 = vmatprep.subr.mxu0 0.0
    %3518 = vmatpush1.msra.mxu0 0.0
    %3519 = vmatprep.subr.mxu0 0.0
    %3520 = vmatpush1.msra.mxu0 0.0
    %3521 = vmatprep.subr.mxu0 0.0
    %3522 = vmatpush1.msra.mxu0 0.0
    %3523 = vmatprep.subr.mxu0 0.0
    %3524 = vmatpush1.msra.mxu0 0.0
    %3525 = vmatprep.subr.mxu0 0.0
    %3526 = vmatpush1.msra.mxu0 0.0
    %3527 = vmatprep.subr.mxu0 0.0
    %3528 = vmatpush1.msra.mxu0 0.0
    %3529 = vmatprep.subr.mxu0 0.0
    %3530 = vmatpush1.msra.mxu0 0.0
    %3531 = vmatprep.subr.mxu0 0.0
    %3532 = vmatpush1.msra.mxu0 0.0
    %3533 = vmatprep.subr.mxu0 0.0
    %3534 = vmatpush1.msra.mxu0 0.0
    %3535 = vmatprep.mubr.f32.mxu0 0.0
    %3536 = vmatmul.mubr.f32.gmra.mrb[0].mxu0 %v3466
    %v3537 = vpop.f32.mrb[0].mxu0
    %v3538 = vadd.f32 %v3448, %v3537
    %v3539 = vpop.f32.mrb[0].mxu0
    %3540 = vmatprep.mubr.f32.mxu0 0.0
    %3541 = vmatmul.mubr.f32.gmra.mrb[0].mxu0 %v3469
    %v3542 = vpop.f32.mrb[0].mxu0
    %v3543 = vadd.f32 %v3448, %v3542
    %v3544 = vpop.f32.mrb[0].mxu0
    %3545 = vdwg.mxu0
    %v3546 = vadd.f32 %v3538, %v1988
    %v3547 = vadd.f32 %v3543, %v1989
    %v3548 = vsel %vm33, %v3546, 0.0
    %3549 = vadd.xlane.f32.xlu0 %v3548
    %v3550 = vpop.xlane.xlu0 %3549
    %v3551 = vsel %vm33, %v3547, 0.0
    %3552 = vadd.xlane.f32.xlu0 %v3551
    %v3553 = vpop.xlane.xlu0 %3552
    %v3554 = vmul.f32 %v3546, %v3546
    %v3555 = vmul.f32 %v3547, %v3547
    %v3556 = vsel %vm33, %v3554, 0.0
    %3557 = vadd.xlane.f32.xlu0 %v3556
    %v3558 = vpop.xlane.xlu0 %3557
    %v3559 = vsel %vm33, %v3555, 0.0
    %3560 = vadd.xlane.f32.xlu0 %v3559
    %v3561 = vpop.xlane.xlu0 %3560
    %v3562 = vmul.f32 %v3550, 0.03125
    %v3563 = vmul.f32 %v3553, 0.03125
    %v3564 = vmul.f32 %v3558, 0.03125
    %v3565 = vmul.f32 %v3561, 0.03125
    %v3566 = vmul.f32 %v3562, %v3562
    %v3567 = vmul.f32 %v3563, %v3563
    %v3568 = vsub.f32 %v3564, %v3566
    %v3569 = vsub.f32 %v3565, %v3567
    %v3570 = vsub.f32 %v3546, %v3562
    %v3571 = vsub.f32 %v3547, %v3563
    %v3572 = vadd.f32 %v3568, 1e-12
    %v3573 = vadd.f32 %v3569, 1e-12
    %v3574 = vrsqrt.pop %v3572
    %v3575 = vrsqrt.pop %v3573
    %v3576 = vmul.f32 %v3570, %v3574
    %v3577 = vmul.f32 %v3571, %v3575
    %v3578 = vlaneseq
    %v3579 = vshrl.u32 %v3578, 7
    %v3580 = vsub.s32 0, %v3579
    %v3581 = vrot.slane %v2006, %v3580
    %v3582 = vmul.f32 %v3576, %v3581
    %v3583 = vmul.f32 %v3577, %v3581
    %v3584 = vlaneseq
    %v3585 = vshrl.u32 %v3584, 7
    %v3586 = vsub.s32 0, %v3585
    %v3587 = vrot.slane %v2007, %v3586
    %v3588 = vadd.f32 %v3582, %v3587
    %v3589 = vadd.f32 %v3583, %v3587
    %v3590 = vlaneseq
    %v3591 = vshrl.u32 %v3590, 7
    %v3592 = vsub.s32 0, %v3591
    %v3593 = vrot.slane %v2008, %v3592
    %v3595 = vsel %vm33, %v3588, 0
    %v3598 = vsel %vm33, %v3589, 0
    %3600 = vmatprep.subr.mxu0 0.0
    %3601 = vmatpush1.msra.mxu0 %v1995
    %3602 = vmatprep.subr.mxu0 0.0
    %3603 = vmatpush1.msra.mxu0 %v1996
    %3604 = vmatprep.subr.mxu0 0.0
    %3605 = vmatpush1.msra.mxu0 %v1997
    %3606 = vmatprep.subr.mxu0 0.0
    %3607 = vmatpush1.msra.mxu0 %v1998
    %3608 = vmatprep.subr.mxu0 0.0
    %3609 = vmatpush1.msra.mxu0 0.0
    %3610 = vmatprep.subr.mxu0 0.0
    %3611 = vmatpush1.msra.mxu0 0.0
    %3612 = vmatprep.subr.mxu0 0.0
    %3613 = vmatpush1.msra.mxu0 0.0
    %3614 = vmatprep.subr.mxu0 0.0
    %3615 = vmatpush1.msra.mxu0 0.0
    %3616 = vmatprep.subr.mxu0 0.0
    %3617 = vmatpush1.msra.mxu0 0.0
    %3618 = vmatprep.subr.mxu0 0.0
    %3619 = vmatpush1.msra.mxu0 0.0
    %3620 = vmatprep.subr.mxu0 0.0
    %3621 = vmatpush1.msra.mxu0 0.0
    %3622 = vmatprep.subr.mxu0 0.0
    %3623 = vmatpush1.msra.mxu0 0.0
    %3624 = vmatprep.subr.mxu0 0.0
    %3625 = vmatpush1.msra.mxu0 0.0
    %3626 = vmatprep.subr.mxu0 0.0
    %3627 = vmatpush1.msra.mxu0 0.0
    %3628 = vmatprep.subr.mxu0 0.0
    %3629 = vmatpush1.msra.mxu0 0.0
    %3630 = vmatprep.subr.mxu0 0.0
    %3631 = vmatpush1.msra.mxu0 0.0
    %3632 = vmatprep.subr.mxu0 0.0
    %3633 = vmatpush1.msra.mxu0 0.0
    %3634 = vmatprep.subr.mxu0 0.0
    %3635 = vmatpush1.msra.mxu0 0.0
    %3636 = vmatprep.subr.mxu0 0.0
    %3637 = vmatpush1.msra.mxu0 0.0
    %3638 = vmatprep.subr.mxu0 0.0
    %3639 = vmatpush1.msra.mxu0 0.0
    %3640 = vmatprep.subr.mxu0 0.0
    %3641 = vmatpush1.msra.mxu0 0.0
    %3642 = vmatprep.subr.mxu0 0.0
    %3643 = vmatpush1.msra.mxu0 0.0
    %3644 = vmatprep.subr.mxu0 0.0
    %3645 = vmatpush1.msra.mxu0 0.0
    %3646 = vmatprep.subr.mxu0 0.0
    %3647 = vmatpush1.msra.mxu0 0.0
    %3648 = vmatprep.subr.mxu0 0.0
    %3649 = vmatpush1.msra.mxu0 0.0
    %3650 = vmatprep.subr.mxu0 0.0
    %3651 = vmatpush1.msra.mxu0 0.0
    %3652 = vmatprep.subr.mxu0 0.0
    %3653 = vmatpush1.msra.mxu0 0.0
    %3654 = vmatprep.subr.mxu0 0.0
    %3655 = vmatpush1.msra.mxu0 0.0
    %3656 = vmatprep.subr.mxu0 0.0
    %3657 = vmatpush1.msra.mxu0 0.0
    %3658 = vmatprep.subr.mxu0 0.0
    %3659 = vmatpush1.msra.mxu0 0.0
    %3660 = vmatprep.subr.mxu0 0.0
    %3661 = vmatpush1.msra.mxu0 0.0
    %3662 = vmatprep.subr.mxu0 0.0
    %3663 = vmatpush1.msra.mxu0 0.0
    %3664 = vmatprep.mubr.f32.mxu0 0.0
    %3665 = vmatmul.mubr.f32.gmra.mrb[0].mxu0 %v3595
    %v3666 = vpop.f32.mrb[0].mxu0
    %v3667 = vadd.f32 %v3593, %v3666
    %v3668 = vpop.f32.mrb[0].mxu0
    %3669 = vmatprep.mubr.f32.mxu0 0.0
    %3670 = vmatmul.mubr.f32.gmra.mrb[0].mxu0 %v3598
    %v3671 = vpop.f32.mrb[0].mxu0
    %v3672 = vadd.f32 %v3593, %v3671
    %v3673 = vpop.f32.mrb[0].mxu0
    %3674 = vdwg.mxu0
    %v3675 = vmul.f32 %v3667, 0.5
    %v3676 = vmul.f32 %v3672, 0.5
    %v3677 = vmul.f32 %v3667, 0.044715
    %v3678 = vmul.f32 %v3672, 0.044715
    %v3679 = vmul.f32 %v3677, %v3667
    %v3680 = vmul.f32 %v3678, %v3672
    %v3681 = vmul.f32 %v3679, %v3667
    %v3682 = vmul.f32 %v3680, %v3672
    %v3683 = vadd.f32 %v3667, %v3681
    %v3684 = vadd.f32 %v3672, %v3682
    %v3685 = vmul.f32 %v3683, 0.7978846
    %v3686 = vmul.f32 %v3684, 0.7978846
    %v3687 = vtanh.pop %v3685
    %v3688 = vtanh.pop %v3686
    %v3689 = vadd.f32 %v3687, 1.0
    %v3690 = vadd.f32 %v3688, 1.0
    %v3691 = vmul.f32 %v3675, %v3689
    %v3692 = vmul.f32 %v3676, %v3690
    %v3693 = vlaneseq
    %v3694 = vshrl.u32 %v3693, 7
    %v3695 = vsub.s32 0, %v3694
    %v3696 = vrot.slane %v2009, %v3695
    %3705 = vrot.lane.b32.xlu0 %v1995, 64
    %v3706 = vpop.permute.xlu0 %3705
    %3707 = vrot.lane.b32.xlu0 %v1996, 64
    %v3708 = vpop.permute.xlu0 %3707
    %3709 = vrot.lane.b32.xlu0 %v1997, 64
    %v3710 = vpop.permute.xlu0 %3709
    %3711 = vrot.lane.b32.xlu0 %v1998, 64
    %v3712 = vpop.permute.xlu0 %3711
    %3713 = vrot.lane.b32.xlu0 %v1999, 64
    %v3714 = vpop.permute.xlu0 %3713
    %3715 = vrot.lane.b32.xlu0 %v2000, 64
    %v3716 = vpop.permute.xlu0 %3715
    %3717 = vrot.lane.b32.xlu0 %v2001, 64
    %v3718 = vpop.permute.xlu0 %3717
    %3719 = vrot.lane.b32.xlu0 %v2002, 64
    %v3720 = vpop.permute.xlu0 %3719
    %v3730 = vsel %vm1864, %v3691, 0
    %v3733 = vsel %vm1864, %v3692, 0
    %3735 = vmatprep.subr.mxu0 0.0
    %3736 = vmatpush1.msra.mxu0 %v3706
    %3737 = vmatprep.subr.mxu0 0.0
    %3738 = vmatpush1.msra.mxu0 %v3708
    %3739 = vmatprep.subr.mxu0 0.0
    %3740 = vmatpush1.msra.mxu0 %v3710
    %3741 = vmatprep.subr.mxu0 0.0
    %3742 = vmatpush1.msra.mxu0 %v3712
    %3743 = vmatprep.subr.mxu0 0.0
    %3744 = vmatpush1.msra.mxu0 %v3714
    %3745 = vmatprep.subr.mxu0 0.0
    %3746 = vmatpush1.msra.mxu0 %v3716
    %3747 = vmatprep.subr.mxu0 0.0
    %3748 = vmatpush1.msra.mxu0 %v3718
    %3749 = vmatprep.subr.mxu0 0.0
    %3750 = vmatpush1.msra.mxu0 %v3720
    %3751 = vmatprep.subr.mxu0 0.0
    %3752 = vmatpush1.msra.mxu0 0.0
    %3753 = vmatprep.subr.mxu0 0.0
    %3754 = vmatpush1.msra.mxu0 0.0
    %3755 = vmatprep.subr.mxu0 0.0
    %3756 = vmatpush1.msra.mxu0 0.0
    %3757 = vmatprep.subr.mxu0 0.0
    %3758 = vmatpush1.msra.mxu0 0.0
    %3759 = vmatprep.subr.mxu0 0.0
    %3760 = vmatpush1.msra.mxu0 0.0
    %3761 = vmatprep.subr.mxu0 0.0
    %3762 = vmatpush1.msra.mxu0 0.0
    %3763 = vmatprep.subr.mxu0 0.0
    %3764 = vmatpush1.msra.mxu0 0.0
    %3765 = vmatprep.subr.mxu0 0.0
    %3766 = vmatpush1.msra.mxu0 0.0
    %3767 = vmatprep.subr.mxu0 0.0
    %3768 = vmatpush1.msra.mxu0 0.0
    %3769 = vmatprep.subr.mxu0 0.0
    %3770 = vmatpush1.msra.mxu0 0.0
    %3771 = vmatprep.subr.mxu0 0.0
    %3772 = vmatpush1.msra.mxu0 0.0
    %3773 = vmatprep.subr.mxu0 0.0
    %3774 = vmatpush1.msra.mxu0 0.0
    %3775 = vmatprep.subr.mxu0 0.0
    %3776 = vmatpush1.msra.mxu0 0.0
    %3777 = vmatprep.subr.mxu0 0.0
    %3778 = vmatpush1.msra.mxu0 0.0
    %3779 = vmatprep.subr.mxu0 0.0
    %3780 = vmatpush1.msra.mxu0 0.0
    %3781 = vmatprep.subr.mxu0 0.0
    %3782 = vmatpush1.msra.mxu0 0.0
    %3783 = vmatprep.subr.mxu0 0.0
    %3784 = vmatpush1.msra.mxu0 0.0
    %3785 = vmatprep.subr.mxu0 0.0
    %3786 = vmatpush1.msra.mxu0 0.0
    %3787 = vmatprep.subr.mxu0 0.0
    %3788 = vmatpush1.msra.mxu0 0.0
    %3789 = vmatprep.subr.mxu0 0.0
    %3790 = vmatpush1.msra.mxu0 0.0
    %3791 = vmatprep.subr.mxu0 0.0
    %3792 = vmatpush1.msra.mxu0 0.0
    %3793 = vmatprep.subr.mxu0 0.0
    %3794 = vmatpush1.msra.mxu0 0.0
    %3795 = vmatprep.subr.mxu0 0.0
    %3796 = vmatpush1.msra.mxu0 0.0
    %3797 = vmatprep.subr.mxu0 0.0
    %3798 = vmatpush1.msra.mxu0 0.0
    %3799 = vmatprep.mubr.f32.mxu0 0.0
    %3800 = vmatmul.mubr.f32.gmra.mrb[0].mxu0 %v3730
    %v3801 = vpop.f32.mrb[0].mxu0
    %v3802 = vadd.f32 %v3696, %v3801
    %v3803 = vpop.f32.mrb[0].mxu0
    %3804 = vmatprep.mubr.f32.mxu0 0.0
    %3805 = vmatmul.mubr.f32.gmra.mrb[0].mxu0 %v3733
    %v3806 = vpop.f32.mrb[0].mxu0
    %v3807 = vadd.f32 %v3696, %v3806
    %v3808 = vpop.f32.mrb[0].mxu0
    %3809 = vdwg.mxu0
    %v3810 = vadd.f32 %v3802, %v3588
    %v3811 = vadd.f32 %v3807, %v3589
    %v3812 = vsel %vm33, %v3810, 0.0
    %3813 = vadd.xlane.f32.xlu0 %v3812
    %v3814 = vpop.xlane.xlu0 %3813
    %v3815 = vsel %vm33, %v3811, 0.0
    %3816 = vadd.xlane.f32.xlu0 %v3815
    %v3817 = vpop.xlane.xlu0 %3816
    %v3818 = vmul.f32 %v3810, %v3810
    %v3819 = vmul.f32 %v3811, %v3811
    %v3820 = vsel %vm33, %v3818, 0.0
    %3821 = vadd.xlane.f32.xlu0 %v3820
    %v3822 = vpop.xlane.xlu0 %3821
    %v3823 = vsel %vm33, %v3819, 0.0
    %3824 = vadd.xlane.f32.xlu0 %v3823
    %v3825 = vpop.xlane.xlu0 %3824
    %v3826 = vmul.f32 %v3814, 0.03125
    %v3827 = vmul.f32 %v3817, 0.03125
    %v3828 = vmul.f32 %v3822, 0.03125
    %v3829 = vmul.f32 %v3825, 0.03125
    %v3830 = vmul.f32 %v3826, %v3826
    %v3831 = vmul.f32 %v3827, %v3827
    %v3832 = vsub.f32 %v3828, %v3830
    %v3833 = vsub.f32 %v3829, %v3831
    %v3834 = vsub.f32 %v3810, %v3826
    %v3835 = vsub.f32 %v3811, %v3827
    %v3836 = vadd.f32 %v3832, 1e-12
    %v3837 = vadd.f32 %v3833, 1e-12
    %v3838 = vrsqrt.pop %v3836
    %v3839 = vrsqrt.pop %v3837
    %v3840 = vmul.f32 %v3834, %v3838
    %v3841 = vmul.f32 %v3835, %v3839
    %v3842 = vlaneseq
    %v3843 = vshrl.u32 %v3842, 7
    %v3844 = vsub.s32 0, %v3843
    %v3845 = vrot.slane %v2010, %v3844
    %v3846 = vmul.f32 %v3840, %v3845
    %v3847 = vmul.f32 %v3841, %v3845
    %v3848 = vlaneseq
    %v3849 = vshrl.u32 %v3848, 7
    %v3850 = vsub.s32 0, %v3849
    %v3851 = vrot.slane %v2011, %v3850
    %v3852 = vadd.f32 %v3846, %v3851
    %v3853 = vadd.f32 %v3847, %v3851
    %v3855 = vrot.slane %v3853, 7
    %vm3857 = vcmask 1040384
    %v3858 = vsel %vm3857, %v3852, %v3855
    %v3859 = vld [vmem:[%s4] sm:$0xff]
    %v3860 = vld [vmem:[%s4 + $0x8] sm:$0xff]
    %v3861 = vld [vmem:[%s4 + $0x10] sm:$0xff]
    %v3862 = vld [vmem:[%s4 + $0x18] sm:$0xff]
    %v3863 = vld [vmem:[%s4 + $0x20] sm:$0x1]
    %v3864 = vld [vmem:[%s4 + $0x21] sm:$0x1]
    %v3865 = vlaneseq
    %v3866 = vshrl.u32 %v3865, 7
    %v3867 = vsub.s32 0, %v3866
    %v3868 = vrot.slane %v3863, %v3867
    %v3870 = vsel %vm33, %v3858, 0
    %3872 = vmatprep.subr.mxu0 0.0
    %3873 = vmatpush1.msra.mxu0 %v3859
    %3874 = vmatprep.subr.mxu0 0.0
    %3875 = vmatpush1.msra.mxu0 %v3860
    %3876 = vmatprep.subr.mxu0 0.0
    %3877 = vmatpush1.msra.mxu0 %v3861
    %3878 = vmatprep.subr.mxu0 0.0
    %3879 = vmatpush1.msra.mxu0 %v3862
    %3880 = vmatprep.subr.mxu0 0.0
    %3881 = vmatpush1.msra.mxu0 0.0
    %3882 = vmatprep.subr.mxu0 0.0
    %3883 = vmatpush1.msra.mxu0 0.0
    %3884 = vmatprep.subr.mxu0 0.0
    %3885 = vmatpush1.msra.mxu0 0.0
    %3886 = vmatprep.subr.mxu0 0.0
    %3887 = vmatpush1.msra.mxu0 0.0
    %3888 = vmatprep.subr.mxu0 0.0
    %3889 = vmatpush1.msra.mxu0 0.0
    %3890 = vmatprep.subr.mxu0 0.0
    %3891 = vmatpush1.msra.mxu0 0.0
    %3892 = vmatprep.subr.mxu0 0.0
    %3893 = vmatpush1.msra.mxu0 0.0
    %3894 = vmatprep.subr.mxu0 0.0
    %3895 = vmatpush1.msra.mxu0 0.0
    %3896 = vmatprep.subr.mxu0 0.0
    %3897 = vmatpush1.msra.mxu0 0.0
    %3898 = vmatprep.subr.mxu0 0.0
    %3899 = vmatpush1.msra.mxu0 0.0
    %3900 = vmatprep.subr.mxu0 0.0
    %3901 = vmatpush1.msra.mxu0 0.0
    %3902 = vmatprep.subr.mxu0 0.0
    %3903 = vmatpush1.msra.mxu0 0.0
    %3904 = vmatprep.subr.mxu0 0.0
    %3905 = vmatpush1.msra.mxu0 0.0
    %3906 = vmatprep.subr.mxu0 0.0
    %3907 = vmatpush1.msra.mxu0 0.0
    %3908 = vmatprep.subr.mxu0 0.0
    %3909 = vmatpush1.msra.mxu0 0.0
    %3910 = vmatprep.subr.mxu0 0.0
    %3911 = vmatpush1.msra.mxu0 0.0
    %3912 = vmatprep.subr.mxu0 0.0
    %3913 = vmatpush1.msra.mxu0 0.0
    %3914 = vmatprep.subr.mxu0 0.0
    %3915 = vmatpush1.msra.mxu0 0.0
    %3916 = vmatprep.subr.mxu0 0.0
    %3917 = vmatpush1.msra.mxu0 0.0
    %3918 = vmatprep.subr.mxu0 0.0
    %3919 = vmatpush1.msra.mxu0 0.0
    %3920 = vmatprep.subr.mxu0 0.0
    %3921 = vmatpush1.msra.mxu0 0.0
    %3922 = vmatprep.subr.mxu0 0.0
    %3923 = vmatpush1.msra.mxu0 0.0
    %3924 = vmatprep.subr.mxu0 0.0
    %3925 = vmatpush1.msra.mxu0 0.0
    %3926 = vmatprep.subr.mxu0 0.0
    %3927 = vmatpush1.msra.mxu0 0.0
    %3928 = vmatprep.subr.mxu0 0.0
    %3929 = vmatpush1.msra.mxu0 0.0
    %3930 = vmatprep.subr.mxu0 0.0
    %3931 = vmatpush1.msra.mxu0 0.0
    %3932 = vmatprep.subr.mxu0 0.0
    %3933 = vmatpush1.msra.mxu0 0.0
    %3934 = vmatprep.subr.mxu0 0.0
    %3935 = vmatpush1.msra.mxu0 0.0
    %3936 = vmatprep.mubr.f32.mxu0 0.0
    %3937 = vmatmul.mubr.f32.gmra.mrb[0].mxu0 %v3870
    %v3938 = vpop.f32.mrb[0].mxu0
    %v3939 = vadd.f32 %v3868, %v3938
    %v3940 = vpop.f32.mrb[0].mxu0
    %3941 = vdwg.mxu0
    %v3942 = vtanh.pop %v3939
    %v3943 = vlaneseq
    %v3944 = vshrl.u32 %v3943, 7
    %v3945 = vsub.s32 0, %v3944
    %v3946 = vrot.slane %v3864, %v3945
    %3951 = vrot.lane.b32.xlu0 %v3859, 96
    %v3952 = vpop.permute.xlu0 %3951
    %3953 = vrot.lane.b32.xlu0 %v3860, 96
    %v3954 = vpop.permute.xlu0 %3953
    %3955 = vrot.lane.b32.xlu0 %v3861, 96
    %v3956 = vpop.permute.xlu0 %3955
    %3957 = vrot.lane.b32.xlu0 %v3862, 96
    %v3958 = vpop.permute.xlu0 %3957
    %v3964 = vsel %vm33, %v3942, 0
    %3966 = vmatprep.subr.mxu0 0.0
    %3967 = vmatpush1.msra.mxu0 %v3952
    %3968 = vmatprep.subr.mxu0 0.0
    %3969 = vmatpush1.msra.mxu0 %v3954
    %3970 = vmatprep.subr.mxu0 0.0
    %3971 = vmatpush1.msra.mxu0 %v3956
    %3972 = vmatprep.subr.mxu0 0.0
    %3973 = vmatpush1.msra.mxu0 %v3958
    %3974 = vmatprep.subr.mxu0 0.0
    %3975 = vmatpush1.msra.mxu0 0.0
    %3976 = vmatprep.subr.mxu0 0.0
    %3977 = vmatpush1.msra.mxu0 0.0
    %3978 = vmatprep.subr.mxu0 0.0
    %3979 = vmatpush1.msra.mxu0 0.0
    %3980 = vmatprep.subr.mxu0 0.0
    %3981 = vmatpush1.msra.mxu0 0.0
    %3982 = vmatprep.subr.mxu0 0.0
    %3983 = vmatpush1.msra.mxu0 0.0
    %3984 = vmatprep.subr.mxu0 0.0
    %3985 = vmatpush1.msra.mxu0 0.0
    %3986 = vmatprep.subr.mxu0 0.0
    %3987 = vmatpush1.msra.mxu0 0.0
    %3988 = vmatprep.subr.mxu0 0.0
    %3989 = vmatpush1.msra.mxu0 0.0
    %3990 = vmatprep.subr.mxu0 0.0
    %3991 = vmatpush1.msra.mxu0 0.0
    %3992 = vmatprep.subr.mxu0 0.0
    %3993 = vmatpush1.msra.mxu0 0.0
    %3994 = vmatprep.subr.mxu0 0.0
    %3995 = vmatpush1.msra.mxu0 0.0
    %3996 = vmatprep.subr.mxu0 0.0
    %3997 = vmatpush1.msra.mxu0 0.0
    %3998 = vmatprep.subr.mxu0 0.0
    %3999 = vmatpush1.msra.mxu0 0.0
    %4000 = vmatprep.subr.mxu0 0.0
    %4001 = vmatpush1.msra.mxu0 0.0
    %4002 = vmatprep.subr.mxu0 0.0
    %4003 = vmatpush1.msra.mxu0 0.0
    %4004 = vmatprep.subr.mxu0 0.0
    %4005 = vmatpush1.msra.mxu0 0.0
    %4006 = vmatprep.subr.mxu0 0.0
    %4007 = vmatpush1.msra.mxu0 0.0
    %4008 = vmatprep.subr.mxu0 0.0
    %4009 = vmatpush1.msra.mxu0 0.0
    %4010 = vmatprep.subr.mxu0 0.0
    %4011 = vmatpush1.msra.mxu0 0.0
    %4012 = vmatprep.subr.mxu0 0.0
    %4013 = vmatpush1.msra.mxu0 0.0
    %4014 = vmatprep.subr.mxu0 0.0
    %4015 = vmatpush1.msra.mxu0 0.0
    %4016 = vmatprep.subr.mxu0 0.0
    %4017 = vmatpush1.msra.mxu0 0.0
    %4018 = vmatprep.subr.mxu0 0.0
    %4019 = vmatpush1.msra.mxu0 0.0
    %4020 = vmatprep.subr.mxu0 0.0
    %4021 = vmatpush1.msra.mxu0 0.0
    %4022 = vmatprep.subr.mxu0 0.0
    %4023 = vmatpush1.msra.mxu0 0.0
    %4024 = vmatprep.subr.mxu0 0.0
    %4025 = vmatpush1.msra.mxu0 0.0
    %4026 = vmatprep.subr.mxu0 0.0
    %4027 = vmatpush1.msra.mxu0 0.0
    %4028 = vmatprep.subr.mxu0 0.0
    %4029 = vmatpush1.msra.mxu0 0.0
    %4030 = vmatprep.mubr.f32.mxu0 0.0
    %4031 = vmatmul.mubr.f32.gmra.mrb[0].mxu0 %v3964
    %v4032 = vpop.f32.mrb[0].mxu0
    %v4033 = vadd.f32 %v3946, %v4032
    %v4034 = vpop.f32.mrb[0].mxu0
    %4035 = vdwg.mxu0
    %vm4036 = vcmask 17408
    %4037 = vst.msk [vmem:[#allocation2] sm:$0x3] %vm4036, %v4033
    // Predicated region
    $region22: #{my_bert_forward.1} parent=1 // pred_check
      _
    $region23: #{my_bert_forward.1} parent=1 // pred_check_branch
      %4039 = sbr.rel (0) target = $region25
    $region24: #{my_bert_forward.1} parent=1 // pred_region
      %s4041 = ssub.s32 32, 32
      %4042 = vsyncadd [#allocation3], %s4041
      %s4044 = sshll.u32 [#allocation2], 4
      %s4045 = int_to_ptr.vmem [resolvable:$true] %s4044
      %4047 = dma.vmem_to_hbm [thread:$0]  %s4045, 32, %s5, [#allocation3]
    $region25: #{my_bert_forward.1} parent=1 // pred_fallthru
      _
    // Predicated region
    $region26: #{my_bert_forward.1} parent=1 // pred_check
      _
    $region27: #{my_bert_forward.1} parent=1 // pred_check_branch
      %4049 = sbr.rel (0) target = $region29
    $region28: #{my_bert_forward.1} parent=1 // pred_region
      %4050 = dma.done [#allocation3], 32
    $region29: #{my_bert_forward.1} parent=1 // pred_fallthru
      _
    %4051 = vsyncpa [#allocation3], 1

</llo_original>
